<compile_context>
chip_gen: v5e
topology: v5e:2x2
jax: 0.10.0
libtpu: 0.0.40
codegen_flags: <defaults>
</compile_context>

<pallas_src>
import jax
import jax.numpy as jnp
from jax.experimental import pallas as pl
from jax.experimental.pallas import tpu as pltpu


def _leaky_relu(x, slope=0.2):
    return jnp.where(x > 0, x, slope * x)


def cgan_disc_kernel(x_ref, lab_ref,
                     w1a_ref, w1b_ref, b1_ref,
                     w2_ref, b2_ref,
                     w3r_ref,
                     o_ref):
    f32 = jnp.float32
    cdt = w1a_ref.dtype          # MXU compute dtype (bf16 by default, or f32)

    # ---- Layer 1: cat([x, labels]) @ W1 + b1 --------------------------------
    # Large K = input_dim part on the MXU, f32 accumulation.
    h = jnp.dot(x_ref[...], w1a_ref[...], preferred_element_type=f32)
    h = h + b1_ref[...]
    # Tiny K = class_dim labels part as broadcast FMAs on the VPU (f32).
    lab = lab_ref[...]                       # (tm, class_dim) f32
    w1b = w1b_ref[...]                       # (class_dim, h1) f32
    for k in range(lab_ref.shape[1]):        # class_dim is static (4) -> unrolled
        h = h + lab[:, k:k + 1] * w1b[k:k + 1, :]
    h = _leaky_relu(h)

    # ---- Layer 2 -------------------------------------------------------------
    h = jnp.dot(h.astype(cdt), w2_ref[...], preferred_element_type=f32)
    h = _leaky_relu(h + b2_ref[...])

    # ---- Layer 3 (h2 -> 1): VPU multiply + cross-lane reduce (no MXU) --------
    out = jnp.sum(h * w3r_ref[...], axis=-1, keepdims=True)     # (tm, 1) f32
    # Lane-dense unmasked store: replicate across all output lanes; the wrapper
    # keeps only column 0.
    o_ref[...] = jnp.broadcast_to(out, o_ref.shape).astype(o_ref.dtype)


def cgan_discriminator(x, labels, params, *, tm=128, compute_dtype=jnp.bfloat16):
    """x: [B, input_dim] f32, labels: [B, class_dim] f32 -> [B, 1] f32."""
    w1a, w1b, b1, w2, b2, w3, b3 = params
    B, input_dim = x.shape
    _, class_dim = labels.shape
    h1 = w1a.shape[1]            # 512
    h2 = w2.shape[1]             # 256
    OUT_LANES = 128              # unmasked lane-dense output tile width

    # Pad the batch to a multiple of the batch tile.
    Bp = ((B + tm - 1) // tm) * tm
    if Bp != B:
        pad = Bp - B
        x = jnp.pad(x, ((0, pad), (0, 0)))
        labels = jnp.pad(labels, ((0, pad), (0, 0)))

    # MXU operands in compute_dtype (bf16 halves HBM->VMEM weight/x traffic on
    # v6e/v7x); small / VPU-side tensors stay f32.
    xc = x.astype(compute_dtype)
    w1a_c = w1a.astype(compute_dtype)
    w2_c = w2.astype(compute_dtype)
    lab_f = labels.astype(jnp.float32)
    w1b_f = w1b.astype(jnp.float32)
    b1_f = b1.reshape(1, h1).astype(jnp.float32)
    b2_f = b2.reshape(1, h2).astype(jnp.float32)
    w3_row = w3.reshape(1, h2).astype(jnp.float32)   # lane-dense (1, 256) row

    grid = (Bp // tm,)

    def batch_map(i):
        return (i, 0)

    def fixed_map(i):
        return (0, 0)

    flops = 2 * Bp * (input_dim * h1 + class_dim * h1 + h1 * h2 + h2)
    bytes_accessed = (xc.size * xc.dtype.itemsize
                      + lab_f.size * 4
                      + w1a_c.size * w1a_c.dtype.itemsize
                      + w1b_f.size * 4
                      + w2_c.size * w2_c.dtype.itemsize
                      + w3_row.size * 4
                      + b1_f.size * 4 + b2_f.size * 4
                      + Bp * OUT_LANES * 4)

    out = pl.pallas_call(
        cgan_disc_kernel,
        out_shape=jax.ShapeDtypeStruct((Bp, OUT_LANES), jnp.float32),
        grid_spec=pltpu.PrefetchScalarGridSpec(
            num_scalar_prefetch=0,
            grid=grid,
            in_specs=[
                pl.BlockSpec((tm, input_dim), batch_map),   # x (compute_dtype)
                pl.BlockSpec((tm, class_dim), batch_map),   # labels (f32)
                pl.BlockSpec((input_dim, h1), fixed_map),   # W1a (compute_dtype)
                pl.BlockSpec((class_dim, h1), fixed_map),   # W1b (f32)
                pl.BlockSpec((1, h1), fixed_map),           # b1  (f32)
                pl.BlockSpec((h1, h2), fixed_map),          # W2  (compute_dtype)
                pl.BlockSpec((1, h2), fixed_map),           # b2  (f32)
                pl.BlockSpec((1, h2), fixed_map),           # W3 as lane-dense row
            ],
            out_specs=pl.BlockSpec((tm, OUT_LANES), batch_map),
        ),
        compiler_params=pltpu.CompilerParams(
            dimension_semantics=("parallel",),
            vmem_limit_bytes=32 * 1024 * 1024),
        cost_estimate=pl.CostEstimate(
            flops=flops, transcendentals=0, bytes_accessed=bytes_accessed),
    )(xc, lab_f, w1a_c, w1b_f, b1_f, w2_c, b2_f, w3_row)

    # Keep the single real output column, drop batch padding, add scalar bias.
    return out[:B, :1] + b3.reshape(1, 1)


def init_params(key, input_dim, class_dim, h1=512, h2=256):
    """Deterministic init mimicking nn.Linear's U(-1/sqrt(fan_in), 1/sqrt(fan_in))."""
    k1, k2, k3, k4, k5, k6 = jax.random.split(key, 6)
    fan1 = input_dim + class_dim
    lim1 = 1.0 / jnp.sqrt(fan1)
    w1 = jax.random.uniform(k1, (fan1, h1), jnp.float32, -lim1, lim1)
    b1 = jax.random.uniform(k2, (1, h1), jnp.float32, -lim1, lim1)
    lim2 = 1.0 / jnp.sqrt(h1)
    w2 = jax.random.uniform(k3, (h1, h2), jnp.float32, -lim2, lim2)
    b2 = jax.random.uniform(k4, (1, h2), jnp.float32, -lim2, lim2)
    lim3 = 1.0 / jnp.sqrt(h2)
    w3 = jax.random.uniform(k5, (h2, 1), jnp.float32, -lim3, lim3)
    b3 = jax.random.uniform(k6, (1, 1), jnp.float32, -lim3, lim3)
    # Split W1 into the x-part and labels-part (avoids in-kernel concat).
    w1a, w1b = w1[:input_dim], w1[input_dim:]
    return (w1a, w1b, b1, w2, b2, w3, b3)


def reference(x, labels, params, compute_dtype=jnp.float32):
    """Pure-JAX forward.  compute_dtype=f32 is the exact PyTorch-equivalent
    module; compute_dtype=bf16 mirrors the kernel's bf16-operand / f32-accum
    MXU path for apples-to-apples comparison."""
    w1a, w1b, b1, w2, b2, w3, b3 = params
    f32 = jnp.float32
    h = (jnp.dot(x.astype(compute_dtype), w1a.astype(compute_dtype),
                 preferred_element_type=f32)
         + labels @ w1b + b1)
    h = jnp.where(h > 0, h, 0.2 * h)
    h = jnp.dot(h.astype(compute_dtype), w2.astype(compute_dtype),
                preferred_element_type=f32) + b2
    h = jnp.where(h > 0, h, 0.2 * h)
    return h @ w3 + b3


if __name__ == "__main__":
    # Module-consistent shapes: input_dim=1200, class_dim=4.  B=256 gives two
    # 128-row batch tiles (parallel grid of 2 -> both v7x TensorCores busy).
    B, INPUT_DIM, CLASS_DIM = 256, 1200, 4

    key = jax.random.PRNGKey(0)
    kx, kl, kp = jax.random.split(key, 3)
    x = jax.random.normal(kx, (B, INPUT_DIM), jnp.float32)
    labels = jax.random.normal(kl, (B, CLASS_DIM), jnp.float32)
    params = init_params(kp, INPUT_DIM, CLASS_DIM)

    # 1) Exact f32 mode: matches the PyTorch-equivalent f32 reference.
    out_f32 = jax.block_until_ready(
        cgan_discriminator(x, labels, params, compute_dtype=jnp.float32))
    ref_f32 = reference(x, labels, params, compute_dtype=jnp.float32)
    assert out_f32.shape == (B, 1), out_f32.shape
    assert jnp.allclose(out_f32, ref_f32, atol=1e-3, rtol=1e-3), (
        float(jnp.max(jnp.abs(out_f32 - ref_f32))))

    # 2) Default bf16-MXU mode (preferred on v6e/v7x): compare against a
    #    reference applying the same bf16 casts with f32 accumulation.
    out_bf16 = jax.block_until_ready(cgan_discriminator(x, labels, params))
    ref_bf16 = reference(x, labels, params, compute_dtype=jnp.bfloat16)
    assert out_bf16.shape == (B, 1), out_bf16.shape
    assert jnp.allclose(out_bf16, ref_bf16, atol=1e-2, rtol=1e-2), (
        float(jnp.max(jnp.abs(out_bf16 - ref_bf16))))

    print("KERNEL_OK")
</pallas_src>

<mosaic_0001>
module attributes {stable_mosaic.version = 11 : i64} {
  func.func @cgan_disc_kernel(%arg0: i32, %arg1: memref<128x1200xf32, #tpu.memory_space<vmem>>, %arg2: memref<128x4xf32, #tpu.memory_space<vmem>>, %arg3: memref<1200x512xf32, #tpu.memory_space<vmem>>, %arg4: memref<4x512xf32, #tpu.memory_space<vmem>>, %arg5: memref<1x512xf32, #tpu.memory_space<vmem>>, %arg6: memref<512x256xf32, #tpu.memory_space<vmem>>, %arg7: memref<1x256xf32, #tpu.memory_space<vmem>>, %arg8: memref<1x256xf32, #tpu.memory_space<vmem>>, %arg9: memref<128x128xf32, #tpu.memory_space<vmem>>) attributes {dimension_semantics = [#tpu.dimension_semantics<parallel>], iteration_bounds = array<i64: 2>, scalar_prefetch = 0 : i64, scratch_operands = 0 : i64, tpu.core_type = #tpu.core_type<tc>, window_params = [{transform_indices = @transform_0, window_bounds = array<i64: 128, 1200>}, {transform_indices = @transform_1, window_bounds = array<i64: 128, 4>}, {pipeline_mode = #tpu.pipeline_mode<synchronous>, transform_indices = @transform_2, window_bounds = array<i64: 1200, 512>}, {pipeline_mode = #tpu.pipeline_mode<synchronous>, transform_indices = @transform_3, window_bounds = array<i64: 4, 512>}, {pipeline_mode = #tpu.pipeline_mode<synchronous>, transform_indices = @transform_4, window_bounds = array<i64: 1, 512>}, {pipeline_mode = #tpu.pipeline_mode<synchronous>, transform_indices = @transform_5, window_bounds = array<i64: 512, 256>}, {pipeline_mode = #tpu.pipeline_mode<synchronous>, transform_indices = @transform_6, window_bounds = array<i64: 1, 256>}, {pipeline_mode = #tpu.pipeline_mode<synchronous>, transform_indices = @transform_7, window_bounds = array<i64: 1, 256>}, {transform_indices = @transform_8, window_bounds = array<i64: 128, 128>}]} {
    %c0 = arith.constant 0 : index
    %c0_0 = arith.constant 0 : index
    %0 = vector.load %arg1[%c0, %c0_0] : memref<128x1200xf32, #tpu.memory_space<vmem>>, vector<128x1200xf32>
    %c0_1 = arith.constant 0 : index
    %c0_2 = arith.constant 0 : index
    %1 = vector.load %arg3[%c0_1, %c0_2] : memref<1200x512xf32, #tpu.memory_space<vmem>>, vector<1200x512xf32>
    %cst = arith.constant dense<0.000000e+00> : vector<128x512xf32>
    %2 = tpu.matmul %0, %1, %cst {dimension_numbers = #tpu.dot_dimension_numbers<[1], [0], [0], [1], [0, 0, 1, 1], [], []>} : vector<128x1200xf32>, vector<1200x512xf32>, vector<128x512xf32> -> vector<128x512xf32>
    %c0_3 = arith.constant 0 : index
    %c0_4 = arith.constant 0 : index
    %3 = vector.load %arg5[%c0_3, %c0_4] : memref<1x512xf32, #tpu.memory_space<vmem>>, vector<1x512xf32>
    %4 = vector.broadcast %3 : vector<1x512xf32> to vector<128x512xf32>
    %5 = arith.addf %2, %4 : vector<128x512xf32>
    %c0_5 = arith.constant 0 : index
    %c0_6 = arith.constant 0 : index
    %6 = vector.load %arg2[%c0_5, %c0_6] : memref<128x4xf32, #tpu.memory_space<vmem>>, vector<128x4xf32>
    %c0_7 = arith.constant 0 : index
    %c0_8 = arith.constant 0 : index
    %7 = vector.load %arg4[%c0_7, %c0_8] : memref<4x512xf32, #tpu.memory_space<vmem>>, vector<4x512xf32>
    %8 = vector.extract_strided_slice %6 {offsets = [0, 0], sizes = [128, 1], strides = [1, 1]} : vector<128x4xf32> to vector<128x1xf32>
    %9 = vector.extract_strided_slice %7 {offsets = [0, 0], sizes = [1, 512], strides = [1, 1]} : vector<4x512xf32> to vector<1x512xf32>
    %10 = vector.broadcast %8 : vector<128x1xf32> to vector<128x512xf32>
    %11 = vector.broadcast %9 : vector<1x512xf32> to vector<128x512xf32>
    %12 = arith.mulf %10, %11 : vector<128x512xf32>
    %13 = arith.addf %5, %12 : vector<128x512xf32>
    %14 = vector.extract_strided_slice %6 {offsets = [0, 1], sizes = [128, 1], strides = [1, 1]} : vector<128x4xf32> to vector<128x1xf32>
    %15 = vector.extract_strided_slice %7 {offsets = [1, 0], sizes = [1, 512], strides = [1, 1]} : vector<4x512xf32> to vector<1x512xf32>
    %16 = vector.broadcast %14 : vector<128x1xf32> to vector<128x512xf32>
    %17 = vector.broadcast %15 : vector<1x512xf32> to vector<128x512xf32>
    %18 = arith.mulf %16, %17 : vector<128x512xf32>
    %19 = arith.addf %13, %18 : vector<128x512xf32>
    %20 = vector.extract_strided_slice %6 {offsets = [0, 2], sizes = [128, 1], strides = [1, 1]} : vector<128x4xf32> to vector<128x1xf32>
    %21 = vector.extract_strided_slice %7 {offsets = [2, 0], sizes = [1, 512], strides = [1, 1]} : vector<4x512xf32> to vector<1x512xf32>
    %22 = vector.broadcast %20 : vector<128x1xf32> to vector<128x512xf32>
    %23 = vector.broadcast %21 : vector<1x512xf32> to vector<128x512xf32>
    %24 = arith.mulf %22, %23 : vector<128x512xf32>
    %25 = arith.addf %19, %24 : vector<128x512xf32>
    %26 = vector.extract_strided_slice %6 {offsets = [0, 3], sizes = [128, 1], strides = [1, 1]} : vector<128x4xf32> to vector<128x1xf32>
    %27 = vector.extract_strided_slice %7 {offsets = [3, 0], sizes = [1, 512], strides = [1, 1]} : vector<4x512xf32> to vector<1x512xf32>
    %28 = vector.broadcast %26 : vector<128x1xf32> to vector<128x512xf32>
    %29 = vector.broadcast %27 : vector<1x512xf32> to vector<128x512xf32>
    %30 = arith.mulf %28, %29 : vector<128x512xf32>
    %31 = arith.addf %25, %30 : vector<128x512xf32>
    %cst_9 = arith.constant 0.000000e+00 : f32
    %32 = vector.broadcast %cst_9 : f32 to vector<128x512xf32>
    %33 = arith.cmpf ogt, %31, %32 : vector<128x512xf32>
    %cst_10 = arith.constant 2.000000e-01 : f32
    %34 = vector.broadcast %cst_10 : f32 to vector<128x512xf32>
    %35 = arith.mulf %34, %31 : vector<128x512xf32>
    %36 = arith.select %33, %31, %35 : vector<128x512xi1>, vector<128x512xf32>
    %c0_11 = arith.constant 0 : index
    %c0_12 = arith.constant 0 : index
    %37 = vector.load %arg6[%c0_11, %c0_12] : memref<512x256xf32, #tpu.memory_space<vmem>>, vector<512x256xf32>
    %cst_13 = arith.constant dense<0.000000e+00> : vector<128x256xf32>
    %38 = tpu.matmul %36, %37, %cst_13 {dimension_numbers = #tpu.dot_dimension_numbers<[1], [0], [0], [1], [0, 0, 1, 1], [], []>} : vector<128x512xf32>, vector<512x256xf32>, vector<128x256xf32> -> vector<128x256xf32>
    %c0_14 = arith.constant 0 : index
    %c0_15 = arith.constant 0 : index
    %39 = vector.load %arg7[%c0_14, %c0_15] : memref<1x256xf32, #tpu.memory_space<vmem>>, vector<1x256xf32>
    %40 = vector.broadcast %39 : vector<1x256xf32> to vector<128x256xf32>
    %41 = arith.addf %38, %40 : vector<128x256xf32>
    %cst_16 = arith.constant 0.000000e+00 : f32
    %42 = vector.broadcast %cst_16 : f32 to vector<128x256xf32>
    %43 = arith.cmpf ogt, %41, %42 : vector<128x256xf32>
    %cst_17 = arith.constant 2.000000e-01 : f32
    %44 = vector.broadcast %cst_17 : f32 to vector<128x256xf32>
    %45 = arith.mulf %44, %41 : vector<128x256xf32>
    %46 = arith.select %43, %41, %45 : vector<128x256xi1>, vector<128x256xf32>
    %c0_18 = arith.constant 0 : index
    %c0_19 = arith.constant 0 : index
    %47 = vector.load %arg8[%c0_18, %c0_19] : memref<1x256xf32, #tpu.memory_space<vmem>>, vector<1x256xf32>
    %48 = vector.broadcast %47 : vector<1x256xf32> to vector<128x256xf32>
    %49 = arith.mulf %46, %48 : vector<128x256xf32>
    %cst_20 = arith.constant dense<0.000000e+00> : vector<128xf32>
    %50 = vector.multi_reduction <add>, %49, %cst_20 [1] : vector<128x256xf32> to vector<128xf32>
    %51 = vector.shape_cast %50 : vector<128xf32> to vector<128x1xf32>
    %52 = vector.shape_cast %51 : vector<128x1xf32> to vector<128x1xf32>
    %53 = vector.broadcast %52 : vector<128x1xf32> to vector<128x128xf32>
    %c0_21 = arith.constant 0 : index
    %c0_22 = arith.constant 0 : index
    %54 = vector.load %arg9[%c0_21, %c0_22] : memref<128x128xf32, #tpu.memory_space<vmem>>, vector<128x128xf32>
    tpu.vector_store %arg9[%c0_21, %c0_22], %53 {strides = array<i32>} : memref<128x128xf32, #tpu.memory_space<vmem>>, vector<128x128xf32>,
    return
  }
  func.func @transform_0(%arg0: i32) -> (i32, i32) {
    %c0_i32 = arith.constant 0 : i32
    %c0_i32_0 = arith.constant 0 : i32
    return %arg0, %c0_i32 : i32, i32
  }
  func.func @transform_1(%arg0: i32) -> (i32, i32) {
    %c0_i32 = arith.constant 0 : i32
    %c0_i32_0 = arith.constant 0 : i32
    return %arg0, %c0_i32 : i32, i32
  }
  func.func @transform_2(%arg0: i32) -> (i32, i32) {
    %c0_i32 = arith.constant 0 : i32
    %c0_i32_0 = arith.constant 0 : i32
    %c0_i32_1 = arith.constant 0 : i32
    return %c0_i32, %c0_i32_0 : i32, i32
  }
  func.func @transform_3(%arg0: i32) -> (i32, i32) {
    %c0_i32 = arith.constant 0 : i32
    %c0_i32_0 = arith.constant 0 : i32
    %c0_i32_1 = arith.constant 0 : i32
    return %c0_i32, %c0_i32_0 : i32, i32
  }
  func.func @transform_4(%arg0: i32) -> (i32, i32) {
    %c0_i32 = arith.constant 0 : i32
    %c0_i32_0 = arith.constant 0 : i32
    %c0_i32_1 = arith.constant 0 : i32
    return %c0_i32, %c0_i32_0 : i32, i32
  }
  func.func @transform_5(%arg0: i32) -> (i32, i32) {
    %c0_i32 = arith.constant 0 : i32
    %c0_i32_0 = arith.constant 0 : i32
    %c0_i32_1 = arith.constant 0 : i32
    return %c0_i32, %c0_i32_0 : i32, i32
  }
  func.func @transform_6(%arg0: i32) -> (i32, i32) {
    %c0_i32 = arith.constant 0 : i32
    %c0_i32_0 = arith.constant 0 : i32
    %c0_i32_1 = arith.constant 0 : i32
    return %c0_i32, %c0_i32_0 : i32, i32
  }
  func.func @transform_7(%arg0: i32) -> (i32, i32) {
    %c0_i32 = arith.constant 0 : i32
    %c0_i32_0 = arith.constant 0 : i32
    %c0_i32_1 = arith.constant 0 : i32
    return %c0_i32, %c0_i32_0 : i32, i32
  }
  func.func @transform_8(%arg0: i32) -> (i32, i32) {
    %c0_i32 = arith.constant 0 : i32
    %c0_i32_0 = arith.constant 0 : i32
    return %arg0, %c0_i32 : i32, i32
  }
}

</mosaic_0001>

<llo_original>
// kernel: tpu_custom_call.1
$region0: #{tpu_custom_call.1}
  #allocation0 [shape = 'u32[]', space=smem, size = 0x4, offset = 0x4, fixed_abs, tag = 'smem constant byte address 0x4 - core index']
  #allocation1 [shape = 'u32[72,128]{1,0:T(1,128)}', space=vmem, size = 0x9000, scoped, tag = 'internal scratch']
  %s0 = inlined_call_operand.vmem [shape: f32[256,1200], index: 0, kind: input, shape index: {}]
  %s1 = inlined_call_operand.vmem [shape: f32[256,4], index: 1, kind: input, shape index: {}]
  %s2 = inlined_call_operand.vmem [shape: f32[1200,512], index: 2, kind: input, shape index: {}]
  %s3 = inlined_call_operand.vmem [shape: f32[4,512], index: 3, kind: input, shape index: {}]
  %s4 = inlined_call_operand.vmem [shape: f32[1,512], index: 4, kind: input, shape index: {}]
  %s5 = inlined_call_operand.hbm [shape: f32[512,256], index: 5, kind: input, shape index: {}]
  %s6 = inlined_call_operand.vmem [shape: f32[1,256], index: 6, kind: input, shape index: {}]
  %s7 = inlined_call_operand.vmem [shape: f32[1,256], index: 7, kind: input, shape index: {}]
  %s8 = inlined_call_operand.hbm [shape: f32[256,128], index: 8, kind: output, shape index: {}]
  %s9 = sld [smem:[#allocation0]]
  $region69: #{tpu_custom_call.1} parent=0
    _
  %s11 = ssub.s32 1, %s9
  %s12 = scalar_select 0, %s11, %s9
  $region1: #{tpu_custom_call.1} parent=0
    #allocation2 [shape = 'u8[524288]{0}', space=vmem, size = 0x80000, scoped, tag = 'input window, operand 5, single buffered']
    #allocation3 [shape = 's32[2]{0}', space=sflag, size = 0x8, scoped, tag = 'scoped memory for tpu_custom_call.1']
    #allocation4 [shape = 's32[2]{0}', space=sflag, size = 0x8, scoped, tag = 'scoped memory for tpu_custom_call.1']
    #allocation5 [shape = 'u8[131072]{0}', space=vmem, size = 0x20000, scoped, tag = 'output window, operand 0']
    %13 = vsyncpa [#allocation3], 0
    %14 = vsyncpa [#allocation4], 0
    %s15 = scalar_lea.sflag [#allocation4], 1
    %16 = vsyncpa %s15, 0
    loop: start=0, step=1, limit=4
    $region2: #{tpu_custom_call.1} parent=1 // loop_pre_header
      _
    $region3: #{tpu_custom_call.1} parent=1 // loop_header
      %s18 = sphi 0, %s22
      %p19 = scmp.ge.s32.totalorder %s18, 4
      %s28 = sphi 0, %s30
      %s31 = sphi 0, %s28
      %s32 = sphi 0, %s31
      %s48 = sphi 0, %s32
      %s54 = sphi 0, %s56
      %s57 = sphi 0, %s54
      %s58 = sphi 0, %s57
      %s74 = sphi 0, %s58
      %s78 = sphi 0, %s78
      %s80 = sphi 0, %s78
      %s81 = sphi 0, %s80
      %s95 = sphi 0, %s81
      %s99 = sphi 0, %s99
      %s101 = sphi 0, %s99
      %s102 = sphi 0, %s101
      %s116 = sphi 0, %s102
      %s120 = sphi 0, %s120
      %s122 = sphi 0, %s120
      %s123 = sphi 0, %s122
      %s137 = sphi 0, %s123
      %s141 = sphi 0, %s141
      %s143 = sphi 0, %s141
      %s144 = sphi 0, %s143
      %s158 = sphi 0, %s144
      %s162 = sphi 0, %s162
      %s164 = sphi 0, %s162
      %s165 = sphi 0, %s164
      %s179 = sphi 0, %s165
      %s183 = sphi 0, %s183
      %s185 = sphi 0, %s183
      %s186 = sphi 0, %s185
      %s200 = sphi 0, %s186
      %s206 = sphi 0, %s208
      %s209 = sphi 0, %s206
      %s210 = sphi 0, %s209
      %s226 = sphi 0, %s210
    $region4: #{tpu_custom_call.1} parent=1 // loop_header_branch
      %21 = sbr.rel (%p19) target = $region8
    $region5: #{tpu_custom_call.1} parent=1 // loop_body
      %s23 = ssub.s32 %s18, 1
      %s24 = ssub.s32 %s18, 2
      %s25 = sadd.s32 %s18, 1
      %s26 = ssub.s32 %s18, %s25
      %p27 = scmp.eq.s32.totalorder %s26, 0
      %s29 = sadd.s32 %s28, 1
      %s30 = scalar_select %p27, %s28, %s29
      %p33 = pneg %p27
      %p34 = scmp.eq.s32.totalorder %s18, 1
      %p35 = por %p33, %p34
      %p36 = scmp.ne.s32.totalorder %s28, %s31
      %p37 = scmp.eq.s32.totalorder %s18, 0
      %p38 = por %p36, %p37
      %p39 = scmp.ne.s32.totalorder %s28, %s31
      %p40 = scmp.eq.s32.totalorder %s23, 1
      %p41 = por %p39, %p40
      %p42 = scmp.ne.s32.totalorder %s31, %s32
      %p43 = scmp.eq.s32.totalorder %s23, 0
      %p44 = por %p42, %p43
      %p45 = scmp.ne.s32.totalorder %s31, %s32
      %p46 = scmp.eq.s32.totalorder %s24, 1
      %p47 = por %p45, %p46
      %p49 = scmp.ne.s32.totalorder %s32, %s48
      %p50 = scmp.eq.s32.totalorder %s24, 0
      %p51 = por %p49, %p50
      %s52 = ssub.s32 %s18, %s25
      %p53 = scmp.eq.s32.totalorder %s52, 0
      %s55 = sadd.s32 %s54, 1
      %s56 = scalar_select %p53, %s54, %s55
      %p59 = pneg %p53
      %p60 = scmp.eq.s32.totalorder %s18, 1
      %p61 = por %p59, %p60
      %p62 = scmp.ne.s32.totalorder %s54, %s57
      %p63 = scmp.eq.s32.totalorder %s18, 0
      %p64 = por %p62, %p63
      %p65 = scmp.ne.s32.totalorder %s54, %s57
      %p66 = scmp.eq.s32.totalorder %s23, 1
      %p67 = por %p65, %p66
      %p68 = scmp.ne.s32.totalorder %s57, %s58
      %p69 = scmp.eq.s32.totalorder %s23, 0
      %p70 = por %p68, %p69
      %p71 = scmp.ne.s32.totalorder %s57, %s58
      %p72 = scmp.eq.s32.totalorder %s24, 1
      %p73 = por %p71, %p72
      %p75 = scmp.ne.s32.totalorder %s58, %s74
      %p76 = scmp.eq.s32.totalorder %s24, 0
      %p77 = por %p75, %p76
      %s79 = sadd.s32 %s78, 1
      %p82 = scmp.eq.s32.totalorder %s18, 1
      %p83 = scmp.ne.s32.totalorder %s78, %s80
      %p84 = scmp.eq.s32.totalorder %s18, 0
      %p85 = por %p83, %p84
      %p86 = scmp.ne.s32.totalorder %s78, %s80
      %p87 = scmp.eq.s32.totalorder %s23, 1
      %p88 = por %p86, %p87
      %p89 = scmp.ne.s32.totalorder %s80, %s81
      %p90 = scmp.eq.s32.totalorder %s23, 0
      %p91 = por %p89, %p90
      %p92 = scmp.ne.s32.totalorder %s80, %s81
      %p93 = scmp.eq.s32.totalorder %s24, 1
      %p94 = por %p92, %p93
      %p96 = scmp.ne.s32.totalorder %s81, %s95
      %p97 = scmp.eq.s32.totalorder %s24, 0
      %p98 = por %p96, %p97
      %s100 = sadd.s32 %s99, 1
      %p103 = scmp.eq.s32.totalorder %s18, 1
      %p104 = scmp.ne.s32.totalorder %s99, %s101
      %p105 = scmp.eq.s32.totalorder %s18, 0
      %p106 = por %p104, %p105
      %p107 = scmp.ne.s32.totalorder %s99, %s101
      %p108 = scmp.eq.s32.totalorder %s23, 1
      %p109 = por %p107, %p108
      %p110 = scmp.ne.s32.totalorder %s101, %s102
      %p111 = scmp.eq.s32.totalorder %s23, 0
      %p112 = por %p110, %p111
      %p113 = scmp.ne.s32.totalorder %s101, %s102
      %p114 = scmp.eq.s32.totalorder %s24, 1
      %p115 = por %p113, %p114
      %p117 = scmp.ne.s32.totalorder %s102, %s116
      %p118 = scmp.eq.s32.totalorder %s24, 0
      %p119 = por %p117, %p118
      %s121 = sadd.s32 %s120, 1
      %p124 = scmp.eq.s32.totalorder %s18, 1
      %p125 = scmp.ne.s32.totalorder %s120, %s122
      %p126 = scmp.eq.s32.totalorder %s18, 0
      %p127 = por %p125, %p126
      %p128 = scmp.ne.s32.totalorder %s120, %s122
      %p129 = scmp.eq.s32.totalorder %s23, 1
      %p130 = por %p128, %p129
      %p131 = scmp.ne.s32.totalorder %s122, %s123
      %p132 = scmp.eq.s32.totalorder %s23, 0
      %p133 = por %p131, %p132
      %p134 = scmp.ne.s32.totalorder %s122, %s123
      %p135 = scmp.eq.s32.totalorder %s24, 1
      %p136 = por %p134, %p135
      %p138 = scmp.ne.s32.totalorder %s123, %s137
      %p139 = scmp.eq.s32.totalorder %s24, 0
      %p140 = por %p138, %p139
      %s142 = sadd.s32 %s141, 1
      %p145 = scmp.eq.s32.totalorder %s18, 1
      %p146 = scmp.ne.s32.totalorder %s141, %s143
      %p147 = scmp.eq.s32.totalorder %s18, 0
      %p148 = por %p146, %p147
      %p149 = scmp.ne.s32.totalorder %s141, %s143
      %p150 = scmp.eq.s32.totalorder %s23, 1
      %p151 = por %p149, %p150
      %p152 = scmp.ne.s32.totalorder %s143, %s144
      %p153 = scmp.eq.s32.totalorder %s23, 0
      %p154 = por %p152, %p153
      %p155 = scmp.ne.s32.totalorder %s143, %s144
      %p156 = scmp.eq.s32.totalorder %s24, 1
      %p157 = por %p155, %p156
      %p159 = scmp.ne.s32.totalorder %s144, %s158
      %p160 = scmp.eq.s32.totalorder %s24, 0
      %p161 = por %p159, %p160
      %s163 = sadd.s32 %s162, 1
      %p166 = scmp.eq.s32.totalorder %s18, 1
      %p167 = scmp.ne.s32.totalorder %s162, %s164
      %p168 = scmp.eq.s32.totalorder %s18, 0
      %p169 = por %p167, %p168
      %p170 = scmp.ne.s32.totalorder %s162, %s164
      %p171 = scmp.eq.s32.totalorder %s23, 1
      %p172 = por %p170, %p171
      %p173 = scmp.ne.s32.totalorder %s164, %s165
      %p174 = scmp.eq.s32.totalorder %s23, 0
      %p175 = por %p173, %p174
      %p176 = scmp.ne.s32.totalorder %s164, %s165
      %p177 = scmp.eq.s32.totalorder %s24, 1
      %p178 = por %p176, %p177
      %p180 = scmp.ne.s32.totalorder %s165, %s179
      %p181 = scmp.eq.s32.totalorder %s24, 0
      %p182 = por %p180, %p181
      %s184 = sadd.s32 %s183, 1
      %p187 = scmp.eq.s32.totalorder %s18, 1
      %p188 = scmp.ne.s32.totalorder %s183, %s185
      %p189 = scmp.eq.s32.totalorder %s18, 0
      %p190 = por %p188, %p189
      %p191 = scmp.ne.s32.totalorder %s183, %s185
      %p192 = scmp.eq.s32.totalorder %s23, 1
      %p193 = por %p191, %p192
      %p194 = scmp.ne.s32.totalorder %s185, %s186
      %p195 = scmp.eq.s32.totalorder %s23, 0
      %p196 = por %p194, %p195
      %p197 = scmp.ne.s32.totalorder %s185, %s186
      %p198 = scmp.eq.s32.totalorder %s24, 1
      %p199 = por %p197, %p198
      %p201 = scmp.ne.s32.totalorder %s186, %s200
      %p202 = scmp.eq.s32.totalorder %s24, 0
      %p203 = por %p201, %p202
      %s204 = ssub.s32 %s18, %s25
      %p205 = scmp.eq.s32.totalorder %s204, 0
      %s207 = sadd.s32 %s206, 1
      %s208 = scalar_select %p205, %s206, %s207
      %p211 = pneg %p205
      %p212 = scmp.eq.s32.totalorder %s18, 1
      %p213 = por %p211, %p212
      %p214 = scmp.ne.s32.totalorder %s206, %s209
      %p215 = scmp.eq.s32.totalorder %s18, 0
      %p216 = por %p214, %p215
      %p217 = scmp.ne.s32.totalorder %s206, %s209
      %p218 = scmp.eq.s32.totalorder %s23, 1
      %p219 = por %p217, %p218
      %p220 = scmp.ne.s32.totalorder %s209, %s210
      %p221 = scmp.eq.s32.totalorder %s23, 0
      %p222 = por %p220, %p221
      %p223 = scmp.ne.s32.totalorder %s209, %s210
      %p224 = scmp.eq.s32.totalorder %s24, 1
      %p225 = por %p223, %p224
      %p227 = scmp.ne.s32.totalorder %s210, %s226
      %p228 = scmp.eq.s32.totalorder %s24, 0
      %p229 = por %p227, %p228
      %p230 = scmp.le.s32.totalorder 1, %s18
      %p231 = scmp.lt.s32.totalorder %s18, 3
      %p232 = pnand %p230, %p231
      %p233 = pneg %p232
      // Predicated region
      $region9: #{tpu_custom_call.1} parent=5 // pred_check
        _
      $region10: #{tpu_custom_call.1} parent=5 // pred_check_branch
        %235 = sbr.rel (%p232) target = $region12
      $region11: #{tpu_custom_call.1} parent=5 // pred_region
        %s236 = ssub.s32 %s18, 1
        // Predicated region
        $region13: #{tpu_custom_call.1} parent=11 // pred_check
          %p237 = pneg %p91
        $region14: #{tpu_custom_call.1} parent=11 // pred_check_branch
          %239 = sbr.rel (%p237) target = $region16
        $region15: #{tpu_custom_call.1} parent=11 // pred_region
          _
        $region16: #{tpu_custom_call.1} parent=11 // pred_fallthru
          _
        // Predicated region
        $region17: #{tpu_custom_call.1} parent=11 // pred_check
          %p240 = pneg %p112
        $region18: #{tpu_custom_call.1} parent=11 // pred_check_branch
          %242 = sbr.rel (%p240) target = $region20
        $region19: #{tpu_custom_call.1} parent=11 // pred_region
          _
        $region20: #{tpu_custom_call.1} parent=11 // pred_fallthru
          _
        // Predicated region
        $region21: #{tpu_custom_call.1} parent=11 // pred_check
          %p243 = pneg %p133
        $region22: #{tpu_custom_call.1} parent=11 // pred_check_branch
          %245 = sbr.rel (%p243) target = $region24
        $region23: #{tpu_custom_call.1} parent=11 // pred_region
          _
        $region24: #{tpu_custom_call.1} parent=11 // pred_fallthru
          _
        // Predicated region
        $region25: #{tpu_custom_call.1} parent=11 // pred_check
          %p246 = pneg %p154
        $region26: #{tpu_custom_call.1} parent=11 // pred_check_branch
          %248 = sbr.rel (%p246) target = $region28
        $region27: #{tpu_custom_call.1} parent=11 // pred_region
          %250 = vsyncadd [#allocation3], 0
          %s251 = sshll.u32 %s5, 4
          %s252 = int_to_ptr.hbm [resolvable:$true] %s251
          %s253 = sshll.u32 [#allocation2], 4
          %s254 = int_to_ptr.vmem [resolvable:$true] %s253
          %259 = dma.hbm_to_vmem [thread:$0]  %s252, 16384, %s254, [#allocation3], 256, 256, 16
        $region28: #{tpu_custom_call.1} parent=11 // pred_fallthru
          _
        // Predicated region
        $region29: #{tpu_custom_call.1} parent=11 // pred_check
          %p260 = pneg %p175
        $region30: #{tpu_custom_call.1} parent=11 // pred_check_branch
          %262 = sbr.rel (%p260) target = $region32
        $region31: #{tpu_custom_call.1} parent=11 // pred_region
          _
        $region32: #{tpu_custom_call.1} parent=11 // pred_fallthru
          _
        // Predicated region
        $region33: #{tpu_custom_call.1} parent=11 // pred_check
          %p263 = pneg %p196
        $region34: #{tpu_custom_call.1} parent=11 // pred_check_branch
          %265 = sbr.rel (%p263) target = $region36
        $region35: #{tpu_custom_call.1} parent=11 // pred_region
          _
        $region36: #{tpu_custom_call.1} parent=11 // pred_fallthru
          _
      $region12: #{tpu_custom_call.1} parent=5 // pred_fallthru
        _
      %p266 = scmp.lt.s32.totalorder %s18, 2
      // Predicated region
      $region37: #{tpu_custom_call.1} parent=5 // pred_check
        %p267 = pneg %p266
      $region38: #{tpu_custom_call.1} parent=5 // pred_check_branch
        %269 = sbr.rel (%p267) target = $region40
      $region39: #{tpu_custom_call.1} parent=5 // pred_region
        // Predicated region
        $region41: #{tpu_custom_call.1} parent=39 // pred_check
          %p270 = pneg %p38
        $region42: #{tpu_custom_call.1} parent=39 // pred_check_branch
          %272 = sbr.rel (%p270) target = $region44
        $region43: #{tpu_custom_call.1} parent=39 // pred_region
          %s273 = smul.u32 16, %s18
          %p274 = scmp.lt.s32.totalorder %s273, 31
          %s275 = scalar_select %p274, %s273, 31
          %s276 = smul.addr %s275, 10
          %s277 = smul.addr %s276, 8
          %s278 = scalar_lea.vmem %s0, %s277
          %s279 = smul.u32 16, %s18
        $region44: #{tpu_custom_call.1} parent=39 // pred_fallthru
          _
        // Predicated region
        $region45: #{tpu_custom_call.1} parent=39 // pred_check
          %p280 = pneg %p64
        $region46: #{tpu_custom_call.1} parent=39 // pred_check_branch
          %282 = sbr.rel (%p280) target = $region48
        $region47: #{tpu_custom_call.1} parent=39 // pred_region
          %s283 = smul.u32 16, %s18
          %p284 = scmp.lt.s32.totalorder %s283, 31
          %s285 = scalar_select %p284, %s283, 31
          %s286 = smul.addr %s285, 8
          %s287 = scalar_lea.vmem %s1, %s286
          %s288 = smul.u32 16, %s18
        $region48: #{tpu_custom_call.1} parent=39 // pred_fallthru
          _
      $region40: #{tpu_custom_call.1} parent=5 // pred_fallthru
        _
      %p289 = scmp.le.s32.totalorder 1, %s18
      %p290 = scmp.lt.s32.totalorder %s18, 3
      %p291 = pnand %p289, %p290
      %p292 = pneg %p291
      // Predicated region
      $region49: #{tpu_custom_call.1} parent=5 // pred_check
        _
      $region50: #{tpu_custom_call.1} parent=5 // pred_check_branch
        %294 = sbr.rel (%p291) target = $region52
      $region51: #{tpu_custom_call.1} parent=5 // pred_region
        %s295 = ssub.s32 %s18, 1
        // Predicated region
        $region53: #{tpu_custom_call.1} parent=51 // pred_check
          %p296 = pneg %p154
        $region54: #{tpu_custom_call.1} parent=51 // pred_check_branch
          %298 = sbr.rel (%p296) target = $region56
        $region55: #{tpu_custom_call.1} parent=51 // pred_region
          %300 = dma.done [#allocation3], 16384
        $region56: #{tpu_custom_call.1} parent=51 // pred_fallthru
          _
        %s301 = smul.u32 16, %s23
        %p302 = scmp.lt.s32.totalorder %s301, 31
        %s303 = scalar_select %p302, %s301, 31
        %s304 = smul.addr %s303, 10
        %s305 = smul.addr %s304, 8
        %s306 = scalar_lea.vmem %s0, %s305
        %p307 = pneg %p44
        %p308 = pneg %p41
        %s309 = smul.u32 16, %s23
        %p310 = scmp.lt.s32.totalorder %s309, 31
        %s311 = scalar_select %p310, %s309, 31
        %s312 = smul.addr %s311, 8
        %s313 = scalar_lea.vmem %s1, %s312
        %p314 = pneg %p70
        %p315 = pneg %p67
        %p316 = pneg %p91
        %p317 = pneg %p88
        %p318 = pneg %p112
        %p319 = pneg %p109
        %p320 = pneg %p133
        %p321 = pneg %p130
        %p322 = pneg %p154
        %p323 = pneg %p151
        %p324 = pneg %p175
        %p325 = pneg %p172
        %p326 = pneg %p196
        %p327 = pneg %p193
        %p328 = pneg %p222
        %p329 = pneg %p219
        %s330 = sand.u32 %s209, 1
        %s331 = scalar_lea.sflag [#allocation4], %s330
        %s332 = sand.u32 %s209, 1
        %s333 = smul.addr %s332, 128
        %s334 = scalar_lea.vmem [#allocation5], %s333
        %s335 = smul.u32 16, %s23
        %p336 = scmp.lt.s32.totalorder %s335, 31
        %s337 = scalar_select %p336, %s335, 31
        %s338 = smul.addr %s337, 10
        %s339 = smul.addr %s338, 8
        %s340 = scalar_lea.vmem %s0, %s339
        %s341 = smul.u32 16, %s23
        %s342 = smul.u32 16, %s23
        %p343 = scmp.lt.s32.totalorder %s342, 31
        %s344 = scalar_select %p343, %s342, 31
        %s345 = smul.addr %s344, 8
        %s346 = scalar_lea.vmem %s1, %s345
        %s347 = smul.u32 16, %s23
        %s348 = smul.u32 16, %s23
        %v349 = vld [vmem:[%s340] sm:$0xff]
        %v350 = vld [vmem:[%s340 + $0x8] sm:$0xff]
        %v351 = vld [vmem:[%s340 + $0x10] sm:$0xff]
        %v352 = vld [vmem:[%s340 + $0x18] sm:$0xff]
        %v353 = vld [vmem:[%s340 + $0x20] sm:$0xff]
        %v354 = vld [vmem:[%s340 + $0x28] sm:$0xff]
        %v355 = vld [vmem:[%s340 + $0x30] sm:$0xff]
        %v356 = vld [vmem:[%s340 + $0x38] sm:$0xff]
        %v357 = vld [vmem:[%s340 + $0x40] sm:$0xff]
        %v358 = vld [vmem:[%s340 + $0x48] sm:$0xff]
        %v359 = vld [vmem:[%s340 + $0x50] sm:$0xff]
        %v360 = vld [vmem:[%s340 + $0x58] sm:$0xff]
        %v361 = vld [vmem:[%s340 + $0x60] sm:$0xff]
        %v362 = vld [vmem:[%s340 + $0x68] sm:$0xff]
        %v363 = vld [vmem:[%s340 + $0x70] sm:$0xff]
        %v364 = vld [vmem:[%s340 + $0x78] sm:$0xff]
        %v365 = vld [vmem:[%s340 + $0x80] sm:$0xff]
        %v366 = vld [vmem:[%s340 + $0x88] sm:$0xff]
        %v367 = vld [vmem:[%s340 + $0x90] sm:$0xff]
        %v368 = vld [vmem:[%s340 + $0x98] sm:$0xff]
        %v369 = vld [vmem:[%s340 + $0xa0] sm:$0xff]
        %v370 = vld [vmem:[%s340 + $0xa8] sm:$0xff]
        %v371 = vld [vmem:[%s340 + $0xb0] sm:$0xff]
        %v372 = vld [vmem:[%s340 + $0xb8] sm:$0xff]
        %v373 = vld [vmem:[%s340 + $0xc0] sm:$0xff]
        %v374 = vld [vmem:[%s340 + $0xc8] sm:$0xff]
        %v375 = vld [vmem:[%s340 + $0xd0] sm:$0xff]
        %v376 = vld [vmem:[%s340 + $0xd8] sm:$0xff]
        %v377 = vld [vmem:[%s340 + $0xe0] sm:$0xff]
        %v378 = vld [vmem:[%s340 + $0xe8] sm:$0xff]
        %v379 = vld [vmem:[%s340 + $0xf0] sm:$0xff]
        %v380 = vld [vmem:[%s340 + $0xf8] sm:$0xff]
        %v381 = vld [vmem:[%s340 + $0x100] sm:$0xff]
        %v382 = vld [vmem:[%s340 + $0x108] sm:$0xff]
        %v383 = vld [vmem:[%s340 + $0x110] sm:$0xff]
        %v384 = vld [vmem:[%s340 + $0x118] sm:$0xff]
        %v385 = vld [vmem:[%s340 + $0x120] sm:$0xff]
        %v386 = vld [vmem:[%s340 + $0x128] sm:$0xff]
        %v387 = vld [vmem:[%s340 + $0x130] sm:$0xff]
        %v388 = vld [vmem:[%s340 + $0x138] sm:$0xff]
        %v389 = vld [vmem:[%s340 + $0x140] sm:$0xff]
        %v390 = vld [vmem:[%s340 + $0x148] sm:$0xff]
        %v391 = vld [vmem:[%s340 + $0x150] sm:$0xff]
        %v392 = vld [vmem:[%s340 + $0x158] sm:$0xff]
        %v393 = vld [vmem:[%s340 + $0x160] sm:$0xff]
        %v394 = vld [vmem:[%s340 + $0x168] sm:$0xff]
        %v395 = vld [vmem:[%s340 + $0x170] sm:$0xff]
        %v396 = vld [vmem:[%s340 + $0x178] sm:$0xff]
        %v397 = vld [vmem:[%s340 + $0x180] sm:$0xff]
        %v398 = vld [vmem:[%s340 + $0x188] sm:$0xff]
        %v399 = vld [vmem:[%s340 + $0x190] sm:$0xff]
        %v400 = vld [vmem:[%s340 + $0x198] sm:$0xff]
        %v401 = vld [vmem:[%s340 + $0x1a0] sm:$0xff]
        %v402 = vld [vmem:[%s340 + $0x1a8] sm:$0xff]
        %v403 = vld [vmem:[%s340 + $0x1b0] sm:$0xff]
        %v404 = vld [vmem:[%s340 + $0x1b8] sm:$0xff]
        %v405 = vld [vmem:[%s340 + $0x1c0] sm:$0xff]
        %v406 = vld [vmem:[%s340 + $0x1c8] sm:$0xff]
        %v407 = vld [vmem:[%s340 + $0x1d0] sm:$0xff]
        %v408 = vld [vmem:[%s340 + $0x1d8] sm:$0xff]
        %v409 = vld [vmem:[%s340 + $0x1e0] sm:$0xff]
        %v410 = vld [vmem:[%s340 + $0x1e8] sm:$0xff]
        %v411 = vld [vmem:[%s340 + $0x1f0] sm:$0xff]
        %v412 = vld [vmem:[%s340 + $0x1f8] sm:$0xff]
        %v413 = vld [vmem:[%s340 + $0x200] sm:$0xff]
        %v414 = vld [vmem:[%s340 + $0x208] sm:$0xff]
        %v415 = vld [vmem:[%s340 + $0x210] sm:$0xff]
        %v416 = vld [vmem:[%s340 + $0x218] sm:$0xff]
        %v417 = vld [vmem:[%s340 + $0x220] sm:$0xff]
        %v418 = vld [vmem:[%s340 + $0x228] sm:$0xff]
        %v419 = vld [vmem:[%s340 + $0x230] sm:$0xff]
        %v420 = vld [vmem:[%s340 + $0x238] sm:$0xff]
        %v421 = vld [vmem:[%s340 + $0x240] sm:$0xff]
        %v422 = vld [vmem:[%s340 + $0x248] sm:$0xff]
        %v423 = vld [vmem:[%s340 + $0x250] sm:$0xff]
        %v424 = vld [vmem:[%s340 + $0x258] sm:$0xff]
        %v425 = vld [vmem:[%s340 + $0x260] sm:$0xff]
        %v426 = vld [vmem:[%s340 + $0x268] sm:$0xff]
        %v427 = vld [vmem:[%s340 + $0x270] sm:$0xff]
        %v428 = vld [vmem:[%s340 + $0x278] sm:$0xff]
        %v429 = vld [vmem:[%s340 + $0x280] sm:$0xff]
        %v430 = vld [vmem:[%s340 + $0x288] sm:$0xff]
        %v431 = vld [vmem:[%s340 + $0x290] sm:$0xff]
        %v432 = vld [vmem:[%s340 + $0x298] sm:$0xff]
        %v433 = vld [vmem:[%s340 + $0x2a0] sm:$0xff]
        %v434 = vld [vmem:[%s340 + $0x2a8] sm:$0xff]
        %v435 = vld [vmem:[%s340 + $0x2b0] sm:$0xff]
        %v436 = vld [vmem:[%s340 + $0x2b8] sm:$0xff]
        %v437 = vld [vmem:[%s340 + $0x2c0] sm:$0xff]
        %v438 = vld [vmem:[%s340 + $0x2c8] sm:$0xff]
        %v439 = vld [vmem:[%s340 + $0x2d0] sm:$0xff]
        %v440 = vld [vmem:[%s340 + $0x2d8] sm:$0xff]
        %v441 = vld [vmem:[%s340 + $0x2e0] sm:$0xff]
        %v442 = vld [vmem:[%s340 + $0x2e8] sm:$0xff]
        %v443 = vld [vmem:[%s340 + $0x2f0] sm:$0xff]
        %v444 = vld [vmem:[%s340 + $0x2f8] sm:$0xff]
        %v445 = vld [vmem:[%s340 + $0x300] sm:$0xff]
        %v446 = vld [vmem:[%s340 + $0x308] sm:$0xff]
        %v447 = vld [vmem:[%s340 + $0x310] sm:$0xff]
        %v448 = vld [vmem:[%s340 + $0x318] sm:$0xff]
        %v449 = vld [vmem:[%s340 + $0x320] sm:$0xff]
        %v450 = vld [vmem:[%s340 + $0x328] sm:$0xff]
        %v451 = vld [vmem:[%s340 + $0x330] sm:$0xff]
        %v452 = vld [vmem:[%s340 + $0x338] sm:$0xff]
        %v453 = vld [vmem:[%s340 + $0x340] sm:$0xff]
        %v454 = vld [vmem:[%s340 + $0x348] sm:$0xff]
        %v455 = vld [vmem:[%s340 + $0x350] sm:$0xff]
        %v456 = vld [vmem:[%s340 + $0x358] sm:$0xff]
        %v457 = vld [vmem:[%s340 + $0x360] sm:$0xff]
        %v458 = vld [vmem:[%s340 + $0x368] sm:$0xff]
        %v459 = vld [vmem:[%s340 + $0x370] sm:$0xff]
        %v460 = vld [vmem:[%s340 + $0x378] sm:$0xff]
        %v461 = vld [vmem:[%s340 + $0x380] sm:$0xff]
        %v462 = vld [vmem:[%s340 + $0x388] sm:$0xff]
        %v463 = vld [vmem:[%s340 + $0x390] sm:$0xff]
        %v464 = vld [vmem:[%s340 + $0x398] sm:$0xff]
        %v465 = vld [vmem:[%s340 + $0x3a0] sm:$0xff]
        %v466 = vld [vmem:[%s340 + $0x3a8] sm:$0xff]
        %v467 = vld [vmem:[%s340 + $0x3b0] sm:$0xff]
        %v468 = vld [vmem:[%s340 + $0x3b8] sm:$0xff]
        %v469 = vld [vmem:[%s340 + $0x3c0] sm:$0xff]
        %v470 = vld [vmem:[%s340 + $0x3c8] sm:$0xff]
        %v471 = vld [vmem:[%s340 + $0x3d0] sm:$0xff]
        %v472 = vld [vmem:[%s340 + $0x3d8] sm:$0xff]
        %v473 = vld [vmem:[%s340 + $0x3e0] sm:$0xff]
        %v474 = vld [vmem:[%s340 + $0x3e8] sm:$0xff]
        %v475 = vld [vmem:[%s340 + $0x3f0] sm:$0xff]
        %v476 = vld [vmem:[%s340 + $0x3f8] sm:$0xff]
        %v477 = vld [vmem:[%s340 + $0x400] sm:$0xff]
        %v478 = vld [vmem:[%s340 + $0x408] sm:$0xff]
        %v479 = vld [vmem:[%s340 + $0x410] sm:$0xff]
        %v480 = vld [vmem:[%s340 + $0x418] sm:$0xff]
        %v481 = vld [vmem:[%s340 + $0x420] sm:$0xff]
        %v482 = vld [vmem:[%s340 + $0x428] sm:$0xff]
        %v483 = vld [vmem:[%s340 + $0x430] sm:$0xff]
        %v484 = vld [vmem:[%s340 + $0x438] sm:$0xff]
        %v485 = vld [vmem:[%s340 + $0x440] sm:$0xff]
        %v486 = vld [vmem:[%s340 + $0x448] sm:$0xff]
        %v487 = vld [vmem:[%s340 + $0x450] sm:$0xff]
        %v488 = vld [vmem:[%s340 + $0x458] sm:$0xff]
        %v489 = vld [vmem:[%s340 + $0x460] sm:$0xff]
        %v490 = vld [vmem:[%s340 + $0x468] sm:$0xff]
        %v491 = vld [vmem:[%s340 + $0x470] sm:$0xff]
        %v492 = vld [vmem:[%s340 + $0x478] sm:$0xff]
        %v493 = vld [vmem:[%s340 + $0x480] sm:$0xff]
        %v494 = vld [vmem:[%s340 + $0x488] sm:$0xff]
        %v495 = vld [vmem:[%s340 + $0x490] sm:$0xff]
        %v496 = vld [vmem:[%s340 + $0x498] sm:$0xff]
        %v497 = vld [vmem:[%s340 + $0x4a0] sm:$0xff]
        %v498 = vld [vmem:[%s340 + $0x4a8] sm:$0xff]
        %v499 = vld [vmem:[%s340 + $0x4b0] sm:$0xff]
        %v500 = vld [vmem:[%s340 + $0x4b8] sm:$0xff]
        %v501 = vld [vmem:[%s340 + $0x4c0] sm:$0xff]
        %v502 = vld [vmem:[%s340 + $0x4c8] sm:$0xff]
        %v503 = vld [vmem:[%s340 + $0x4d0] sm:$0xff]
        %v504 = vld [vmem:[%s340 + $0x4d8] sm:$0xff]
        %v505 = vld [vmem:[%s340 + $0x4e0] sm:$0xff]
        %v506 = vld [vmem:[%s340 + $0x4e8] sm:$0xff]
        %v507 = vld [vmem:[%s340 + $0x4f0] sm:$0xff]
        %v508 = vld [vmem:[%s340 + $0x4f8] sm:$0xff]
        %v509 = vld [vmem:[%s2] sm:$0xff]
        %v510 = vld [vmem:[%s2 + $0x8] sm:$0xff]
        %v511 = vld [vmem:[%s2 + $0x10] sm:$0xff]
        %v512 = vld [vmem:[%s2 + $0x18] sm:$0xff]
        %v513 = vld [vmem:[%s2 + $0x20] sm:$0xff]
        %v514 = vld [vmem:[%s2 + $0x28] sm:$0xff]
        %v515 = vld [vmem:[%s2 + $0x30] sm:$0xff]
        %v516 = vld [vmem:[%s2 + $0x38] sm:$0xff]
        %v517 = vld [vmem:[%s2 + $0x40] sm:$0xff]
        %v518 = vld [vmem:[%s2 + $0x48] sm:$0xff]
        %v519 = vld [vmem:[%s2 + $0x50] sm:$0xff]
        %v520 = vld [vmem:[%s2 + $0x58] sm:$0xff]
        %v521 = vld [vmem:[%s2 + $0x60] sm:$0xff]
        %v522 = vld [vmem:[%s2 + $0x68] sm:$0xff]
        %v523 = vld [vmem:[%s2 + $0x70] sm:$0xff]
        %v524 = vld [vmem:[%s2 + $0x78] sm:$0xff]
        %v525 = vld [vmem:[%s2 + $0x80] sm:$0xff]
        %v526 = vld [vmem:[%s2 + $0x88] sm:$0xff]
        %v527 = vld [vmem:[%s2 + $0x90] sm:$0xff]
        %v528 = vld [vmem:[%s2 + $0x98] sm:$0xff]
        %v529 = vld [vmem:[%s2 + $0xa0] sm:$0xff]
        %v530 = vld [vmem:[%s2 + $0xa8] sm:$0xff]
        %v531 = vld [vmem:[%s2 + $0xb0] sm:$0xff]
        %v532 = vld [vmem:[%s2 + $0xb8] sm:$0xff]
        %v533 = vld [vmem:[%s2 + $0xc0] sm:$0xff]
        %v534 = vld [vmem:[%s2 + $0xc8] sm:$0xff]
        %v535 = vld [vmem:[%s2 + $0xd0] sm:$0xff]
        %v536 = vld [vmem:[%s2 + $0xd8] sm:$0xff]
        %v537 = vld [vmem:[%s2 + $0xe0] sm:$0xff]
        %v538 = vld [vmem:[%s2 + $0xe8] sm:$0xff]
        %v539 = vld [vmem:[%s2 + $0xf0] sm:$0xff]
        %v540 = vld [vmem:[%s2 + $0xf8] sm:$0xff]
        %v541 = vld [vmem:[%s2 + $0x100] sm:$0xff]
        %v542 = vld [vmem:[%s2 + $0x108] sm:$0xff]
        %v543 = vld [vmem:[%s2 + $0x110] sm:$0xff]
        %v544 = vld [vmem:[%s2 + $0x118] sm:$0xff]
        %v545 = vld [vmem:[%s2 + $0x120] sm:$0xff]
        %v546 = vld [vmem:[%s2 + $0x128] sm:$0xff]
        %v547 = vld [vmem:[%s2 + $0x130] sm:$0xff]
        %v548 = vld [vmem:[%s2 + $0x138] sm:$0xff]
        %v549 = vld [vmem:[%s2 + $0x140] sm:$0xff]
        %v550 = vld [vmem:[%s2 + $0x148] sm:$0xff]
        %v551 = vld [vmem:[%s2 + $0x150] sm:$0xff]
        %v552 = vld [vmem:[%s2 + $0x158] sm:$0xff]
        %v553 = vld [vmem:[%s2 + $0x160] sm:$0xff]
        %v554 = vld [vmem:[%s2 + $0x168] sm:$0xff]
        %v555 = vld [vmem:[%s2 + $0x170] sm:$0xff]
        %v556 = vld [vmem:[%s2 + $0x178] sm:$0xff]
        %v557 = vld [vmem:[%s2 + $0x180] sm:$0xff]
        %v558 = vld [vmem:[%s2 + $0x188] sm:$0xff]
        %v559 = vld [vmem:[%s2 + $0x190] sm:$0xff]
        %v560 = vld [vmem:[%s2 + $0x198] sm:$0xff]
        %v561 = vld [vmem:[%s2 + $0x1a0] sm:$0xff]
        %v562 = vld [vmem:[%s2 + $0x1a8] sm:$0xff]
        %v563 = vld [vmem:[%s2 + $0x1b0] sm:$0xff]
        %v564 = vld [vmem:[%s2 + $0x1b8] sm:$0xff]
        %v565 = vld [vmem:[%s2 + $0x1c0] sm:$0xff]
        %v566 = vld [vmem:[%s2 + $0x1c8] sm:$0xff]
        %v567 = vld [vmem:[%s2 + $0x1d0] sm:$0xff]
        %v568 = vld [vmem:[%s2 + $0x1d8] sm:$0xff]
        %v569 = vld [vmem:[%s2 + $0x1e0] sm:$0xff]
        %v570 = vld [vmem:[%s2 + $0x1e8] sm:$0xff]
        %v571 = vld [vmem:[%s2 + $0x1f0] sm:$0xff]
        %v572 = vld [vmem:[%s2 + $0x1f8] sm:$0xff]
        %v573 = vld [vmem:[%s2 + $0x200] sm:$0xff]
        %v574 = vld [vmem:[%s2 + $0x208] sm:$0xff]
        %v575 = vld [vmem:[%s2 + $0x210] sm:$0xff]
        %v576 = vld [vmem:[%s2 + $0x218] sm:$0xff]
        %v577 = vld [vmem:[%s2 + $0x220] sm:$0xff]
        %v578 = vld [vmem:[%s2 + $0x228] sm:$0xff]
        %v579 = vld [vmem:[%s2 + $0x230] sm:$0xff]
        %v580 = vld [vmem:[%s2 + $0x238] sm:$0xff]
        %v581 = vld [vmem:[%s2 + $0x240] sm:$0xff]
        %v582 = vld [vmem:[%s2 + $0x248] sm:$0xff]
        %v583 = vld [vmem:[%s2 + $0x250] sm:$0xff]
        %v584 = vld [vmem:[%s2 + $0x258] sm:$0xff]
        %v585 = vld [vmem:[%s2 + $0x260] sm:$0xff]
        %v586 = vld [vmem:[%s2 + $0x268] sm:$0xff]
        %v587 = vld [vmem:[%s2 + $0x270] sm:$0xff]
        %v588 = vld [vmem:[%s2 + $0x278] sm:$0xff]
        %v589 = vld [vmem:[%s2 + $0x280] sm:$0xff]
        %v590 = vld [vmem:[%s2 + $0x288] sm:$0xff]
        %v591 = vld [vmem:[%s2 + $0x290] sm:$0xff]
        %v592 = vld [vmem:[%s2 + $0x298] sm:$0xff]
        %v593 = vld [vmem:[%s2 + $0x2a0] sm:$0xff]
        %v594 = vld [vmem:[%s2 + $0x2a8] sm:$0xff]
        %v595 = vld [vmem:[%s2 + $0x2b0] sm:$0xff]
        %v596 = vld [vmem:[%s2 + $0x2b8] sm:$0xff]
        %v597 = vld [vmem:[%s2 + $0x2c0] sm:$0xff]
        %v598 = vld [vmem:[%s2 + $0x2c8] sm:$0xff]
        %v599 = vld [vmem:[%s2 + $0x2d0] sm:$0xff]
        %v600 = vld [vmem:[%s2 + $0x2d8] sm:$0xff]
        %v601 = vld [vmem:[%s2 + $0x2e0] sm:$0xff]
        %v602 = vld [vmem:[%s2 + $0x2e8] sm:$0xff]
        %v603 = vld [vmem:[%s2 + $0x2f0] sm:$0xff]
        %v604 = vld [vmem:[%s2 + $0x2f8] sm:$0xff]
        %v605 = vld [vmem:[%s2 + $0x300] sm:$0xff]
        %v606 = vld [vmem:[%s2 + $0x308] sm:$0xff]
        %v607 = vld [vmem:[%s2 + $0x310] sm:$0xff]
        %v608 = vld [vmem:[%s2 + $0x318] sm:$0xff]
        %v609 = vld [vmem:[%s2 + $0x320] sm:$0xff]
        %v610 = vld [vmem:[%s2 + $0x328] sm:$0xff]
        %v611 = vld [vmem:[%s2 + $0x330] sm:$0xff]
        %v612 = vld [vmem:[%s2 + $0x338] sm:$0xff]
        %v613 = vld [vmem:[%s2 + $0x340] sm:$0xff]
        %v614 = vld [vmem:[%s2 + $0x348] sm:$0xff]
        %v615 = vld [vmem:[%s2 + $0x350] sm:$0xff]
        %v616 = vld [vmem:[%s2 + $0x358] sm:$0xff]
        %v617 = vld [vmem:[%s2 + $0x360] sm:$0xff]
        %v618 = vld [vmem:[%s2 + $0x368] sm:$0xff]
        %v619 = vld [vmem:[%s2 + $0x370] sm:$0xff]
        %v620 = vld [vmem:[%s2 + $0x378] sm:$0xff]
        %v621 = vld [vmem:[%s2 + $0x380] sm:$0xff]
        %v622 = vld [vmem:[%s2 + $0x388] sm:$0xff]
        %v623 = vld [vmem:[%s2 + $0x390] sm:$0xff]
        %v624 = vld [vmem:[%s2 + $0x398] sm:$0xff]
        %v625 = vld [vmem:[%s2 + $0x3a0] sm:$0xff]
        %v626 = vld [vmem:[%s2 + $0x3a8] sm:$0xff]
        %v627 = vld [vmem:[%s2 + $0x3b0] sm:$0xff]
        %v628 = vld [vmem:[%s2 + $0x3b8] sm:$0xff]
        %v629 = vld [vmem:[%s2 + $0x3c0] sm:$0xff]
        %v630 = vld [vmem:[%s2 + $0x3c8] sm:$0xff]
        %v631 = vld [vmem:[%s2 + $0x3d0] sm:$0xff]
        %v632 = vld [vmem:[%s2 + $0x3d8] sm:$0xff]
        %v633 = vld [vmem:[%s2 + $0x3e0] sm:$0xff]
        %v634 = vld [vmem:[%s2 + $0x3e8] sm:$0xff]
        %v635 = vld [vmem:[%s2 + $0x3f0] sm:$0xff]
        %v636 = vld [vmem:[%s2 + $0x3f8] sm:$0xff]
        %v637 = vld [vmem:[%s2 + $0x400] sm:$0xff]
        %v638 = vld [vmem:[%s2 + $0x408] sm:$0xff]
        %v639 = vld [vmem:[%s2 + $0x410] sm:$0xff]
        %v640 = vld [vmem:[%s2 + $0x418] sm:$0xff]
        %v641 = vld [vmem:[%s2 + $0x420] sm:$0xff]
        %v642 = vld [vmem:[%s2 + $0x428] sm:$0xff]
        %v643 = vld [vmem:[%s2 + $0x430] sm:$0xff]
        %v644 = vld [vmem:[%s2 + $0x438] sm:$0xff]
        %v645 = vld [vmem:[%s2 + $0x440] sm:$0xff]
        %v646 = vld [vmem:[%s2 + $0x448] sm:$0xff]
        %v647 = vld [vmem:[%s2 + $0x450] sm:$0xff]
        %v648 = vld [vmem:[%s2 + $0x458] sm:$0xff]
        %v649 = vld [vmem:[%s2 + $0x460] sm:$0xff]
        %v650 = vld [vmem:[%s2 + $0x468] sm:$0xff]
        %v651 = vld [vmem:[%s2 + $0x470] sm:$0xff]
        %v652 = vld [vmem:[%s2 + $0x478] sm:$0xff]
        %v653 = vld [vmem:[%s2 + $0x480] sm:$0xff]
        %v654 = vld [vmem:[%s2 + $0x488] sm:$0xff]
        %v655 = vld [vmem:[%s2 + $0x490] sm:$0xff]
        %v656 = vld [vmem:[%s2 + $0x498] sm:$0xff]
        %v657 = vld [vmem:[%s2 + $0x4a0] sm:$0xff]
        %v658 = vld [vmem:[%s2 + $0x4a8] sm:$0xff]
        %v659 = vld [vmem:[%s2 + $0x4b0] sm:$0xff]
        %v660 = vld [vmem:[%s2 + $0x4b8] sm:$0xff]
        %v661 = vld [vmem:[%s2 + $0x4c0] sm:$0xff]
        %v662 = vld [vmem:[%s2 + $0x4c8] sm:$0xff]
        %v663 = vld [vmem:[%s2 + $0x4d0] sm:$0xff]
        %v664 = vld [vmem:[%s2 + $0x4d8] sm:$0xff]
        %v665 = vld [vmem:[%s2 + $0x4e0] sm:$0xff]
        %v666 = vld [vmem:[%s2 + $0x4e8] sm:$0xff]
        %v667 = vld [vmem:[%s2 + $0x4f0] sm:$0xff]
        %v668 = vld [vmem:[%s2 + $0x4f8] sm:$0xff]
        %v669 = vld [vmem:[%s2 + $0x500] sm:$0xff]
        %v670 = vld [vmem:[%s2 + $0x508] sm:$0xff]
        %v671 = vld [vmem:[%s2 + $0x510] sm:$0xff]
        %v672 = vld [vmem:[%s2 + $0x518] sm:$0xff]
        %v673 = vld [vmem:[%s2 + $0x520] sm:$0xff]
        %v674 = vld [vmem:[%s2 + $0x528] sm:$0xff]
        %v675 = vld [vmem:[%s2 + $0x530] sm:$0xff]
        %v676 = vld [vmem:[%s2 + $0x538] sm:$0xff]
        %v677 = vld [vmem:[%s2 + $0x540] sm:$0xff]
        %v678 = vld [vmem:[%s2 + $0x548] sm:$0xff]
        %v679 = vld [vmem:[%s2 + $0x550] sm:$0xff]
        %v680 = vld [vmem:[%s2 + $0x558] sm:$0xff]
        %v681 = vld [vmem:[%s2 + $0x560] sm:$0xff]
        %v682 = vld [vmem:[%s2 + $0x568] sm:$0xff]
        %v683 = vld [vmem:[%s2 + $0x570] sm:$0xff]
        %v684 = vld [vmem:[%s2 + $0x578] sm:$0xff]
        %v685 = vld [vmem:[%s2 + $0x580] sm:$0xff]
        %v686 = vld [vmem:[%s2 + $0x588] sm:$0xff]
        %v687 = vld [vmem:[%s2 + $0x590] sm:$0xff]
        %v688 = vld [vmem:[%s2 + $0x598] sm:$0xff]
        %v689 = vld [vmem:[%s2 + $0x5a0] sm:$0xff]
        %v690 = vld [vmem:[%s2 + $0x5a8] sm:$0xff]
        %v691 = vld [vmem:[%s2 + $0x5b0] sm:$0xff]
        %v692 = vld [vmem:[%s2 + $0x5b8] sm:$0xff]
        %v693 = vld [vmem:[%s2 + $0x5c0] sm:$0xff]
        %v694 = vld [vmem:[%s2 + $0x5c8] sm:$0xff]
        %v695 = vld [vmem:[%s2 + $0x5d0] sm:$0xff]
        %v696 = vld [vmem:[%s2 + $0x5d8] sm:$0xff]
        %v697 = vld [vmem:[%s2 + $0x5e0] sm:$0xff]
        %v698 = vld [vmem:[%s2 + $0x5e8] sm:$0xff]
        %v699 = vld [vmem:[%s2 + $0x5f0] sm:$0xff]
        %v700 = vld [vmem:[%s2 + $0x5f8] sm:$0xff]
        %v701 = vld [vmem:[%s2 + $0x600] sm:$0xff]
        %v702 = vld [vmem:[%s2 + $0x608] sm:$0xff]
        %v703 = vld [vmem:[%s2 + $0x610] sm:$0xff]
        %v704 = vld [vmem:[%s2 + $0x618] sm:$0xff]
        %v705 = vld [vmem:[%s2 + $0x620] sm:$0xff]
        %v706 = vld [vmem:[%s2 + $0x628] sm:$0xff]
        %v707 = vld [vmem:[%s2 + $0x630] sm:$0xff]
        %v708 = vld [vmem:[%s2 + $0x638] sm:$0xff]
        %v709 = vld [vmem:[%s2 + $0x640] sm:$0xff]
        %v710 = vld [vmem:[%s2 + $0x648] sm:$0xff]
        %v711 = vld [vmem:[%s2 + $0x650] sm:$0xff]
        %v712 = vld [vmem:[%s2 + $0x658] sm:$0xff]
        %v713 = vld [vmem:[%s2 + $0x660] sm:$0xff]
        %v714 = vld [vmem:[%s2 + $0x668] sm:$0xff]
        %v715 = vld [vmem:[%s2 + $0x670] sm:$0xff]
        %v716 = vld [vmem:[%s2 + $0x678] sm:$0xff]
        %v717 = vld [vmem:[%s2 + $0x680] sm:$0xff]
        %v718 = vld [vmem:[%s2 + $0x688] sm:$0xff]
        %v719 = vld [vmem:[%s2 + $0x690] sm:$0xff]
        %v720 = vld [vmem:[%s2 + $0x698] sm:$0xff]
        %v721 = vld [vmem:[%s2 + $0x6a0] sm:$0xff]
        %v722 = vld [vmem:[%s2 + $0x6a8] sm:$0xff]
        %v723 = vld [vmem:[%s2 + $0x6b0] sm:$0xff]
        %v724 = vld [vmem:[%s2 + $0x6b8] sm:$0xff]
        %v725 = vld [vmem:[%s2 + $0x6c0] sm:$0xff]
        %v726 = vld [vmem:[%s2 + $0x6c8] sm:$0xff]
        %v727 = vld [vmem:[%s2 + $0x6d0] sm:$0xff]
        %v728 = vld [vmem:[%s2 + $0x6d8] sm:$0xff]
        %v729 = vld [vmem:[%s2 + $0x6e0] sm:$0xff]
        %v730 = vld [vmem:[%s2 + $0x6e8] sm:$0xff]
        %v731 = vld [vmem:[%s2 + $0x6f0] sm:$0xff]
        %v732 = vld [vmem:[%s2 + $0x6f8] sm:$0xff]
        %v733 = vld [vmem:[%s2 + $0x700] sm:$0xff]
        %v734 = vld [vmem:[%s2 + $0x708] sm:$0xff]
        %v735 = vld [vmem:[%s2 + $0x710] sm:$0xff]
        %v736 = vld [vmem:[%s2 + $0x718] sm:$0xff]
        %v737 = vld [vmem:[%s2 + $0x720] sm:$0xff]
        %v738 = vld [vmem:[%s2 + $0x728] sm:$0xff]
        %v739 = vld [vmem:[%s2 + $0x730] sm:$0xff]
        %v740 = vld [vmem:[%s2 + $0x738] sm:$0xff]
        %v741 = vld [vmem:[%s2 + $0x740] sm:$0xff]
        %v742 = vld [vmem:[%s2 + $0x748] sm:$0xff]
        %v743 = vld [vmem:[%s2 + $0x750] sm:$0xff]
        %v744 = vld [vmem:[%s2 + $0x758] sm:$0xff]
        %v745 = vld [vmem:[%s2 + $0x760] sm:$0xff]
        %v746 = vld [vmem:[%s2 + $0x768] sm:$0xff]
        %v747 = vld [vmem:[%s2 + $0x770] sm:$0xff]
        %v748 = vld [vmem:[%s2 + $0x778] sm:$0xff]
        %v749 = vld [vmem:[%s2 + $0x780] sm:$0xff]
        %v750 = vld [vmem:[%s2 + $0x788] sm:$0xff]
        %v751 = vld [vmem:[%s2 + $0x790] sm:$0xff]
        %v752 = vld [vmem:[%s2 + $0x798] sm:$0xff]
        %v753 = vld [vmem:[%s2 + $0x7a0] sm:$0xff]
        %v754 = vld [vmem:[%s2 + $0x7a8] sm:$0xff]
        %v755 = vld [vmem:[%s2 + $0x7b0] sm:$0xff]
        %v756 = vld [vmem:[%s2 + $0x7b8] sm:$0xff]
        %v757 = vld [vmem:[%s2 + $0x7c0] sm:$0xff]
        %v758 = vld [vmem:[%s2 + $0x7c8] sm:$0xff]
        %v759 = vld [vmem:[%s2 + $0x7d0] sm:$0xff]
        %v760 = vld [vmem:[%s2 + $0x7d8] sm:$0xff]
        %v761 = vld [vmem:[%s2 + $0x7e0] sm:$0xff]
        %v762 = vld [vmem:[%s2 + $0x7e8] sm:$0xff]
        %v763 = vld [vmem:[%s2 + $0x7f0] sm:$0xff]
        %v764 = vld [vmem:[%s2 + $0x7f8] sm:$0xff]
        %v765 = vld [vmem:[%s2 + $0x800] sm:$0xff]
        %v766 = vld [vmem:[%s2 + $0x808] sm:$0xff]
        %v767 = vld [vmem:[%s2 + $0x810] sm:$0xff]
        %v768 = vld [vmem:[%s2 + $0x818] sm:$0xff]
        %v769 = vld [vmem:[%s2 + $0x820] sm:$0xff]
        %v770 = vld [vmem:[%s2 + $0x828] sm:$0xff]
        %v771 = vld [vmem:[%s2 + $0x830] sm:$0xff]
        %v772 = vld [vmem:[%s2 + $0x838] sm:$0xff]
        %v773 = vld [vmem:[%s2 + $0x840] sm:$0xff]
        %v774 = vld [vmem:[%s2 + $0x848] sm:$0xff]
        %v775 = vld [vmem:[%s2 + $0x850] sm:$0xff]
        %v776 = vld [vmem:[%s2 + $0x858] sm:$0xff]
        %v777 = vld [vmem:[%s2 + $0x860] sm:$0xff]
        %v778 = vld [vmem:[%s2 + $0x868] sm:$0xff]
        %v779 = vld [vmem:[%s2 + $0x870] sm:$0xff]
        %v780 = vld [vmem:[%s2 + $0x878] sm:$0xff]
        %v781 = vld [vmem:[%s2 + $0x880] sm:$0xff]
        %v782 = vld [vmem:[%s2 + $0x888] sm:$0xff]
        %v783 = vld [vmem:[%s2 + $0x890] sm:$0xff]
        %v784 = vld [vmem:[%s2 + $0x898] sm:$0xff]
        %v785 = vld [vmem:[%s2 + $0x8a0] sm:$0xff]
        %v786 = vld [vmem:[%s2 + $0x8a8] sm:$0xff]
        %v787 = vld [vmem:[%s2 + $0x8b0] sm:$0xff]
        %v788 = vld [vmem:[%s2 + $0x8b8] sm:$0xff]
        %v789 = vld [vmem:[%s2 + $0x8c0] sm:$0xff]
        %v790 = vld [vmem:[%s2 + $0x8c8] sm:$0xff]
        %v791 = vld [vmem:[%s2 + $0x8d0] sm:$0xff]
        %v792 = vld [vmem:[%s2 + $0x8d8] sm:$0xff]
        %v793 = vld [vmem:[%s2 + $0x8e0] sm:$0xff]
        %v794 = vld [vmem:[%s2 + $0x8e8] sm:$0xff]
        %v795 = vld [vmem:[%s2 + $0x8f0] sm:$0xff]
        %v796 = vld [vmem:[%s2 + $0x8f8] sm:$0xff]
        %v797 = vld [vmem:[%s2 + $0x900] sm:$0xff]
        %v798 = vld [vmem:[%s2 + $0x908] sm:$0xff]
        %v799 = vld [vmem:[%s2 + $0x910] sm:$0xff]
        %v800 = vld [vmem:[%s2 + $0x918] sm:$0xff]
        %v801 = vld [vmem:[%s2 + $0x920] sm:$0xff]
        %v802 = vld [vmem:[%s2 + $0x928] sm:$0xff]
        %v803 = vld [vmem:[%s2 + $0x930] sm:$0xff]
        %v804 = vld [vmem:[%s2 + $0x938] sm:$0xff]
        %v805 = vld [vmem:[%s2 + $0x940] sm:$0xff]
        %v806 = vld [vmem:[%s2 + $0x948] sm:$0xff]
        %v807 = vld [vmem:[%s2 + $0x950] sm:$0xff]
        %v808 = vld [vmem:[%s2 + $0x958] sm:$0xff]
        %v809 = vld [vmem:[%s2 + $0x960] sm:$0xff]
        %v810 = vld [vmem:[%s2 + $0x968] sm:$0xff]
        %v811 = vld [vmem:[%s2 + $0x970] sm:$0xff]
        %v812 = vld [vmem:[%s2 + $0x978] sm:$0xff]
        %v813 = vld [vmem:[%s2 + $0x980] sm:$0xff]
        %v814 = vld [vmem:[%s2 + $0x988] sm:$0xff]
        %v815 = vld [vmem:[%s2 + $0x990] sm:$0xff]
        %v816 = vld [vmem:[%s2 + $0x998] sm:$0xff]
        %v817 = vld [vmem:[%s2 + $0x9a0] sm:$0xff]
        %v818 = vld [vmem:[%s2 + $0x9a8] sm:$0xff]
        %v819 = vld [vmem:[%s2 + $0x9b0] sm:$0xff]
        %v820 = vld [vmem:[%s2 + $0x9b8] sm:$0xff]
        %v821 = vld [vmem:[%s2 + $0x9c0] sm:$0xff]
        %v822 = vld [vmem:[%s2 + $0x9c8] sm:$0xff]
        %v823 = vld [vmem:[%s2 + $0x9d0] sm:$0xff]
        %v824 = vld [vmem:[%s2 + $0x9d8] sm:$0xff]
        %v825 = vld [vmem:[%s2 + $0x9e0] sm:$0xff]
        %v826 = vld [vmem:[%s2 + $0x9e8] sm:$0xff]
        %v827 = vld [vmem:[%s2 + $0x9f0] sm:$0xff]
        %v828 = vld [vmem:[%s2 + $0x9f8] sm:$0xff]
        %v829 = vld [vmem:[%s2 + $0xa00] sm:$0xff]
        %v830 = vld [vmem:[%s2 + $0xa08] sm:$0xff]
        %v831 = vld [vmem:[%s2 + $0xa10] sm:$0xff]
        %v832 = vld [vmem:[%s2 + $0xa18] sm:$0xff]
        %v833 = vld [vmem:[%s2 + $0xa20] sm:$0xff]
        %v834 = vld [vmem:[%s2 + $0xa28] sm:$0xff]
        %v835 = vld [vmem:[%s2 + $0xa30] sm:$0xff]
        %v836 = vld [vmem:[%s2 + $0xa38] sm:$0xff]
        %v837 = vld [vmem:[%s2 + $0xa40] sm:$0xff]
        %v838 = vld [vmem:[%s2 + $0xa48] sm:$0xff]
        %v839 = vld [vmem:[%s2 + $0xa50] sm:$0xff]
        %v840 = vld [vmem:[%s2 + $0xa58] sm:$0xff]
        %v841 = vld [vmem:[%s2 + $0xa60] sm:$0xff]
        %v842 = vld [vmem:[%s2 + $0xa68] sm:$0xff]
        %v843 = vld [vmem:[%s2 + $0xa70] sm:$0xff]
        %v844 = vld [vmem:[%s2 + $0xa78] sm:$0xff]
        %v845 = vld [vmem:[%s2 + $0xa80] sm:$0xff]
        %v846 = vld [vmem:[%s2 + $0xa88] sm:$0xff]
        %v847 = vld [vmem:[%s2 + $0xa90] sm:$0xff]
        %v848 = vld [vmem:[%s2 + $0xa98] sm:$0xff]
        %v849 = vld [vmem:[%s2 + $0xaa0] sm:$0xff]
        %v850 = vld [vmem:[%s2 + $0xaa8] sm:$0xff]
        %v851 = vld [vmem:[%s2 + $0xab0] sm:$0xff]
        %v852 = vld [vmem:[%s2 + $0xab8] sm:$0xff]
        %v853 = vld [vmem:[%s2 + $0xac0] sm:$0xff]
        %v854 = vld [vmem:[%s2 + $0xac8] sm:$0xff]
        %v855 = vld [vmem:[%s2 + $0xad0] sm:$0xff]
        %v856 = vld [vmem:[%s2 + $0xad8] sm:$0xff]
        %v857 = vld [vmem:[%s2 + $0xae0] sm:$0xff]
        %v858 = vld [vmem:[%s2 + $0xae8] sm:$0xff]
        %v859 = vld [vmem:[%s2 + $0xaf0] sm:$0xff]
        %v860 = vld [vmem:[%s2 + $0xaf8] sm:$0xff]
        %v861 = vld [vmem:[%s2 + $0xb00] sm:$0xff]
        %v862 = vld [vmem:[%s2 + $0xb08] sm:$0xff]
        %v863 = vld [vmem:[%s2 + $0xb10] sm:$0xff]
        %v864 = vld [vmem:[%s2 + $0xb18] sm:$0xff]
        %v865 = vld [vmem:[%s2 + $0xb20] sm:$0xff]
        %v866 = vld [vmem:[%s2 + $0xb28] sm:$0xff]
        %v867 = vld [vmem:[%s2 + $0xb30] sm:$0xff]
        %v868 = vld [vmem:[%s2 + $0xb38] sm:$0xff]
        %v869 = vld [vmem:[%s2 + $0xb40] sm:$0xff]
        %v870 = vld [vmem:[%s2 + $0xb48] sm:$0xff]
        %v871 = vld [vmem:[%s2 + $0xb50] sm:$0xff]
        %v872 = vld [vmem:[%s2 + $0xb58] sm:$0xff]
        %v873 = vld [vmem:[%s2 + $0xb60] sm:$0xff]
        %v874 = vld [vmem:[%s2 + $0xb68] sm:$0xff]
        %v875 = vld [vmem:[%s2 + $0xb70] sm:$0xff]
        %v876 = vld [vmem:[%s2 + $0xb78] sm:$0xff]
        %v877 = vld [vmem:[%s2 + $0xb80] sm:$0xff]
        %v878 = vld [vmem:[%s2 + $0xb88] sm:$0xff]
        %v879 = vld [vmem:[%s2 + $0xb90] sm:$0xff]
        %v880 = vld [vmem:[%s2 + $0xb98] sm:$0xff]
        %v881 = vld [vmem:[%s2 + $0xba0] sm:$0xff]
        %v882 = vld [vmem:[%s2 + $0xba8] sm:$0xff]
        %v883 = vld [vmem:[%s2 + $0xbb0] sm:$0xff]
        %v884 = vld [vmem:[%s2 + $0xbb8] sm:$0xff]
        %v885 = vld [vmem:[%s2 + $0xbc0] sm:$0xff]
        %v886 = vld [vmem:[%s2 + $0xbc8] sm:$0xff]
        %v887 = vld [vmem:[%s2 + $0xbd0] sm:$0xff]
        %v888 = vld [vmem:[%s2 + $0xbd8] sm:$0xff]
        %v889 = vld [vmem:[%s2 + $0xbe0] sm:$0xff]
        %v890 = vld [vmem:[%s2 + $0xbe8] sm:$0xff]
        %v891 = vld [vmem:[%s2 + $0xbf0] sm:$0xff]
        %v892 = vld [vmem:[%s2 + $0xbf8] sm:$0xff]
        %v893 = vld [vmem:[%s2 + $0xc00] sm:$0xff]
        %v894 = vld [vmem:[%s2 + $0xc08] sm:$0xff]
        %v895 = vld [vmem:[%s2 + $0xc10] sm:$0xff]
        %v896 = vld [vmem:[%s2 + $0xc18] sm:$0xff]
        %v897 = vld [vmem:[%s2 + $0xc20] sm:$0xff]
        %v898 = vld [vmem:[%s2 + $0xc28] sm:$0xff]
        %v899 = vld [vmem:[%s2 + $0xc30] sm:$0xff]
        %v900 = vld [vmem:[%s2 + $0xc38] sm:$0xff]
        %v901 = vld [vmem:[%s2 + $0xc40] sm:$0xff]
        %v902 = vld [vmem:[%s2 + $0xc48] sm:$0xff]
        %v903 = vld [vmem:[%s2 + $0xc50] sm:$0xff]
        %v904 = vld [vmem:[%s2 + $0xc58] sm:$0xff]
        %v905 = vld [vmem:[%s2 + $0xc60] sm:$0xff]
        %v906 = vld [vmem:[%s2 + $0xc68] sm:$0xff]
        %v907 = vld [vmem:[%s2 + $0xc70] sm:$0xff]
        %v908 = vld [vmem:[%s2 + $0xc78] sm:$0xff]
        %v909 = vld [vmem:[%s2 + $0xc80] sm:$0xff]
        %v910 = vld [vmem:[%s2 + $0xc88] sm:$0xff]
        %v911 = vld [vmem:[%s2 + $0xc90] sm:$0xff]
        %v912 = vld [vmem:[%s2 + $0xc98] sm:$0xff]
        %v913 = vld [vmem:[%s2 + $0xca0] sm:$0xff]
        %v914 = vld [vmem:[%s2 + $0xca8] sm:$0xff]
        %v915 = vld [vmem:[%s2 + $0xcb0] sm:$0xff]
        %v916 = vld [vmem:[%s2 + $0xcb8] sm:$0xff]
        %v917 = vld [vmem:[%s2 + $0xcc0] sm:$0xff]
        %v918 = vld [vmem:[%s2 + $0xcc8] sm:$0xff]
        %v919 = vld [vmem:[%s2 + $0xcd0] sm:$0xff]
        %v920 = vld [vmem:[%s2 + $0xcd8] sm:$0xff]
        %v921 = vld [vmem:[%s2 + $0xce0] sm:$0xff]
        %v922 = vld [vmem:[%s2 + $0xce8] sm:$0xff]
        %v923 = vld [vmem:[%s2 + $0xcf0] sm:$0xff]
        %v924 = vld [vmem:[%s2 + $0xcf8] sm:$0xff]
        %v925 = vld [vmem:[%s2 + $0xd00] sm:$0xff]
        %v926 = vld [vmem:[%s2 + $0xd08] sm:$0xff]
        %v927 = vld [vmem:[%s2 + $0xd10] sm:$0xff]
        %v928 = vld [vmem:[%s2 + $0xd18] sm:$0xff]
        %v929 = vld [vmem:[%s2 + $0xd20] sm:$0xff]
        %v930 = vld [vmem:[%s2 + $0xd28] sm:$0xff]
        %v931 = vld [vmem:[%s2 + $0xd30] sm:$0xff]
        %v932 = vld [vmem:[%s2 + $0xd38] sm:$0xff]
        %v933 = vld [vmem:[%s2 + $0xd40] sm:$0xff]
        %v934 = vld [vmem:[%s2 + $0xd48] sm:$0xff]
        %v935 = vld [vmem:[%s2 + $0xd50] sm:$0xff]
        %v936 = vld [vmem:[%s2 + $0xd58] sm:$0xff]
        %v937 = vld [vmem:[%s2 + $0xd60] sm:$0xff]
        %v938 = vld [vmem:[%s2 + $0xd68] sm:$0xff]
        %v939 = vld [vmem:[%s2 + $0xd70] sm:$0xff]
        %v940 = vld [vmem:[%s2 + $0xd78] sm:$0xff]
        %v941 = vld [vmem:[%s2 + $0xd80] sm:$0xff]
        %v942 = vld [vmem:[%s2 + $0xd88] sm:$0xff]
        %v943 = vld [vmem:[%s2 + $0xd90] sm:$0xff]
        %v944 = vld [vmem:[%s2 + $0xd98] sm:$0xff]
        %v945 = vld [vmem:[%s2 + $0xda0] sm:$0xff]
        %v946 = vld [vmem:[%s2 + $0xda8] sm:$0xff]
        %v947 = vld [vmem:[%s2 + $0xdb0] sm:$0xff]
        %v948 = vld [vmem:[%s2 + $0xdb8] sm:$0xff]
        %v949 = vld [vmem:[%s2 + $0xdc0] sm:$0xff]
        %v950 = vld [vmem:[%s2 + $0xdc8] sm:$0xff]
        %v951 = vld [vmem:[%s2 + $0xdd0] sm:$0xff]
        %v952 = vld [vmem:[%s2 + $0xdd8] sm:$0xff]
        %v953 = vld [vmem:[%s2 + $0xde0] sm:$0xff]
        %v954 = vld [vmem:[%s2 + $0xde8] sm:$0xff]
        %v955 = vld [vmem:[%s2 + $0xdf0] sm:$0xff]
        %v956 = vld [vmem:[%s2 + $0xdf8] sm:$0xff]
        %v957 = vld [vmem:[%s2 + $0xe00] sm:$0xff]
        %v958 = vld [vmem:[%s2 + $0xe08] sm:$0xff]
        %v959 = vld [vmem:[%s2 + $0xe10] sm:$0xff]
        %v960 = vld [vmem:[%s2 + $0xe18] sm:$0xff]
        %v961 = vld [vmem:[%s2 + $0xe20] sm:$0xff]
        %v962 = vld [vmem:[%s2 + $0xe28] sm:$0xff]
        %v963 = vld [vmem:[%s2 + $0xe30] sm:$0xff]
        %v964 = vld [vmem:[%s2 + $0xe38] sm:$0xff]
        %v965 = vld [vmem:[%s2 + $0xe40] sm:$0xff]
        %v966 = vld [vmem:[%s2 + $0xe48] sm:$0xff]
        %v967 = vld [vmem:[%s2 + $0xe50] sm:$0xff]
        %v968 = vld [vmem:[%s2 + $0xe58] sm:$0xff]
        %v969 = vld [vmem:[%s2 + $0xe60] sm:$0xff]
        %v970 = vld [vmem:[%s2 + $0xe68] sm:$0xff]
        %v971 = vld [vmem:[%s2 + $0xe70] sm:$0xff]
        %v972 = vld [vmem:[%s2 + $0xe78] sm:$0xff]
        %v973 = vld [vmem:[%s2 + $0xe80] sm:$0xff]
        %v974 = vld [vmem:[%s2 + $0xe88] sm:$0xff]
        %v975 = vld [vmem:[%s2 + $0xe90] sm:$0xff]
        %v976 = vld [vmem:[%s2 + $0xe98] sm:$0xff]
        %v977 = vld [vmem:[%s2 + $0xea0] sm:$0xff]
        %v978 = vld [vmem:[%s2 + $0xea8] sm:$0xff]
        %v979 = vld [vmem:[%s2 + $0xeb0] sm:$0xff]
        %v980 = vld [vmem:[%s2 + $0xeb8] sm:$0xff]
        %v981 = vld [vmem:[%s2 + $0xec0] sm:$0xff]
        %v982 = vld [vmem:[%s2 + $0xec8] sm:$0xff]
        %v983 = vld [vmem:[%s2 + $0xed0] sm:$0xff]
        %v984 = vld [vmem:[%s2 + $0xed8] sm:$0xff]
        %v985 = vld [vmem:[%s2 + $0xee0] sm:$0xff]
        %v986 = vld [vmem:[%s2 + $0xee8] sm:$0xff]
        %v987 = vld [vmem:[%s2 + $0xef0] sm:$0xff]
        %v988 = vld [vmem:[%s2 + $0xef8] sm:$0xff]
        %v989 = vld [vmem:[%s2 + $0xf00] sm:$0xff]
        %v990 = vld [vmem:[%s2 + $0xf08] sm:$0xff]
        %v991 = vld [vmem:[%s2 + $0xf10] sm:$0xff]
        %v992 = vld [vmem:[%s2 + $0xf18] sm:$0xff]
        %v993 = vld [vmem:[%s2 + $0xf20] sm:$0xff]
        %v994 = vld [vmem:[%s2 + $0xf28] sm:$0xff]
        %v995 = vld [vmem:[%s2 + $0xf30] sm:$0xff]
        %v996 = vld [vmem:[%s2 + $0xf38] sm:$0xff]
        %v997 = vld [vmem:[%s2 + $0xf40] sm:$0xff]
        %v998 = vld [vmem:[%s2 + $0xf48] sm:$0xff]
        %v999 = vld [vmem:[%s2 + $0xf50] sm:$0xff]
        %v1000 = vld [vmem:[%s2 + $0xf58] sm:$0xff]
        %v1001 = vld [vmem:[%s2 + $0xf60] sm:$0xff]
        %v1002 = vld [vmem:[%s2 + $0xf68] sm:$0xff]
        %v1003 = vld [vmem:[%s2 + $0xf70] sm:$0xff]
        %v1004 = vld [vmem:[%s2 + $0xf78] sm:$0xff]
        %v1005 = vld [vmem:[%s2 + $0xf80] sm:$0xff]
        %v1006 = vld [vmem:[%s2 + $0xf88] sm:$0xff]
        %v1007 = vld [vmem:[%s2 + $0xf90] sm:$0xff]
        %v1008 = vld [vmem:[%s2 + $0xf98] sm:$0xff]
        %v1009 = vld [vmem:[%s2 + $0xfa0] sm:$0xff]
        %v1010 = vld [vmem:[%s2 + $0xfa8] sm:$0xff]
        %v1011 = vld [vmem:[%s2 + $0xfb0] sm:$0xff]
        %v1012 = vld [vmem:[%s2 + $0xfb8] sm:$0xff]
        %v1013 = vld [vmem:[%s2 + $0xfc0] sm:$0xff]
        %v1014 = vld [vmem:[%s2 + $0xfc8] sm:$0xff]
        %v1015 = vld [vmem:[%s2 + $0xfd0] sm:$0xff]
        %v1016 = vld [vmem:[%s2 + $0xfd8] sm:$0xff]
        %v1017 = vld [vmem:[%s2 + $0xfe0] sm:$0xff]
        %v1018 = vld [vmem:[%s2 + $0xfe8] sm:$0xff]
        %v1019 = vld [vmem:[%s2 + $0xff0] sm:$0xff]
        %v1020 = vld [vmem:[%s2 + $0xff8] sm:$0xff]
        %v1021 = vld [vmem:[%s2 + $0x1000] sm:$0xff]
        %v1022 = vld [vmem:[%s2 + $0x1008] sm:$0xff]
        %v1023 = vld [vmem:[%s2 + $0x1010] sm:$0xff]
        %v1024 = vld [vmem:[%s2 + $0x1018] sm:$0xff]
        %v1025 = vld [vmem:[%s2 + $0x1020] sm:$0xff]
        %v1026 = vld [vmem:[%s2 + $0x1028] sm:$0xff]
        %v1027 = vld [vmem:[%s2 + $0x1030] sm:$0xff]
        %v1028 = vld [vmem:[%s2 + $0x1038] sm:$0xff]
        %v1029 = vld [vmem:[%s2 + $0x1040] sm:$0xff]
        %v1030 = vld [vmem:[%s2 + $0x1048] sm:$0xff]
        %v1031 = vld [vmem:[%s2 + $0x1050] sm:$0xff]
        %v1032 = vld [vmem:[%s2 + $0x1058] sm:$0xff]
        %v1033 = vld [vmem:[%s2 + $0x1060] sm:$0xff]
        %v1034 = vld [vmem:[%s2 + $0x1068] sm:$0xff]
        %v1035 = vld [vmem:[%s2 + $0x1070] sm:$0xff]
        %v1036 = vld [vmem:[%s2 + $0x1078] sm:$0xff]
        %v1037 = vld [vmem:[%s2 + $0x1080] sm:$0xff]
        %v1038 = vld [vmem:[%s2 + $0x1088] sm:$0xff]
        %v1039 = vld [vmem:[%s2 + $0x1090] sm:$0xff]
        %v1040 = vld [vmem:[%s2 + $0x1098] sm:$0xff]
        %v1041 = vld [vmem:[%s2 + $0x10a0] sm:$0xff]
        %v1042 = vld [vmem:[%s2 + $0x10a8] sm:$0xff]
        %v1043 = vld [vmem:[%s2 + $0x10b0] sm:$0xff]
        %v1044 = vld [vmem:[%s2 + $0x10b8] sm:$0xff]
        %v1045 = vld [vmem:[%s2 + $0x10c0] sm:$0xff]
        %v1046 = vld [vmem:[%s2 + $0x10c8] sm:$0xff]
        %v1047 = vld [vmem:[%s2 + $0x10d0] sm:$0xff]
        %v1048 = vld [vmem:[%s2 + $0x10d8] sm:$0xff]
        %v1049 = vld [vmem:[%s2 + $0x10e0] sm:$0xff]
        %v1050 = vld [vmem:[%s2 + $0x10e8] sm:$0xff]
        %v1051 = vld [vmem:[%s2 + $0x10f0] sm:$0xff]
        %v1052 = vld [vmem:[%s2 + $0x10f8] sm:$0xff]
        %v1053 = vld [vmem:[%s2 + $0x1100] sm:$0xff]
        %v1054 = vld [vmem:[%s2 + $0x1108] sm:$0xff]
        %v1055 = vld [vmem:[%s2 + $0x1110] sm:$0xff]
        %v1056 = vld [vmem:[%s2 + $0x1118] sm:$0xff]
        %v1057 = vld [vmem:[%s2 + $0x1120] sm:$0xff]
        %v1058 = vld [vmem:[%s2 + $0x1128] sm:$0xff]
        %v1059 = vld [vmem:[%s2 + $0x1130] sm:$0xff]
        %v1060 = vld [vmem:[%s2 + $0x1138] sm:$0xff]
        %v1061 = vld [vmem:[%s2 + $0x1140] sm:$0xff]
        %v1062 = vld [vmem:[%s2 + $0x1148] sm:$0xff]
        %v1063 = vld [vmem:[%s2 + $0x1150] sm:$0xff]
        %v1064 = vld [vmem:[%s2 + $0x1158] sm:$0xff]
        %v1065 = vld [vmem:[%s2 + $0x1160] sm:$0xff]
        %v1066 = vld [vmem:[%s2 + $0x1168] sm:$0xff]
        %v1067 = vld [vmem:[%s2 + $0x1170] sm:$0xff]
        %v1068 = vld [vmem:[%s2 + $0x1178] sm:$0xff]
        %v1069 = vld [vmem:[%s2 + $0x1180] sm:$0xff]
        %v1070 = vld [vmem:[%s2 + $0x1188] sm:$0xff]
        %v1071 = vld [vmem:[%s2 + $0x1190] sm:$0xff]
        %v1072 = vld [vmem:[%s2 + $0x1198] sm:$0xff]
        %v1073 = vld [vmem:[%s2 + $0x11a0] sm:$0xff]
        %v1074 = vld [vmem:[%s2 + $0x11a8] sm:$0xff]
        %v1075 = vld [vmem:[%s2 + $0x11b0] sm:$0xff]
        %v1076 = vld [vmem:[%s2 + $0x11b8] sm:$0xff]
        %v1077 = vld [vmem:[%s2 + $0x11c0] sm:$0xff]
        %v1078 = vld [vmem:[%s2 + $0x11c8] sm:$0xff]
        %v1079 = vld [vmem:[%s2 + $0x11d0] sm:$0xff]
        %v1080 = vld [vmem:[%s2 + $0x11d8] sm:$0xff]
        %v1081 = vld [vmem:[%s2 + $0x11e0] sm:$0xff]
        %v1082 = vld [vmem:[%s2 + $0x11e8] sm:$0xff]
        %v1083 = vld [vmem:[%s2 + $0x11f0] sm:$0xff]
        %v1084 = vld [vmem:[%s2 + $0x11f8] sm:$0xff]
        %v1085 = vld [vmem:[%s2 + $0x1200] sm:$0xff]
        %v1086 = vld [vmem:[%s2 + $0x1208] sm:$0xff]
        %v1087 = vld [vmem:[%s2 + $0x1210] sm:$0xff]
        %v1088 = vld [vmem:[%s2 + $0x1218] sm:$0xff]
        %v1089 = vld [vmem:[%s2 + $0x1220] sm:$0xff]
        %v1090 = vld [vmem:[%s2 + $0x1228] sm:$0xff]
        %v1091 = vld [vmem:[%s2 + $0x1230] sm:$0xff]
        %v1092 = vld [vmem:[%s2 + $0x1238] sm:$0xff]
        %v1093 = vld [vmem:[%s2 + $0x1240] sm:$0xff]
        %v1094 = vld [vmem:[%s2 + $0x1248] sm:$0xff]
        %v1095 = vld [vmem:[%s2 + $0x1250] sm:$0xff]
        %v1096 = vld [vmem:[%s2 + $0x1258] sm:$0xff]
        %v1097 = vld [vmem:[%s2 + $0x1260] sm:$0xff]
        %v1098 = vld [vmem:[%s2 + $0x1268] sm:$0xff]
        %v1099 = vld [vmem:[%s2 + $0x1270] sm:$0xff]
        %v1100 = vld [vmem:[%s2 + $0x1278] sm:$0xff]
        %v1101 = vld [vmem:[%s2 + $0x1280] sm:$0xff]
        %v1102 = vld [vmem:[%s2 + $0x1288] sm:$0xff]
        %v1103 = vld [vmem:[%s2 + $0x1290] sm:$0xff]
        %v1104 = vld [vmem:[%s2 + $0x1298] sm:$0xff]
        %v1105 = vld [vmem:[%s2 + $0x12a0] sm:$0xff]
        %v1106 = vld [vmem:[%s2 + $0x12a8] sm:$0xff]
        %v1107 = vld [vmem:[%s2 + $0x12b0] sm:$0xff]
        %v1108 = vld [vmem:[%s2 + $0x12b8] sm:$0xff]
        %v1109 = vld [vmem:[%s4] sm:$0xf]
        %v1111 = vperm.slane %v1109, 0
        %v1112 = vperm.slane %v1109, 1
        %v1113 = vperm.slane %v1109, 2
        %v1114 = vperm.slane %v1109, 3
        %vm1119 = vcmask 392192
        %v1121 = vsel %vm1119, %v358, 0
        %v1124 = vsel %vm1119, %v368, 0
        %v1127 = vsel %vm1119, %v378, 0
        %v1130 = vsel %vm1119, %v388, 0
        %v1133 = vsel %vm1119, %v398, 0
        %v1136 = vsel %vm1119, %v408, 0
        %v1139 = vsel %vm1119, %v418, 0
        %v1142 = vsel %vm1119, %v428, 0
        %v1145 = vsel %vm1119, %v438, 0
        %v1148 = vsel %vm1119, %v448, 0
        %v1151 = vsel %vm1119, %v458, 0
        %v1154 = vsel %vm1119, %v468, 0
        %v1157 = vsel %vm1119, %v478, 0
        %v1160 = vsel %vm1119, %v488, 0
        %v1163 = vsel %vm1119, %v498, 0
        %v1166 = vsel %vm1119, %v508, 0
        %1168 = vmatpush.msra.mxu0 %v569
        %1169 = vmatpush.msra.mxu0 %v565
        %1170 = vmatpush.msra.mxu0 %v561
        %1171 = vmatpush.msra.mxu0 %v557
        %1172 = vmatpush.msra.mxu0 %v553
        %1173 = vmatpush.msra.mxu0 %v549
        %1174 = vmatpush.msra.mxu0 %v545
        %1175 = vmatpush.msra.mxu0 %v541
        %1176 = vmatpush.msra.mxu0 %v537
        %1177 = vmatpush.msra.mxu0 %v533
        %1178 = vmatpush.msra.mxu0 %v529
        %1179 = vmatpush.msra.mxu0 %v525
        %1180 = vmatpush.msra.mxu0 %v521
        %1181 = vmatpush.msra.mxu0 %v517
        %1182 = vmatpush.msra.mxu0 %v513
        %1183 = vmatpush.msra.mxu0 %v509
        %1184 = vmatmul.f32.gmra.mxu0 %v349
        %v1185 = vpop.f32.mrf.mxu0
        %v1186 = vadd.f32 %v1111, %v1185
        %1187 = vmatmul.f32.gmra.mxu0 %v359
        %v1188 = vpop.f32.mrf.mxu0
        %v1189 = vadd.f32 %v1111, %v1188
        %1190 = vmatmul.f32.gmra.mxu0 %v369
        %v1191 = vpop.f32.mrf.mxu0
        %v1192 = vadd.f32 %v1111, %v1191
        %1193 = vmatmul.f32.gmra.mxu0 %v379
        %v1194 = vpop.f32.mrf.mxu0
        %v1195 = vadd.f32 %v1111, %v1194
        %1196 = vmatmul.f32.gmra.mxu0 %v389
        %v1197 = vpop.f32.mrf.mxu0
        %v1198 = vadd.f32 %v1111, %v1197
        %1199 = vmatmul.f32.gmra.mxu0 %v399
        %v1200 = vpop.f32.mrf.mxu0
        %v1201 = vadd.f32 %v1111, %v1200
        %1202 = vmatmul.f32.gmra.mxu0 %v409
        %v1203 = vpop.f32.mrf.mxu0
        %v1204 = vadd.f32 %v1111, %v1203
        %1205 = vmatmul.f32.gmra.mxu0 %v419
        %v1206 = vpop.f32.mrf.mxu0
        %v1207 = vadd.f32 %v1111, %v1206
        %1208 = vmatmul.f32.gmra.mxu0 %v429
        %v1209 = vpop.f32.mrf.mxu0
        %v1210 = vadd.f32 %v1111, %v1209
        %1211 = vmatmul.f32.gmra.mxu0 %v439
        %v1212 = vpop.f32.mrf.mxu0
        %v1213 = vadd.f32 %v1111, %v1212
        %1214 = vmatmul.f32.gmra.mxu0 %v449
        %v1215 = vpop.f32.mrf.mxu0
        %v1216 = vadd.f32 %v1111, %v1215
        %1217 = vmatmul.f32.gmra.mxu0 %v459
        %v1218 = vpop.f32.mrf.mxu0
        %v1219 = vadd.f32 %v1111, %v1218
        %1220 = vmatmul.f32.gmra.mxu0 %v469
        %v1221 = vpop.f32.mrf.mxu0
        %v1222 = vadd.f32 %v1111, %v1221
        %1223 = vmatmul.f32.gmra.mxu0 %v479
        %v1224 = vpop.f32.mrf.mxu0
        %v1225 = vadd.f32 %v1111, %v1224
        %1226 = vmatmul.f32.gmra.mxu0 %v489
        %v1227 = vpop.f32.mrf.mxu0
        %v1228 = vadd.f32 %v1111, %v1227
        %1229 = vmatmul.f32.gmra.mxu0 %v499
        %v1230 = vpop.f32.mrf.mxu0
        %v1231 = vadd.f32 %v1111, %v1230
        %1232 = vdwg.mxu0
        %1233 = vmatpush.msra.mxu0 %v633
        %1234 = vmatpush.msra.mxu0 %v629
        %1235 = vmatpush.msra.mxu0 %v625
        %1236 = vmatpush.msra.mxu0 %v621
        %1237 = vmatpush.msra.mxu0 %v617
        %1238 = vmatpush.msra.mxu0 %v613
        %1239 = vmatpush.msra.mxu0 %v609
        %1240 = vmatpush.msra.mxu0 %v605
        %1241 = vmatpush.msra.mxu0 %v601
        %1242 = vmatpush.msra.mxu0 %v597
        %1243 = vmatpush.msra.mxu0 %v593
        %1244 = vmatpush.msra.mxu0 %v589
        %1245 = vmatpush.msra.mxu0 %v585
        %1246 = vmatpush.msra.mxu0 %v581
        %1247 = vmatpush.msra.mxu0 %v577
        %1248 = vmatpush.msra.mxu0 %v573
        %1249 = vmatmul.f32.gmra.mxu0 %v350
        %v1250 = vpop.f32.mrf.mxu0
        %v1251 = vadd.f32 %v1186, %v1250
        %1252 = vmatmul.f32.gmra.mxu0 %v360
        %v1253 = vpop.f32.mrf.mxu0
        %v1254 = vadd.f32 %v1189, %v1253
        %1255 = vmatmul.f32.gmra.mxu0 %v370
        %v1256 = vpop.f32.mrf.mxu0
        %v1257 = vadd.f32 %v1192, %v1256
        %1258 = vmatmul.f32.gmra.mxu0 %v380
        %v1259 = vpop.f32.mrf.mxu0
        %v1260 = vadd.f32 %v1195, %v1259
        %1261 = vmatmul.f32.gmra.mxu0 %v390
        %v1262 = vpop.f32.mrf.mxu0
        %v1263 = vadd.f32 %v1198, %v1262
        %1264 = vmatmul.f32.gmra.mxu0 %v400
        %v1265 = vpop.f32.mrf.mxu0
        %v1266 = vadd.f32 %v1201, %v1265
        %1267 = vmatmul.f32.gmra.mxu0 %v410
        %v1268 = vpop.f32.mrf.mxu0
        %v1269 = vadd.f32 %v1204, %v1268
        %1270 = vmatmul.f32.gmra.mxu0 %v420
        %v1271 = vpop.f32.mrf.mxu0
        %v1272 = vadd.f32 %v1207, %v1271
        %1273 = vmatmul.f32.gmra.mxu0 %v430
        %v1274 = vpop.f32.mrf.mxu0
        %v1275 = vadd.f32 %v1210, %v1274
        %1276 = vmatmul.f32.gmra.mxu0 %v440
        %v1277 = vpop.f32.mrf.mxu0
        %v1278 = vadd.f32 %v1213, %v1277
        %1279 = vmatmul.f32.gmra.mxu0 %v450
        %v1280 = vpop.f32.mrf.mxu0
        %v1281 = vadd.f32 %v1216, %v1280
        %1282 = vmatmul.f32.gmra.mxu0 %v460
        %v1283 = vpop.f32.mrf.mxu0
        %v1284 = vadd.f32 %v1219, %v1283
        %1285 = vmatmul.f32.gmra.mxu0 %v470
        %v1286 = vpop.f32.mrf.mxu0
        %v1287 = vadd.f32 %v1222, %v1286
        %1288 = vmatmul.f32.gmra.mxu0 %v480
        %v1289 = vpop.f32.mrf.mxu0
        %v1290 = vadd.f32 %v1225, %v1289
        %1291 = vmatmul.f32.gmra.mxu0 %v490
        %v1292 = vpop.f32.mrf.mxu0
        %v1293 = vadd.f32 %v1228, %v1292
        %1294 = vmatmul.f32.gmra.mxu0 %v500
        %v1295 = vpop.f32.mrf.mxu0
        %v1296 = vadd.f32 %v1231, %v1295
        %1297 = vdwg.mxu0
        %1298 = vmatpush.msra.mxu0 %v697
        %1299 = vmatpush.msra.mxu0 %v693
        %1300 = vmatpush.msra.mxu0 %v689
        %1301 = vmatpush.msra.mxu0 %v685
        %1302 = vmatpush.msra.mxu0 %v681
        %1303 = vmatpush.msra.mxu0 %v677
        %1304 = vmatpush.msra.mxu0 %v673
        %1305 = vmatpush.msra.mxu0 %v669
        %1306 = vmatpush.msra.mxu0 %v665
        %1307 = vmatpush.msra.mxu0 %v661
        %1308 = vmatpush.msra.mxu0 %v657
        %1309 = vmatpush.msra.mxu0 %v653
        %1310 = vmatpush.msra.mxu0 %v649
        %1311 = vmatpush.msra.mxu0 %v645
        %1312 = vmatpush.msra.mxu0 %v641
        %1313 = vmatpush.msra.mxu0 %v637
        %1314 = vmatmul.f32.gmra.mxu0 %v351
        %v1315 = vpop.f32.mrf.mxu0
        %v1316 = vadd.f32 %v1251, %v1315
        %1317 = vmatmul.f32.gmra.mxu0 %v361
        %v1318 = vpop.f32.mrf.mxu0
        %v1319 = vadd.f32 %v1254, %v1318
        %1320 = vmatmul.f32.gmra.mxu0 %v371
        %v1321 = vpop.f32.mrf.mxu0
        %v1322 = vadd.f32 %v1257, %v1321
        %1323 = vmatmul.f32.gmra.mxu0 %v381
        %v1324 = vpop.f32.mrf.mxu0
        %v1325 = vadd.f32 %v1260, %v1324
        %1326 = vmatmul.f32.gmra.mxu0 %v391
        %v1327 = vpop.f32.mrf.mxu0
        %v1328 = vadd.f32 %v1263, %v1327
        %1329 = vmatmul.f32.gmra.mxu0 %v401
        %v1330 = vpop.f32.mrf.mxu0
        %v1331 = vadd.f32 %v1266, %v1330
        %1332 = vmatmul.f32.gmra.mxu0 %v411
        %v1333 = vpop.f32.mrf.mxu0
        %v1334 = vadd.f32 %v1269, %v1333
        %1335 = vmatmul.f32.gmra.mxu0 %v421
        %v1336 = vpop.f32.mrf.mxu0
        %v1337 = vadd.f32 %v1272, %v1336
        %1338 = vmatmul.f32.gmra.mxu0 %v431
        %v1339 = vpop.f32.mrf.mxu0
        %v1340 = vadd.f32 %v1275, %v1339
        %1341 = vmatmul.f32.gmra.mxu0 %v441
        %v1342 = vpop.f32.mrf.mxu0
        %v1343 = vadd.f32 %v1278, %v1342
        %1344 = vmatmul.f32.gmra.mxu0 %v451
        %v1345 = vpop.f32.mrf.mxu0
        %v1346 = vadd.f32 %v1281, %v1345
        %1347 = vmatmul.f32.gmra.mxu0 %v461
        %v1348 = vpop.f32.mrf.mxu0
        %v1349 = vadd.f32 %v1284, %v1348
        %1350 = vmatmul.f32.gmra.mxu0 %v471
        %v1351 = vpop.f32.mrf.mxu0
        %v1352 = vadd.f32 %v1287, %v1351
        %1353 = vmatmul.f32.gmra.mxu0 %v481
        %v1354 = vpop.f32.mrf.mxu0
        %v1355 = vadd.f32 %v1290, %v1354
        %1356 = vmatmul.f32.gmra.mxu0 %v491
        %v1357 = vpop.f32.mrf.mxu0
        %v1358 = vadd.f32 %v1293, %v1357
        %1359 = vmatmul.f32.gmra.mxu0 %v501
        %v1360 = vpop.f32.mrf.mxu0
        %v1361 = vadd.f32 %v1296, %v1360
        %1362 = vdwg.mxu0
        %1363 = vmatpush.msra.mxu0 %v761
        %1364 = vmatpush.msra.mxu0 %v757
        %1365 = vmatpush.msra.mxu0 %v753
        %1366 = vmatpush.msra.mxu0 %v749
        %1367 = vmatpush.msra.mxu0 %v745
        %1368 = vmatpush.msra.mxu0 %v741
        %1369 = vmatpush.msra.mxu0 %v737
        %1370 = vmatpush.msra.mxu0 %v733
        %1371 = vmatpush.msra.mxu0 %v729
        %1372 = vmatpush.msra.mxu0 %v725
        %1373 = vmatpush.msra.mxu0 %v721
        %1374 = vmatpush.msra.mxu0 %v717
        %1375 = vmatpush.msra.mxu0 %v713
        %1376 = vmatpush.msra.mxu0 %v709
        %1377 = vmatpush.msra.mxu0 %v705
        %1378 = vmatpush.msra.mxu0 %v701
        %1379 = vmatmul.f32.gmra.mxu0 %v352
        %v1380 = vpop.f32.mrf.mxu0
        %v1381 = vadd.f32 %v1316, %v1380
        %1382 = vmatmul.f32.gmra.mxu0 %v362
        %v1383 = vpop.f32.mrf.mxu0
        %v1384 = vadd.f32 %v1319, %v1383
        %1385 = vmatmul.f32.gmra.mxu0 %v372
        %v1386 = vpop.f32.mrf.mxu0
        %v1387 = vadd.f32 %v1322, %v1386
        %1388 = vmatmul.f32.gmra.mxu0 %v382
        %v1389 = vpop.f32.mrf.mxu0
        %v1390 = vadd.f32 %v1325, %v1389
        %1391 = vmatmul.f32.gmra.mxu0 %v392
        %v1392 = vpop.f32.mrf.mxu0
        %v1393 = vadd.f32 %v1328, %v1392
        %1394 = vmatmul.f32.gmra.mxu0 %v402
        %v1395 = vpop.f32.mrf.mxu0
        %v1396 = vadd.f32 %v1331, %v1395
        %1397 = vmatmul.f32.gmra.mxu0 %v412
        %v1398 = vpop.f32.mrf.mxu0
        %v1399 = vadd.f32 %v1334, %v1398
        %1400 = vmatmul.f32.gmra.mxu0 %v422
        %v1401 = vpop.f32.mrf.mxu0
        %v1402 = vadd.f32 %v1337, %v1401
        %1403 = vmatmul.f32.gmra.mxu0 %v432
        %v1404 = vpop.f32.mrf.mxu0
        %v1405 = vadd.f32 %v1340, %v1404
        %1406 = vmatmul.f32.gmra.mxu0 %v442
        %v1407 = vpop.f32.mrf.mxu0
        %v1408 = vadd.f32 %v1343, %v1407
        %1409 = vmatmul.f32.gmra.mxu0 %v452
        %v1410 = vpop.f32.mrf.mxu0
        %v1411 = vadd.f32 %v1346, %v1410
        %1412 = vmatmul.f32.gmra.mxu0 %v462
        %v1413 = vpop.f32.mrf.mxu0
        %v1414 = vadd.f32 %v1349, %v1413
        %1415 = vmatmul.f32.gmra.mxu0 %v472
        %v1416 = vpop.f32.mrf.mxu0
        %v1417 = vadd.f32 %v1352, %v1416
        %1418 = vmatmul.f32.gmra.mxu0 %v482
        %v1419 = vpop.f32.mrf.mxu0
        %v1420 = vadd.f32 %v1355, %v1419
        %1421 = vmatmul.f32.gmra.mxu0 %v492
        %v1422 = vpop.f32.mrf.mxu0
        %v1423 = vadd.f32 %v1358, %v1422
        %1424 = vmatmul.f32.gmra.mxu0 %v502
        %v1425 = vpop.f32.mrf.mxu0
        %v1426 = vadd.f32 %v1361, %v1425
        %1427 = vdwg.mxu0
        %1428 = vmatpush.msra.mxu0 %v825
        %1429 = vmatpush.msra.mxu0 %v821
        %1430 = vmatpush.msra.mxu0 %v817
        %1431 = vmatpush.msra.mxu0 %v813
        %1432 = vmatpush.msra.mxu0 %v809
        %1433 = vmatpush.msra.mxu0 %v805
        %1434 = vmatpush.msra.mxu0 %v801
        %1435 = vmatpush.msra.mxu0 %v797
        %1436 = vmatpush.msra.mxu0 %v793
        %1437 = vmatpush.msra.mxu0 %v789
        %1438 = vmatpush.msra.mxu0 %v785
        %1439 = vmatpush.msra.mxu0 %v781
        %1440 = vmatpush.msra.mxu0 %v777
        %1441 = vmatpush.msra.mxu0 %v773
        %1442 = vmatpush.msra.mxu0 %v769
        %1443 = vmatpush.msra.mxu0 %v765
        %1444 = vmatmul.f32.gmra.mxu0 %v353
        %v1445 = vpop.f32.mrf.mxu0
        %v1446 = vadd.f32 %v1381, %v1445
        %1447 = vmatmul.f32.gmra.mxu0 %v363
        %v1448 = vpop.f32.mrf.mxu0
        %v1449 = vadd.f32 %v1384, %v1448
        %1450 = vmatmul.f32.gmra.mxu0 %v373
        %v1451 = vpop.f32.mrf.mxu0
        %v1452 = vadd.f32 %v1387, %v1451
        %1453 = vmatmul.f32.gmra.mxu0 %v383
        %v1454 = vpop.f32.mrf.mxu0
        %v1455 = vadd.f32 %v1390, %v1454
        %1456 = vmatmul.f32.gmra.mxu0 %v393
        %v1457 = vpop.f32.mrf.mxu0
        %v1458 = vadd.f32 %v1393, %v1457
        %1459 = vmatmul.f32.gmra.mxu0 %v403
        %v1460 = vpop.f32.mrf.mxu0
        %v1461 = vadd.f32 %v1396, %v1460
        %1462 = vmatmul.f32.gmra.mxu0 %v413
        %v1463 = vpop.f32.mrf.mxu0
        %v1464 = vadd.f32 %v1399, %v1463
        %1465 = vmatmul.f32.gmra.mxu0 %v423
        %v1466 = vpop.f32.mrf.mxu0
        %v1467 = vadd.f32 %v1402, %v1466
        %1468 = vmatmul.f32.gmra.mxu0 %v433
        %v1469 = vpop.f32.mrf.mxu0
        %v1470 = vadd.f32 %v1405, %v1469
        %1471 = vmatmul.f32.gmra.mxu0 %v443
        %v1472 = vpop.f32.mrf.mxu0
        %v1473 = vadd.f32 %v1408, %v1472
        %1474 = vmatmul.f32.gmra.mxu0 %v453
        %v1475 = vpop.f32.mrf.mxu0
        %v1476 = vadd.f32 %v1411, %v1475
        %1477 = vmatmul.f32.gmra.mxu0 %v463
        %v1478 = vpop.f32.mrf.mxu0
        %v1479 = vadd.f32 %v1414, %v1478
        %1480 = vmatmul.f32.gmra.mxu0 %v473
        %v1481 = vpop.f32.mrf.mxu0
        %v1482 = vadd.f32 %v1417, %v1481
        %1483 = vmatmul.f32.gmra.mxu0 %v483
        %v1484 = vpop.f32.mrf.mxu0
        %v1485 = vadd.f32 %v1420, %v1484
        %1486 = vmatmul.f32.gmra.mxu0 %v493
        %v1487 = vpop.f32.mrf.mxu0
        %v1488 = vadd.f32 %v1423, %v1487
        %1489 = vmatmul.f32.gmra.mxu0 %v503
        %v1490 = vpop.f32.mrf.mxu0
        %v1491 = vadd.f32 %v1426, %v1490
        %1492 = vdwg.mxu0
        %1493 = vmatpush.msra.mxu0 %v889
        %1494 = vmatpush.msra.mxu0 %v885
        %1495 = vmatpush.msra.mxu0 %v881
        %1496 = vmatpush.msra.mxu0 %v877
        %1497 = vmatpush.msra.mxu0 %v873
        %1498 = vmatpush.msra.mxu0 %v869
        %1499 = vmatpush.msra.mxu0 %v865
        %1500 = vmatpush.msra.mxu0 %v861
        %1501 = vmatpush.msra.mxu0 %v857
        %1502 = vmatpush.msra.mxu0 %v853
        %1503 = vmatpush.msra.mxu0 %v849
        %1504 = vmatpush.msra.mxu0 %v845
        %1505 = vmatpush.msra.mxu0 %v841
        %1506 = vmatpush.msra.mxu0 %v837
        %1507 = vmatpush.msra.mxu0 %v833
        %1508 = vmatpush.msra.mxu0 %v829
        %1509 = vmatmul.f32.gmra.mxu0 %v354
        %v1510 = vpop.f32.mrf.mxu0
        %v1511 = vadd.f32 %v1446, %v1510
        %1512 = vmatmul.f32.gmra.mxu0 %v364
        %v1513 = vpop.f32.mrf.mxu0
        %v1514 = vadd.f32 %v1449, %v1513
        %1515 = vmatmul.f32.gmra.mxu0 %v374
        %v1516 = vpop.f32.mrf.mxu0
        %v1517 = vadd.f32 %v1452, %v1516
        %1518 = vmatmul.f32.gmra.mxu0 %v384
        %v1519 = vpop.f32.mrf.mxu0
        %v1520 = vadd.f32 %v1455, %v1519
        %1521 = vmatmul.f32.gmra.mxu0 %v394
        %v1522 = vpop.f32.mrf.mxu0
        %v1523 = vadd.f32 %v1458, %v1522
        %1524 = vmatmul.f32.gmra.mxu0 %v404
        %v1525 = vpop.f32.mrf.mxu0
        %v1526 = vadd.f32 %v1461, %v1525
        %1527 = vmatmul.f32.gmra.mxu0 %v414
        %v1528 = vpop.f32.mrf.mxu0
        %v1529 = vadd.f32 %v1464, %v1528
        %1530 = vmatmul.f32.gmra.mxu0 %v424
        %v1531 = vpop.f32.mrf.mxu0
        %v1532 = vadd.f32 %v1467, %v1531
        %1533 = vmatmul.f32.gmra.mxu0 %v434
        %v1534 = vpop.f32.mrf.mxu0
        %v1535 = vadd.f32 %v1470, %v1534
        %1536 = vmatmul.f32.gmra.mxu0 %v444
        %v1537 = vpop.f32.mrf.mxu0
        %v1538 = vadd.f32 %v1473, %v1537
        %1539 = vmatmul.f32.gmra.mxu0 %v454
        %v1540 = vpop.f32.mrf.mxu0
        %v1541 = vadd.f32 %v1476, %v1540
        %1542 = vmatmul.f32.gmra.mxu0 %v464
        %v1543 = vpop.f32.mrf.mxu0
        %v1544 = vadd.f32 %v1479, %v1543
        %1545 = vmatmul.f32.gmra.mxu0 %v474
        %v1546 = vpop.f32.mrf.mxu0
        %v1547 = vadd.f32 %v1482, %v1546
        %1548 = vmatmul.f32.gmra.mxu0 %v484
        %v1549 = vpop.f32.mrf.mxu0
        %v1550 = vadd.f32 %v1485, %v1549
        %1551 = vmatmul.f32.gmra.mxu0 %v494
        %v1552 = vpop.f32.mrf.mxu0
        %v1553 = vadd.f32 %v1488, %v1552
        %1554 = vmatmul.f32.gmra.mxu0 %v504
        %v1555 = vpop.f32.mrf.mxu0
        %v1556 = vadd.f32 %v1491, %v1555
        %1557 = vdwg.mxu0
        %1558 = vmatpush.msra.mxu0 %v953
        %1559 = vmatpush.msra.mxu0 %v949
        %1560 = vmatpush.msra.mxu0 %v945
        %1561 = vmatpush.msra.mxu0 %v941
        %1562 = vmatpush.msra.mxu0 %v937
        %1563 = vmatpush.msra.mxu0 %v933
        %1564 = vmatpush.msra.mxu0 %v929
        %1565 = vmatpush.msra.mxu0 %v925
        %1566 = vmatpush.msra.mxu0 %v921
        %1567 = vmatpush.msra.mxu0 %v917
        %1568 = vmatpush.msra.mxu0 %v913
        %1569 = vmatpush.msra.mxu0 %v909
        %1570 = vmatpush.msra.mxu0 %v905
        %1571 = vmatpush.msra.mxu0 %v901
        %1572 = vmatpush.msra.mxu0 %v897
        %1573 = vmatpush.msra.mxu0 %v893
        %1574 = vmatmul.f32.gmra.mxu0 %v355
        %v1575 = vpop.f32.mrf.mxu0
        %v1576 = vadd.f32 %v1511, %v1575
        %1577 = vmatmul.f32.gmra.mxu0 %v365
        %v1578 = vpop.f32.mrf.mxu0
        %v1579 = vadd.f32 %v1514, %v1578
        %1580 = vmatmul.f32.gmra.mxu0 %v375
        %v1581 = vpop.f32.mrf.mxu0
        %v1582 = vadd.f32 %v1517, %v1581
        %1583 = vmatmul.f32.gmra.mxu0 %v385
        %v1584 = vpop.f32.mrf.mxu0
        %v1585 = vadd.f32 %v1520, %v1584
        %1586 = vmatmul.f32.gmra.mxu0 %v395
        %v1587 = vpop.f32.mrf.mxu0
        %v1588 = vadd.f32 %v1523, %v1587
        %1589 = vmatmul.f32.gmra.mxu0 %v405
        %v1590 = vpop.f32.mrf.mxu0
        %v1591 = vadd.f32 %v1526, %v1590
        %1592 = vmatmul.f32.gmra.mxu0 %v415
        %v1593 = vpop.f32.mrf.mxu0
        %v1594 = vadd.f32 %v1529, %v1593
        %1595 = vmatmul.f32.gmra.mxu0 %v425
        %v1596 = vpop.f32.mrf.mxu0
        %v1597 = vadd.f32 %v1532, %v1596
        %1598 = vmatmul.f32.gmra.mxu0 %v435
        %v1599 = vpop.f32.mrf.mxu0
        %v1600 = vadd.f32 %v1535, %v1599
        %1601 = vmatmul.f32.gmra.mxu0 %v445
        %v1602 = vpop.f32.mrf.mxu0
        %v1603 = vadd.f32 %v1538, %v1602
        %1604 = vmatmul.f32.gmra.mxu0 %v455
        %v1605 = vpop.f32.mrf.mxu0
        %v1606 = vadd.f32 %v1541, %v1605
        %1607 = vmatmul.f32.gmra.mxu0 %v465
        %v1608 = vpop.f32.mrf.mxu0
        %v1609 = vadd.f32 %v1544, %v1608
        %1610 = vmatmul.f32.gmra.mxu0 %v475
        %v1611 = vpop.f32.mrf.mxu0
        %v1612 = vadd.f32 %v1547, %v1611
        %1613 = vmatmul.f32.gmra.mxu0 %v485
        %v1614 = vpop.f32.mrf.mxu0
        %v1615 = vadd.f32 %v1550, %v1614
        %1616 = vmatmul.f32.gmra.mxu0 %v495
        %v1617 = vpop.f32.mrf.mxu0
        %v1618 = vadd.f32 %v1553, %v1617
        %1619 = vmatmul.f32.gmra.mxu0 %v505
        %v1620 = vpop.f32.mrf.mxu0
        %v1621 = vadd.f32 %v1556, %v1620
        %1622 = vdwg.mxu0
        %1623 = vmatpush.msra.mxu0 %v1017
        %1624 = vmatpush.msra.mxu0 %v1013
        %1625 = vmatpush.msra.mxu0 %v1009
        %1626 = vmatpush.msra.mxu0 %v1005
        %1627 = vmatpush.msra.mxu0 %v1001
        %1628 = vmatpush.msra.mxu0 %v997
        %1629 = vmatpush.msra.mxu0 %v993
        %1630 = vmatpush.msra.mxu0 %v989
        %1631 = vmatpush.msra.mxu0 %v985
        %1632 = vmatpush.msra.mxu0 %v981
        %1633 = vmatpush.msra.mxu0 %v977
        %1634 = vmatpush.msra.mxu0 %v973
        %1635 = vmatpush.msra.mxu0 %v969
        %1636 = vmatpush.msra.mxu0 %v965
        %1637 = vmatpush.msra.mxu0 %v961
        %1638 = vmatpush.msra.mxu0 %v957
        %1639 = vmatmul.f32.gmra.mxu0 %v356
        %v1640 = vpop.f32.mrf.mxu0
        %v1641 = vadd.f32 %v1576, %v1640
        %1642 = vmatmul.f32.gmra.mxu0 %v366
        %v1643 = vpop.f32.mrf.mxu0
        %v1644 = vadd.f32 %v1579, %v1643
        %1645 = vmatmul.f32.gmra.mxu0 %v376
        %v1646 = vpop.f32.mrf.mxu0
        %v1647 = vadd.f32 %v1582, %v1646
        %1648 = vmatmul.f32.gmra.mxu0 %v386
        %v1649 = vpop.f32.mrf.mxu0
        %v1650 = vadd.f32 %v1585, %v1649
        %1651 = vmatmul.f32.gmra.mxu0 %v396
        %v1652 = vpop.f32.mrf.mxu0
        %v1653 = vadd.f32 %v1588, %v1652
        %1654 = vmatmul.f32.gmra.mxu0 %v406
        %v1655 = vpop.f32.mrf.mxu0
        %v1656 = vadd.f32 %v1591, %v1655
        %1657 = vmatmul.f32.gmra.mxu0 %v416
        %v1658 = vpop.f32.mrf.mxu0
        %v1659 = vadd.f32 %v1594, %v1658
        %1660 = vmatmul.f32.gmra.mxu0 %v426
        %v1661 = vpop.f32.mrf.mxu0
        %v1662 = vadd.f32 %v1597, %v1661
        %1663 = vmatmul.f32.gmra.mxu0 %v436
        %v1664 = vpop.f32.mrf.mxu0
        %v1665 = vadd.f32 %v1600, %v1664
        %1666 = vmatmul.f32.gmra.mxu0 %v446
        %v1667 = vpop.f32.mrf.mxu0
        %v1668 = vadd.f32 %v1603, %v1667
        %1669 = vmatmul.f32.gmra.mxu0 %v456
        %v1670 = vpop.f32.mrf.mxu0
        %v1671 = vadd.f32 %v1606, %v1670
        %1672 = vmatmul.f32.gmra.mxu0 %v466
        %v1673 = vpop.f32.mrf.mxu0
        %v1674 = vadd.f32 %v1609, %v1673
        %1675 = vmatmul.f32.gmra.mxu0 %v476
        %v1676 = vpop.f32.mrf.mxu0
        %v1677 = vadd.f32 %v1612, %v1676
        %1678 = vmatmul.f32.gmra.mxu0 %v486
        %v1679 = vpop.f32.mrf.mxu0
        %v1680 = vadd.f32 %v1615, %v1679
        %1681 = vmatmul.f32.gmra.mxu0 %v496
        %v1682 = vpop.f32.mrf.mxu0
        %v1683 = vadd.f32 %v1618, %v1682
        %1684 = vmatmul.f32.gmra.mxu0 %v506
        %v1685 = vpop.f32.mrf.mxu0
        %v1686 = vadd.f32 %v1621, %v1685
        %1687 = vdwg.mxu0
        %1688 = vmatpush.msra.mxu0 %v1081
        %1689 = vmatpush.msra.mxu0 %v1077
        %1690 = vmatpush.msra.mxu0 %v1073
        %1691 = vmatpush.msra.mxu0 %v1069
        %1692 = vmatpush.msra.mxu0 %v1065
        %1693 = vmatpush.msra.mxu0 %v1061
        %1694 = vmatpush.msra.mxu0 %v1057
        %1695 = vmatpush.msra.mxu0 %v1053
        %1696 = vmatpush.msra.mxu0 %v1049
        %1697 = vmatpush.msra.mxu0 %v1045
        %1698 = vmatpush.msra.mxu0 %v1041
        %1699 = vmatpush.msra.mxu0 %v1037
        %1700 = vmatpush.msra.mxu0 %v1033
        %1701 = vmatpush.msra.mxu0 %v1029
        %1702 = vmatpush.msra.mxu0 %v1025
        %1703 = vmatpush.msra.mxu0 %v1021
        %1704 = vmatmul.f32.gmra.mxu0 %v357
        %v1705 = vpop.f32.mrf.mxu0
        %v1706 = vadd.f32 %v1641, %v1705
        %1707 = vmatmul.f32.gmra.mxu0 %v367
        %v1708 = vpop.f32.mrf.mxu0
        %v1709 = vadd.f32 %v1644, %v1708
        %1710 = vmatmul.f32.gmra.mxu0 %v377
        %v1711 = vpop.f32.mrf.mxu0
        %v1712 = vadd.f32 %v1647, %v1711
        %1713 = vmatmul.f32.gmra.mxu0 %v387
        %v1714 = vpop.f32.mrf.mxu0
        %v1715 = vadd.f32 %v1650, %v1714
        %1716 = vmatmul.f32.gmra.mxu0 %v397
        %v1717 = vpop.f32.mrf.mxu0
        %v1718 = vadd.f32 %v1653, %v1717
        %1719 = vmatmul.f32.gmra.mxu0 %v407
        %v1720 = vpop.f32.mrf.mxu0
        %v1721 = vadd.f32 %v1656, %v1720
        %1722 = vmatmul.f32.gmra.mxu0 %v417
        %v1723 = vpop.f32.mrf.mxu0
        %v1724 = vadd.f32 %v1659, %v1723
        %1725 = vmatmul.f32.gmra.mxu0 %v427
        %v1726 = vpop.f32.mrf.mxu0
        %v1727 = vadd.f32 %v1662, %v1726
        %1728 = vmatmul.f32.gmra.mxu0 %v437
        %v1729 = vpop.f32.mrf.mxu0
        %v1730 = vadd.f32 %v1665, %v1729
        %1731 = vmatmul.f32.gmra.mxu0 %v447
        %v1732 = vpop.f32.mrf.mxu0
        %v1733 = vadd.f32 %v1668, %v1732
        %1734 = vmatmul.f32.gmra.mxu0 %v457
        %v1735 = vpop.f32.mrf.mxu0
        %v1736 = vadd.f32 %v1671, %v1735
        %1737 = vmatmul.f32.gmra.mxu0 %v467
        %v1738 = vpop.f32.mrf.mxu0
        %v1739 = vadd.f32 %v1674, %v1738
        %1740 = vmatmul.f32.gmra.mxu0 %v477
        %v1741 = vpop.f32.mrf.mxu0
        %v1742 = vadd.f32 %v1677, %v1741
        %1743 = vmatmul.f32.gmra.mxu0 %v487
        %v1744 = vpop.f32.mrf.mxu0
        %v1745 = vadd.f32 %v1680, %v1744
        %1746 = vmatmul.f32.gmra.mxu0 %v497
        %v1747 = vpop.f32.mrf.mxu0
        %v1748 = vadd.f32 %v1683, %v1747
        %1749 = vmatmul.f32.gmra.mxu0 %v507
        %v1750 = vpop.f32.mrf.mxu0
        %v1751 = vadd.f32 %v1686, %v1750
        %1752 = vdwg.mxu0
        %1753 = vmatpush.msra.mxu0 0.0
        %1754 = vmatpush.msra.mxu0 0.0
        %1755 = vmatpush.msra.mxu0 0.0
        %1756 = vmatpush.msra.mxu0 0.0
        %1757 = vmatpush.msra.mxu0 0.0
        %1758 = vmatpush.msra.mxu0 0.0
        %1759 = vmatpush.msra.mxu0 0.0
        %1760 = vmatpush.msra.mxu0 0.0
        %1761 = vmatpush.msra.mxu0 0.0
        %1762 = vmatpush.msra.mxu0 0.0
        %1763 = vmatpush.msra.mxu0 %v1105
        %1764 = vmatpush.msra.mxu0 %v1101
        %1765 = vmatpush.msra.mxu0 %v1097
        %1766 = vmatpush.msra.mxu0 %v1093
        %1767 = vmatpush.msra.mxu0 %v1089
        %1768 = vmatpush.msra.mxu0 %v1085
        %1769 = vmatmul.f32.gmra.mxu0 %v1121
        %v1770 = vpop.f32.mrf.mxu0
        %v1771 = vadd.f32 %v1706, %v1770
        %1772 = vmatmul.f32.gmra.mxu0 %v1124
        %v1773 = vpop.f32.mrf.mxu0
        %v1774 = vadd.f32 %v1709, %v1773
        %1775 = vmatmul.f32.gmra.mxu0 %v1127
        %v1776 = vpop.f32.mrf.mxu0
        %v1777 = vadd.f32 %v1712, %v1776
        %1778 = vmatmul.f32.gmra.mxu0 %v1130
        %v1779 = vpop.f32.mrf.mxu0
        %v1780 = vadd.f32 %v1715, %v1779
        %1781 = vmatmul.f32.gmra.mxu0 %v1133
        %v1782 = vpop.f32.mrf.mxu0
        %v1783 = vadd.f32 %v1718, %v1782
        %1784 = vmatmul.f32.gmra.mxu0 %v1136
        %v1785 = vpop.f32.mrf.mxu0
        %v1786 = vadd.f32 %v1721, %v1785
        %1787 = vmatmul.f32.gmra.mxu0 %v1139
        %v1788 = vpop.f32.mrf.mxu0
        %v1789 = vadd.f32 %v1724, %v1788
        %1790 = vmatmul.f32.gmra.mxu0 %v1142
        %v1791 = vpop.f32.mrf.mxu0
        %v1792 = vadd.f32 %v1727, %v1791
        %1793 = vmatmul.f32.gmra.mxu0 %v1145
        %v1794 = vpop.f32.mrf.mxu0
        %v1795 = vadd.f32 %v1730, %v1794
        %1796 = vmatmul.f32.gmra.mxu0 %v1148
        %v1797 = vpop.f32.mrf.mxu0
        %v1798 = vadd.f32 %v1733, %v1797
        %1799 = vmatmul.f32.gmra.mxu0 %v1151
        %v1800 = vpop.f32.mrf.mxu0
        %v1801 = vadd.f32 %v1736, %v1800
        %1802 = vmatmul.f32.gmra.mxu0 %v1154
        %v1803 = vpop.f32.mrf.mxu0
        %v1804 = vadd.f32 %v1739, %v1803
        %1805 = vmatmul.f32.gmra.mxu0 %v1157
        %v1806 = vpop.f32.mrf.mxu0
        %v1807 = vadd.f32 %v1742, %v1806
        %1808 = vmatmul.f32.gmra.mxu0 %v1160
        %v1809 = vpop.f32.mrf.mxu0
        %v1810 = vadd.f32 %v1745, %v1809
        %1811 = vmatmul.f32.gmra.mxu0 %v1163
        %v1812 = vpop.f32.mrf.mxu0
        %v1813 = vadd.f32 %v1748, %v1812
        %1814 = vmatmul.f32.gmra.mxu0 %v1166
        %v1815 = vpop.f32.mrf.mxu0
        %v1816 = vadd.f32 %v1751, %v1815
        %1817 = vdwg.mxu0
        %1818 = vmatpush.msra.mxu0 %v570
        %1819 = vmatpush.msra.mxu0 %v566
        %1820 = vmatpush.msra.mxu0 %v562
        %1821 = vmatpush.msra.mxu0 %v558
        %1822 = vmatpush.msra.mxu0 %v554
        %1823 = vmatpush.msra.mxu0 %v550
        %1824 = vmatpush.msra.mxu0 %v546
        %1825 = vmatpush.msra.mxu0 %v542
        %1826 = vmatpush.msra.mxu0 %v538
        %1827 = vmatpush.msra.mxu0 %v534
        %1828 = vmatpush.msra.mxu0 %v530
        %1829 = vmatpush.msra.mxu0 %v526
        %1830 = vmatpush.msra.mxu0 %v522
        %1831 = vmatpush.msra.mxu0 %v518
        %1832 = vmatpush.msra.mxu0 %v514
        %1833 = vmatpush.msra.mxu0 %v510
        %1834 = vmatmul.f32.gmra.mxu0 %v349
        %v1835 = vpop.f32.mrf.mxu0
        %v1836 = vadd.f32 %v1112, %v1835
        %1837 = vmatmul.f32.gmra.mxu0 %v359
        %v1838 = vpop.f32.mrf.mxu0
        %v1839 = vadd.f32 %v1112, %v1838
        %1840 = vmatmul.f32.gmra.mxu0 %v369
        %v1841 = vpop.f32.mrf.mxu0
        %v1842 = vadd.f32 %v1112, %v1841
        %1843 = vmatmul.f32.gmra.mxu0 %v379
        %v1844 = vpop.f32.mrf.mxu0
        %v1845 = vadd.f32 %v1112, %v1844
        %1846 = vmatmul.f32.gmra.mxu0 %v389
        %v1847 = vpop.f32.mrf.mxu0
        %v1848 = vadd.f32 %v1112, %v1847
        %1849 = vmatmul.f32.gmra.mxu0 %v399
        %v1850 = vpop.f32.mrf.mxu0
        %v1851 = vadd.f32 %v1112, %v1850
        %1852 = vmatmul.f32.gmra.mxu0 %v409
        %v1853 = vpop.f32.mrf.mxu0
        %v1854 = vadd.f32 %v1112, %v1853
        %1855 = vmatmul.f32.gmra.mxu0 %v419
        %v1856 = vpop.f32.mrf.mxu0
        %v1857 = vadd.f32 %v1112, %v1856
        %1858 = vmatmul.f32.gmra.mxu0 %v429
        %v1859 = vpop.f32.mrf.mxu0
        %v1860 = vadd.f32 %v1112, %v1859
        %1861 = vmatmul.f32.gmra.mxu0 %v439
        %v1862 = vpop.f32.mrf.mxu0
        %v1863 = vadd.f32 %v1112, %v1862
        %1864 = vmatmul.f32.gmra.mxu0 %v449
        %v1865 = vpop.f32.mrf.mxu0
        %v1866 = vadd.f32 %v1112, %v1865
        %1867 = vmatmul.f32.gmra.mxu0 %v459
        %v1868 = vpop.f32.mrf.mxu0
        %v1869 = vadd.f32 %v1112, %v1868
        %1870 = vmatmul.f32.gmra.mxu0 %v469
        %v1871 = vpop.f32.mrf.mxu0
        %v1872 = vadd.f32 %v1112, %v1871
        %1873 = vmatmul.f32.gmra.mxu0 %v479
        %v1874 = vpop.f32.mrf.mxu0
        %v1875 = vadd.f32 %v1112, %v1874
        %1876 = vmatmul.f32.gmra.mxu0 %v489
        %v1877 = vpop.f32.mrf.mxu0
        %v1878 = vadd.f32 %v1112, %v1877
        %1879 = vmatmul.f32.gmra.mxu0 %v499
        %v1880 = vpop.f32.mrf.mxu0
        %v1881 = vadd.f32 %v1112, %v1880
        %1882 = vdwg.mxu0
        %1883 = vmatpush.msra.mxu0 %v634
        %1884 = vmatpush.msra.mxu0 %v630
        %1885 = vmatpush.msra.mxu0 %v626
        %1886 = vmatpush.msra.mxu0 %v622
        %1887 = vmatpush.msra.mxu0 %v618
        %1888 = vmatpush.msra.mxu0 %v614
        %1889 = vmatpush.msra.mxu0 %v610
        %1890 = vmatpush.msra.mxu0 %v606
        %1891 = vmatpush.msra.mxu0 %v602
        %1892 = vmatpush.msra.mxu0 %v598
        %1893 = vmatpush.msra.mxu0 %v594
        %1894 = vmatpush.msra.mxu0 %v590
        %1895 = vmatpush.msra.mxu0 %v586
        %1896 = vmatpush.msra.mxu0 %v582
        %1897 = vmatpush.msra.mxu0 %v578
        %1898 = vmatpush.msra.mxu0 %v574
        %1899 = vmatmul.f32.gmra.mxu0 %v350
        %v1900 = vpop.f32.mrf.mxu0
        %v1901 = vadd.f32 %v1836, %v1900
        %1902 = vmatmul.f32.gmra.mxu0 %v360
        %v1903 = vpop.f32.mrf.mxu0
        %v1904 = vadd.f32 %v1839, %v1903
        %1905 = vmatmul.f32.gmra.mxu0 %v370
        %v1906 = vpop.f32.mrf.mxu0
        %v1907 = vadd.f32 %v1842, %v1906
        %1908 = vmatmul.f32.gmra.mxu0 %v380
        %v1909 = vpop.f32.mrf.mxu0
        %v1910 = vadd.f32 %v1845, %v1909
        %1911 = vmatmul.f32.gmra.mxu0 %v390
        %v1912 = vpop.f32.mrf.mxu0
        %v1913 = vadd.f32 %v1848, %v1912
        %1914 = vmatmul.f32.gmra.mxu0 %v400
        %v1915 = vpop.f32.mrf.mxu0
        %v1916 = vadd.f32 %v1851, %v1915
        %1917 = vmatmul.f32.gmra.mxu0 %v410
        %v1918 = vpop.f32.mrf.mxu0
        %v1919 = vadd.f32 %v1854, %v1918
        %1920 = vmatmul.f32.gmra.mxu0 %v420
        %v1921 = vpop.f32.mrf.mxu0
        %v1922 = vadd.f32 %v1857, %v1921
        %1923 = vmatmul.f32.gmra.mxu0 %v430
        %v1924 = vpop.f32.mrf.mxu0
        %v1925 = vadd.f32 %v1860, %v1924
        %1926 = vmatmul.f32.gmra.mxu0 %v440
        %v1927 = vpop.f32.mrf.mxu0
        %v1928 = vadd.f32 %v1863, %v1927
        %1929 = vmatmul.f32.gmra.mxu0 %v450
        %v1930 = vpop.f32.mrf.mxu0
        %v1931 = vadd.f32 %v1866, %v1930
        %1932 = vmatmul.f32.gmra.mxu0 %v460
        %v1933 = vpop.f32.mrf.mxu0
        %v1934 = vadd.f32 %v1869, %v1933
        %1935 = vmatmul.f32.gmra.mxu0 %v470
        %v1936 = vpop.f32.mrf.mxu0
        %v1937 = vadd.f32 %v1872, %v1936
        %1938 = vmatmul.f32.gmra.mxu0 %v480
        %v1939 = vpop.f32.mrf.mxu0
        %v1940 = vadd.f32 %v1875, %v1939
        %1941 = vmatmul.f32.gmra.mxu0 %v490
        %v1942 = vpop.f32.mrf.mxu0
        %v1943 = vadd.f32 %v1878, %v1942
        %1944 = vmatmul.f32.gmra.mxu0 %v500
        %v1945 = vpop.f32.mrf.mxu0
        %v1946 = vadd.f32 %v1881, %v1945
        %1947 = vdwg.mxu0
        %1948 = vmatpush.msra.mxu0 %v698
        %1949 = vmatpush.msra.mxu0 %v694
        %1950 = vmatpush.msra.mxu0 %v690
        %1951 = vmatpush.msra.mxu0 %v686
        %1952 = vmatpush.msra.mxu0 %v682
        %1953 = vmatpush.msra.mxu0 %v678
        %1954 = vmatpush.msra.mxu0 %v674
        %1955 = vmatpush.msra.mxu0 %v670
        %1956 = vmatpush.msra.mxu0 %v666
        %1957 = vmatpush.msra.mxu0 %v662
        %1958 = vmatpush.msra.mxu0 %v658
        %1959 = vmatpush.msra.mxu0 %v654
        %1960 = vmatpush.msra.mxu0 %v650
        %1961 = vmatpush.msra.mxu0 %v646
        %1962 = vmatpush.msra.mxu0 %v642
        %1963 = vmatpush.msra.mxu0 %v638
        %1964 = vmatmul.f32.gmra.mxu0 %v351
        %v1965 = vpop.f32.mrf.mxu0
        %v1966 = vadd.f32 %v1901, %v1965
        %1967 = vmatmul.f32.gmra.mxu0 %v361
        %v1968 = vpop.f32.mrf.mxu0
        %v1969 = vadd.f32 %v1904, %v1968
        %1970 = vmatmul.f32.gmra.mxu0 %v371
        %v1971 = vpop.f32.mrf.mxu0
        %v1972 = vadd.f32 %v1907, %v1971
        %1973 = vmatmul.f32.gmra.mxu0 %v381
        %v1974 = vpop.f32.mrf.mxu0
        %v1975 = vadd.f32 %v1910, %v1974
        %1976 = vmatmul.f32.gmra.mxu0 %v391
        %v1977 = vpop.f32.mrf.mxu0
        %v1978 = vadd.f32 %v1913, %v1977
        %1979 = vmatmul.f32.gmra.mxu0 %v401
        %v1980 = vpop.f32.mrf.mxu0
        %v1981 = vadd.f32 %v1916, %v1980
        %1982 = vmatmul.f32.gmra.mxu0 %v411
        %v1983 = vpop.f32.mrf.mxu0
        %v1984 = vadd.f32 %v1919, %v1983
        %1985 = vmatmul.f32.gmra.mxu0 %v421
        %v1986 = vpop.f32.mrf.mxu0
        %v1987 = vadd.f32 %v1922, %v1986
        %1988 = vmatmul.f32.gmra.mxu0 %v431
        %v1989 = vpop.f32.mrf.mxu0
        %v1990 = vadd.f32 %v1925, %v1989
        %1991 = vmatmul.f32.gmra.mxu0 %v441
        %v1992 = vpop.f32.mrf.mxu0
        %v1993 = vadd.f32 %v1928, %v1992
        %1994 = vmatmul.f32.gmra.mxu0 %v451
        %v1995 = vpop.f32.mrf.mxu0
        %v1996 = vadd.f32 %v1931, %v1995
        %1997 = vmatmul.f32.gmra.mxu0 %v461
        %v1998 = vpop.f32.mrf.mxu0
        %v1999 = vadd.f32 %v1934, %v1998
        %2000 = vmatmul.f32.gmra.mxu0 %v471
        %v2001 = vpop.f32.mrf.mxu0
        %v2002 = vadd.f32 %v1937, %v2001
        %2003 = vmatmul.f32.gmra.mxu0 %v481
        %v2004 = vpop.f32.mrf.mxu0
        %v2005 = vadd.f32 %v1940, %v2004
        %2006 = vmatmul.f32.gmra.mxu0 %v491
        %v2007 = vpop.f32.mrf.mxu0
        %v2008 = vadd.f32 %v1943, %v2007
        %2009 = vmatmul.f32.gmra.mxu0 %v501
        %v2010 = vpop.f32.mrf.mxu0
        %v2011 = vadd.f32 %v1946, %v2010
        %2012 = vdwg.mxu0
        %2013 = vmatpush.msra.mxu0 %v762
        %2014 = vmatpush.msra.mxu0 %v758
        %2015 = vmatpush.msra.mxu0 %v754
        %2016 = vmatpush.msra.mxu0 %v750
        %2017 = vmatpush.msra.mxu0 %v746
        %2018 = vmatpush.msra.mxu0 %v742
        %2019 = vmatpush.msra.mxu0 %v738
        %2020 = vmatpush.msra.mxu0 %v734
        %2021 = vmatpush.msra.mxu0 %v730
        %2022 = vmatpush.msra.mxu0 %v726
        %2023 = vmatpush.msra.mxu0 %v722
        %2024 = vmatpush.msra.mxu0 %v718
        %2025 = vmatpush.msra.mxu0 %v714
        %2026 = vmatpush.msra.mxu0 %v710
        %2027 = vmatpush.msra.mxu0 %v706
        %2028 = vmatpush.msra.mxu0 %v702
        %2029 = vmatmul.f32.gmra.mxu0 %v352
        %v2030 = vpop.f32.mrf.mxu0
        %v2031 = vadd.f32 %v1966, %v2030
        %2032 = vmatmul.f32.gmra.mxu0 %v362
        %v2033 = vpop.f32.mrf.mxu0
        %v2034 = vadd.f32 %v1969, %v2033
        %2035 = vmatmul.f32.gmra.mxu0 %v372
        %v2036 = vpop.f32.mrf.mxu0
        %v2037 = vadd.f32 %v1972, %v2036
        %2038 = vmatmul.f32.gmra.mxu0 %v382
        %v2039 = vpop.f32.mrf.mxu0
        %v2040 = vadd.f32 %v1975, %v2039
        %2041 = vmatmul.f32.gmra.mxu0 %v392
        %v2042 = vpop.f32.mrf.mxu0
        %v2043 = vadd.f32 %v1978, %v2042
        %2044 = vmatmul.f32.gmra.mxu0 %v402
        %v2045 = vpop.f32.mrf.mxu0
        %v2046 = vadd.f32 %v1981, %v2045
        %2047 = vmatmul.f32.gmra.mxu0 %v412
        %v2048 = vpop.f32.mrf.mxu0
        %v2049 = vadd.f32 %v1984, %v2048
        %2050 = vmatmul.f32.gmra.mxu0 %v422
        %v2051 = vpop.f32.mrf.mxu0
        %v2052 = vadd.f32 %v1987, %v2051
        %2053 = vmatmul.f32.gmra.mxu0 %v432
        %v2054 = vpop.f32.mrf.mxu0
        %v2055 = vadd.f32 %v1990, %v2054
        %2056 = vmatmul.f32.gmra.mxu0 %v442
        %v2057 = vpop.f32.mrf.mxu0
        %v2058 = vadd.f32 %v1993, %v2057
        %2059 = vmatmul.f32.gmra.mxu0 %v452
        %v2060 = vpop.f32.mrf.mxu0
        %v2061 = vadd.f32 %v1996, %v2060
        %2062 = vmatmul.f32.gmra.mxu0 %v462
        %v2063 = vpop.f32.mrf.mxu0
        %v2064 = vadd.f32 %v1999, %v2063
        %2065 = vmatmul.f32.gmra.mxu0 %v472
        %v2066 = vpop.f32.mrf.mxu0
        %v2067 = vadd.f32 %v2002, %v2066
        %2068 = vmatmul.f32.gmra.mxu0 %v482
        %v2069 = vpop.f32.mrf.mxu0
        %v2070 = vadd.f32 %v2005, %v2069
        %2071 = vmatmul.f32.gmra.mxu0 %v492
        %v2072 = vpop.f32.mrf.mxu0
        %v2073 = vadd.f32 %v2008, %v2072
        %2074 = vmatmul.f32.gmra.mxu0 %v502
        %v2075 = vpop.f32.mrf.mxu0
        %v2076 = vadd.f32 %v2011, %v2075
        %2077 = vdwg.mxu0
        %2078 = vmatpush.msra.mxu0 %v826
        %2079 = vmatpush.msra.mxu0 %v822
        %2080 = vmatpush.msra.mxu0 %v818
        %2081 = vmatpush.msra.mxu0 %v814
        %2082 = vmatpush.msra.mxu0 %v810
        %2083 = vmatpush.msra.mxu0 %v806
        %2084 = vmatpush.msra.mxu0 %v802
        %2085 = vmatpush.msra.mxu0 %v798
        %2086 = vmatpush.msra.mxu0 %v794
        %2087 = vmatpush.msra.mxu0 %v790
        %2088 = vmatpush.msra.mxu0 %v786
        %2089 = vmatpush.msra.mxu0 %v782
        %2090 = vmatpush.msra.mxu0 %v778
        %2091 = vmatpush.msra.mxu0 %v774
        %2092 = vmatpush.msra.mxu0 %v770
        %2093 = vmatpush.msra.mxu0 %v766
        %2094 = vmatmul.f32.gmra.mxu0 %v353
        %v2095 = vpop.f32.mrf.mxu0
        %v2096 = vadd.f32 %v2031, %v2095
        %2097 = vmatmul.f32.gmra.mxu0 %v363
        %v2098 = vpop.f32.mrf.mxu0
        %v2099 = vadd.f32 %v2034, %v2098
        %2100 = vmatmul.f32.gmra.mxu0 %v373
        %v2101 = vpop.f32.mrf.mxu0
        %v2102 = vadd.f32 %v2037, %v2101
        %2103 = vmatmul.f32.gmra.mxu0 %v383
        %v2104 = vpop.f32.mrf.mxu0
        %v2105 = vadd.f32 %v2040, %v2104
        %2106 = vmatmul.f32.gmra.mxu0 %v393
        %v2107 = vpop.f32.mrf.mxu0
        %v2108 = vadd.f32 %v2043, %v2107
        %2109 = vmatmul.f32.gmra.mxu0 %v403
        %v2110 = vpop.f32.mrf.mxu0
        %v2111 = vadd.f32 %v2046, %v2110
        %2112 = vmatmul.f32.gmra.mxu0 %v413
        %v2113 = vpop.f32.mrf.mxu0
        %v2114 = vadd.f32 %v2049, %v2113
        %2115 = vmatmul.f32.gmra.mxu0 %v423
        %v2116 = vpop.f32.mrf.mxu0
        %v2117 = vadd.f32 %v2052, %v2116
        %2118 = vmatmul.f32.gmra.mxu0 %v433
        %v2119 = vpop.f32.mrf.mxu0
        %v2120 = vadd.f32 %v2055, %v2119
        %2121 = vmatmul.f32.gmra.mxu0 %v443
        %v2122 = vpop.f32.mrf.mxu0
        %v2123 = vadd.f32 %v2058, %v2122
        %2124 = vmatmul.f32.gmra.mxu0 %v453
        %v2125 = vpop.f32.mrf.mxu0
        %v2126 = vadd.f32 %v2061, %v2125
        %2127 = vmatmul.f32.gmra.mxu0 %v463
        %v2128 = vpop.f32.mrf.mxu0
        %v2129 = vadd.f32 %v2064, %v2128
        %2130 = vmatmul.f32.gmra.mxu0 %v473
        %v2131 = vpop.f32.mrf.mxu0
        %v2132 = vadd.f32 %v2067, %v2131
        %2133 = vmatmul.f32.gmra.mxu0 %v483
        %v2134 = vpop.f32.mrf.mxu0
        %v2135 = vadd.f32 %v2070, %v2134
        %2136 = vmatmul.f32.gmra.mxu0 %v493
        %v2137 = vpop.f32.mrf.mxu0
        %v2138 = vadd.f32 %v2073, %v2137
        %2139 = vmatmul.f32.gmra.mxu0 %v503
        %v2140 = vpop.f32.mrf.mxu0
        %v2141 = vadd.f32 %v2076, %v2140
        %2142 = vdwg.mxu0
        %2143 = vmatpush.msra.mxu0 %v890
        %2144 = vmatpush.msra.mxu0 %v886
        %2145 = vmatpush.msra.mxu0 %v882
        %2146 = vmatpush.msra.mxu0 %v878
        %2147 = vmatpush.msra.mxu0 %v874
        %2148 = vmatpush.msra.mxu0 %v870
        %2149 = vmatpush.msra.mxu0 %v866
        %2150 = vmatpush.msra.mxu0 %v862
        %2151 = vmatpush.msra.mxu0 %v858
        %2152 = vmatpush.msra.mxu0 %v854
        %2153 = vmatpush.msra.mxu0 %v850
        %2154 = vmatpush.msra.mxu0 %v846
        %2155 = vmatpush.msra.mxu0 %v842
        %2156 = vmatpush.msra.mxu0 %v838
        %2157 = vmatpush.msra.mxu0 %v834
        %2158 = vmatpush.msra.mxu0 %v830
        %2159 = vmatmul.f32.gmra.mxu0 %v354
        %v2160 = vpop.f32.mrf.mxu0
        %v2161 = vadd.f32 %v2096, %v2160
        %2162 = vmatmul.f32.gmra.mxu0 %v364
        %v2163 = vpop.f32.mrf.mxu0
        %v2164 = vadd.f32 %v2099, %v2163
        %2165 = vmatmul.f32.gmra.mxu0 %v374
        %v2166 = vpop.f32.mrf.mxu0
        %v2167 = vadd.f32 %v2102, %v2166
        %2168 = vmatmul.f32.gmra.mxu0 %v384
        %v2169 = vpop.f32.mrf.mxu0
        %v2170 = vadd.f32 %v2105, %v2169
        %2171 = vmatmul.f32.gmra.mxu0 %v394
        %v2172 = vpop.f32.mrf.mxu0
        %v2173 = vadd.f32 %v2108, %v2172
        %2174 = vmatmul.f32.gmra.mxu0 %v404
        %v2175 = vpop.f32.mrf.mxu0
        %v2176 = vadd.f32 %v2111, %v2175
        %2177 = vmatmul.f32.gmra.mxu0 %v414
        %v2178 = vpop.f32.mrf.mxu0
        %v2179 = vadd.f32 %v2114, %v2178
        %2180 = vmatmul.f32.gmra.mxu0 %v424
        %v2181 = vpop.f32.mrf.mxu0
        %v2182 = vadd.f32 %v2117, %v2181
        %2183 = vmatmul.f32.gmra.mxu0 %v434
        %v2184 = vpop.f32.mrf.mxu0
        %v2185 = vadd.f32 %v2120, %v2184
        %2186 = vmatmul.f32.gmra.mxu0 %v444
        %v2187 = vpop.f32.mrf.mxu0
        %v2188 = vadd.f32 %v2123, %v2187
        %2189 = vmatmul.f32.gmra.mxu0 %v454
        %v2190 = vpop.f32.mrf.mxu0
        %v2191 = vadd.f32 %v2126, %v2190
        %2192 = vmatmul.f32.gmra.mxu0 %v464
        %v2193 = vpop.f32.mrf.mxu0
        %v2194 = vadd.f32 %v2129, %v2193
        %2195 = vmatmul.f32.gmra.mxu0 %v474
        %v2196 = vpop.f32.mrf.mxu0
        %v2197 = vadd.f32 %v2132, %v2196
        %2198 = vmatmul.f32.gmra.mxu0 %v484
        %v2199 = vpop.f32.mrf.mxu0
        %v2200 = vadd.f32 %v2135, %v2199
        %2201 = vmatmul.f32.gmra.mxu0 %v494
        %v2202 = vpop.f32.mrf.mxu0
        %v2203 = vadd.f32 %v2138, %v2202
        %2204 = vmatmul.f32.gmra.mxu0 %v504
        %v2205 = vpop.f32.mrf.mxu0
        %v2206 = vadd.f32 %v2141, %v2205
        %2207 = vdwg.mxu0
        %2208 = vmatpush.msra.mxu0 %v954
        %2209 = vmatpush.msra.mxu0 %v950
        %2210 = vmatpush.msra.mxu0 %v946
        %2211 = vmatpush.msra.mxu0 %v942
        %2212 = vmatpush.msra.mxu0 %v938
        %2213 = vmatpush.msra.mxu0 %v934
        %2214 = vmatpush.msra.mxu0 %v930
        %2215 = vmatpush.msra.mxu0 %v926
        %2216 = vmatpush.msra.mxu0 %v922
        %2217 = vmatpush.msra.mxu0 %v918
        %2218 = vmatpush.msra.mxu0 %v914
        %2219 = vmatpush.msra.mxu0 %v910
        %2220 = vmatpush.msra.mxu0 %v906
        %2221 = vmatpush.msra.mxu0 %v902
        %2222 = vmatpush.msra.mxu0 %v898
        %2223 = vmatpush.msra.mxu0 %v894
        %2224 = vmatmul.f32.gmra.mxu0 %v355
        %v2225 = vpop.f32.mrf.mxu0
        %v2226 = vadd.f32 %v2161, %v2225
        %2227 = vmatmul.f32.gmra.mxu0 %v365
        %v2228 = vpop.f32.mrf.mxu0
        %v2229 = vadd.f32 %v2164, %v2228
        %2230 = vmatmul.f32.gmra.mxu0 %v375
        %v2231 = vpop.f32.mrf.mxu0
        %v2232 = vadd.f32 %v2167, %v2231
        %2233 = vmatmul.f32.gmra.mxu0 %v385
        %v2234 = vpop.f32.mrf.mxu0
        %v2235 = vadd.f32 %v2170, %v2234
        %2236 = vmatmul.f32.gmra.mxu0 %v395
        %v2237 = vpop.f32.mrf.mxu0
        %v2238 = vadd.f32 %v2173, %v2237
        %2239 = vmatmul.f32.gmra.mxu0 %v405
        %v2240 = vpop.f32.mrf.mxu0
        %v2241 = vadd.f32 %v2176, %v2240
        %2242 = vmatmul.f32.gmra.mxu0 %v415
        %v2243 = vpop.f32.mrf.mxu0
        %v2244 = vadd.f32 %v2179, %v2243
        %2245 = vmatmul.f32.gmra.mxu0 %v425
        %v2246 = vpop.f32.mrf.mxu0
        %v2247 = vadd.f32 %v2182, %v2246
        %2248 = vmatmul.f32.gmra.mxu0 %v435
        %v2249 = vpop.f32.mrf.mxu0
        %v2250 = vadd.f32 %v2185, %v2249
        %2251 = vmatmul.f32.gmra.mxu0 %v445
        %v2252 = vpop.f32.mrf.mxu0
        %v2253 = vadd.f32 %v2188, %v2252
        %2254 = vmatmul.f32.gmra.mxu0 %v455
        %v2255 = vpop.f32.mrf.mxu0
        %v2256 = vadd.f32 %v2191, %v2255
        %2257 = vmatmul.f32.gmra.mxu0 %v465
        %v2258 = vpop.f32.mrf.mxu0
        %v2259 = vadd.f32 %v2194, %v2258
        %2260 = vmatmul.f32.gmra.mxu0 %v475
        %v2261 = vpop.f32.mrf.mxu0
        %v2262 = vadd.f32 %v2197, %v2261
        %2263 = vmatmul.f32.gmra.mxu0 %v485
        %v2264 = vpop.f32.mrf.mxu0
        %v2265 = vadd.f32 %v2200, %v2264
        %2266 = vmatmul.f32.gmra.mxu0 %v495
        %v2267 = vpop.f32.mrf.mxu0
        %v2268 = vadd.f32 %v2203, %v2267
        %2269 = vmatmul.f32.gmra.mxu0 %v505
        %v2270 = vpop.f32.mrf.mxu0
        %v2271 = vadd.f32 %v2206, %v2270
        %2272 = vdwg.mxu0
        %2273 = vmatpush.msra.mxu0 %v1018
        %2274 = vmatpush.msra.mxu0 %v1014
        %2275 = vmatpush.msra.mxu0 %v1010
        %2276 = vmatpush.msra.mxu0 %v1006
        %2277 = vmatpush.msra.mxu0 %v1002
        %2278 = vmatpush.msra.mxu0 %v998
        %2279 = vmatpush.msra.mxu0 %v994
        %2280 = vmatpush.msra.mxu0 %v990
        %2281 = vmatpush.msra.mxu0 %v986
        %2282 = vmatpush.msra.mxu0 %v982
        %2283 = vmatpush.msra.mxu0 %v978
        %2284 = vmatpush.msra.mxu0 %v974
        %2285 = vmatpush.msra.mxu0 %v970
        %2286 = vmatpush.msra.mxu0 %v966
        %2287 = vmatpush.msra.mxu0 %v962
        %2288 = vmatpush.msra.mxu0 %v958
        %2289 = vmatmul.f32.gmra.mxu0 %v356
        %v2290 = vpop.f32.mrf.mxu0
        %v2291 = vadd.f32 %v2226, %v2290
        %2292 = vmatmul.f32.gmra.mxu0 %v366
        %v2293 = vpop.f32.mrf.mxu0
        %v2294 = vadd.f32 %v2229, %v2293
        %2295 = vmatmul.f32.gmra.mxu0 %v376
        %v2296 = vpop.f32.mrf.mxu0
        %v2297 = vadd.f32 %v2232, %v2296
        %2298 = vmatmul.f32.gmra.mxu0 %v386
        %v2299 = vpop.f32.mrf.mxu0
        %v2300 = vadd.f32 %v2235, %v2299
        %2301 = vmatmul.f32.gmra.mxu0 %v396
        %v2302 = vpop.f32.mrf.mxu0
        %v2303 = vadd.f32 %v2238, %v2302
        %2304 = vmatmul.f32.gmra.mxu0 %v406
        %v2305 = vpop.f32.mrf.mxu0
        %v2306 = vadd.f32 %v2241, %v2305
        %2307 = vmatmul.f32.gmra.mxu0 %v416
        %v2308 = vpop.f32.mrf.mxu0
        %v2309 = vadd.f32 %v2244, %v2308
        %2310 = vmatmul.f32.gmra.mxu0 %v426
        %v2311 = vpop.f32.mrf.mxu0
        %v2312 = vadd.f32 %v2247, %v2311
        %2313 = vmatmul.f32.gmra.mxu0 %v436
        %v2314 = vpop.f32.mrf.mxu0
        %v2315 = vadd.f32 %v2250, %v2314
        %2316 = vmatmul.f32.gmra.mxu0 %v446
        %v2317 = vpop.f32.mrf.mxu0
        %v2318 = vadd.f32 %v2253, %v2317
        %2319 = vmatmul.f32.gmra.mxu0 %v456
        %v2320 = vpop.f32.mrf.mxu0
        %v2321 = vadd.f32 %v2256, %v2320
        %2322 = vmatmul.f32.gmra.mxu0 %v466
        %v2323 = vpop.f32.mrf.mxu0
        %v2324 = vadd.f32 %v2259, %v2323
        %2325 = vmatmul.f32.gmra.mxu0 %v476
        %v2326 = vpop.f32.mrf.mxu0
        %v2327 = vadd.f32 %v2262, %v2326
        %2328 = vmatmul.f32.gmra.mxu0 %v486
        %v2329 = vpop.f32.mrf.mxu0
        %v2330 = vadd.f32 %v2265, %v2329
        %2331 = vmatmul.f32.gmra.mxu0 %v496
        %v2332 = vpop.f32.mrf.mxu0
        %v2333 = vadd.f32 %v2268, %v2332
        %2334 = vmatmul.f32.gmra.mxu0 %v506
        %v2335 = vpop.f32.mrf.mxu0
        %v2336 = vadd.f32 %v2271, %v2335
        %2337 = vdwg.mxu0
        %2338 = vmatpush.msra.mxu0 %v1082
        %2339 = vmatpush.msra.mxu0 %v1078
        %2340 = vmatpush.msra.mxu0 %v1074
        %2341 = vmatpush.msra.mxu0 %v1070
        %2342 = vmatpush.msra.mxu0 %v1066
        %2343 = vmatpush.msra.mxu0 %v1062
        %2344 = vmatpush.msra.mxu0 %v1058
        %2345 = vmatpush.msra.mxu0 %v1054
        %2346 = vmatpush.msra.mxu0 %v1050
        %2347 = vmatpush.msra.mxu0 %v1046
        %2348 = vmatpush.msra.mxu0 %v1042
        %2349 = vmatpush.msra.mxu0 %v1038
        %2350 = vmatpush.msra.mxu0 %v1034
        %2351 = vmatpush.msra.mxu0 %v1030
        %2352 = vmatpush.msra.mxu0 %v1026
        %2353 = vmatpush.msra.mxu0 %v1022
        %2354 = vmatmul.f32.gmra.mxu0 %v357
        %v2355 = vpop.f32.mrf.mxu0
        %v2356 = vadd.f32 %v2291, %v2355
        %2357 = vmatmul.f32.gmra.mxu0 %v367
        %v2358 = vpop.f32.mrf.mxu0
        %v2359 = vadd.f32 %v2294, %v2358
        %2360 = vmatmul.f32.gmra.mxu0 %v377
        %v2361 = vpop.f32.mrf.mxu0
        %v2362 = vadd.f32 %v2297, %v2361
        %2363 = vmatmul.f32.gmra.mxu0 %v387
        %v2364 = vpop.f32.mrf.mxu0
        %v2365 = vadd.f32 %v2300, %v2364
        %2366 = vmatmul.f32.gmra.mxu0 %v397
        %v2367 = vpop.f32.mrf.mxu0
        %v2368 = vadd.f32 %v2303, %v2367
        %2369 = vmatmul.f32.gmra.mxu0 %v407
        %v2370 = vpop.f32.mrf.mxu0
        %v2371 = vadd.f32 %v2306, %v2370
        %2372 = vmatmul.f32.gmra.mxu0 %v417
        %v2373 = vpop.f32.mrf.mxu0
        %v2374 = vadd.f32 %v2309, %v2373
        %2375 = vmatmul.f32.gmra.mxu0 %v427
        %v2376 = vpop.f32.mrf.mxu0
        %v2377 = vadd.f32 %v2312, %v2376
        %2378 = vmatmul.f32.gmra.mxu0 %v437
        %v2379 = vpop.f32.mrf.mxu0
        %v2380 = vadd.f32 %v2315, %v2379
        %2381 = vmatmul.f32.gmra.mxu0 %v447
        %v2382 = vpop.f32.mrf.mxu0
        %v2383 = vadd.f32 %v2318, %v2382
        %2384 = vmatmul.f32.gmra.mxu0 %v457
        %v2385 = vpop.f32.mrf.mxu0
        %v2386 = vadd.f32 %v2321, %v2385
        %2387 = vmatmul.f32.gmra.mxu0 %v467
        %v2388 = vpop.f32.mrf.mxu0
        %v2389 = vadd.f32 %v2324, %v2388
        %2390 = vmatmul.f32.gmra.mxu0 %v477
        %v2391 = vpop.f32.mrf.mxu0
        %v2392 = vadd.f32 %v2327, %v2391
        %2393 = vmatmul.f32.gmra.mxu0 %v487
        %v2394 = vpop.f32.mrf.mxu0
        %v2395 = vadd.f32 %v2330, %v2394
        %2396 = vmatmul.f32.gmra.mxu0 %v497
        %v2397 = vpop.f32.mrf.mxu0
        %v2398 = vadd.f32 %v2333, %v2397
        %2399 = vmatmul.f32.gmra.mxu0 %v507
        %v2400 = vpop.f32.mrf.mxu0
        %v2401 = vadd.f32 %v2336, %v2400
        %2402 = vdwg.mxu0
        %2403 = vmatpush.msra.mxu0 0.0
        %2404 = vmatpush.msra.mxu0 0.0
        %2405 = vmatpush.msra.mxu0 0.0
        %2406 = vmatpush.msra.mxu0 0.0
        %2407 = vmatpush.msra.mxu0 0.0
        %2408 = vmatpush.msra.mxu0 0.0
        %2409 = vmatpush.msra.mxu0 0.0
        %2410 = vmatpush.msra.mxu0 0.0
        %2411 = vmatpush.msra.mxu0 0.0
        %2412 = vmatpush.msra.mxu0 0.0
        %2413 = vmatpush.msra.mxu0 %v1106
        %2414 = vmatpush.msra.mxu0 %v1102
        %2415 = vmatpush.msra.mxu0 %v1098
        %2416 = vmatpush.msra.mxu0 %v1094
        %2417 = vmatpush.msra.mxu0 %v1090
        %2418 = vmatpush.msra.mxu0 %v1086
        %2419 = vmatmul.f32.gmra.mxu0 %v1121
        %v2420 = vpop.f32.mrf.mxu0
        %v2421 = vadd.f32 %v2356, %v2420
        %2422 = vmatmul.f32.gmra.mxu0 %v1124
        %v2423 = vpop.f32.mrf.mxu0
        %v2424 = vadd.f32 %v2359, %v2423
        %2425 = vmatmul.f32.gmra.mxu0 %v1127
        %v2426 = vpop.f32.mrf.mxu0
        %v2427 = vadd.f32 %v2362, %v2426
        %2428 = vmatmul.f32.gmra.mxu0 %v1130
        %v2429 = vpop.f32.mrf.mxu0
        %v2430 = vadd.f32 %v2365, %v2429
        %2431 = vmatmul.f32.gmra.mxu0 %v1133
        %v2432 = vpop.f32.mrf.mxu0
        %v2433 = vadd.f32 %v2368, %v2432
        %2434 = vmatmul.f32.gmra.mxu0 %v1136
        %v2435 = vpop.f32.mrf.mxu0
        %v2436 = vadd.f32 %v2371, %v2435
        %2437 = vmatmul.f32.gmra.mxu0 %v1139
        %v2438 = vpop.f32.mrf.mxu0
        %v2439 = vadd.f32 %v2374, %v2438
        %2440 = vmatmul.f32.gmra.mxu0 %v1142
        %v2441 = vpop.f32.mrf.mxu0
        %v2442 = vadd.f32 %v2377, %v2441
        %2443 = vmatmul.f32.gmra.mxu0 %v1145
        %v2444 = vpop.f32.mrf.mxu0
        %v2445 = vadd.f32 %v2380, %v2444
        %2446 = vmatmul.f32.gmra.mxu0 %v1148
        %v2447 = vpop.f32.mrf.mxu0
        %v2448 = vadd.f32 %v2383, %v2447
        %2449 = vmatmul.f32.gmra.mxu0 %v1151
        %v2450 = vpop.f32.mrf.mxu0
        %v2451 = vadd.f32 %v2386, %v2450
        %2452 = vmatmul.f32.gmra.mxu0 %v1154
        %v2453 = vpop.f32.mrf.mxu0
        %v2454 = vadd.f32 %v2389, %v2453
        %2455 = vmatmul.f32.gmra.mxu0 %v1157
        %v2456 = vpop.f32.mrf.mxu0
        %v2457 = vadd.f32 %v2392, %v2456
        %2458 = vmatmul.f32.gmra.mxu0 %v1160
        %v2459 = vpop.f32.mrf.mxu0
        %v2460 = vadd.f32 %v2395, %v2459
        %2461 = vmatmul.f32.gmra.mxu0 %v1163
        %v2462 = vpop.f32.mrf.mxu0
        %v2463 = vadd.f32 %v2398, %v2462
        %2464 = vmatmul.f32.gmra.mxu0 %v1166
        %v2465 = vpop.f32.mrf.mxu0
        %v2466 = vadd.f32 %v2401, %v2465
        %2467 = vdwg.mxu0
        %2468 = vmatpush.msra.mxu0 %v571
        %2469 = vmatpush.msra.mxu0 %v567
        %2470 = vmatpush.msra.mxu0 %v563
        %2471 = vmatpush.msra.mxu0 %v559
        %2472 = vmatpush.msra.mxu0 %v555
        %2473 = vmatpush.msra.mxu0 %v551
        %2474 = vmatpush.msra.mxu0 %v547
        %2475 = vmatpush.msra.mxu0 %v543
        %2476 = vmatpush.msra.mxu0 %v539
        %2477 = vmatpush.msra.mxu0 %v535
        %2478 = vmatpush.msra.mxu0 %v531
        %2479 = vmatpush.msra.mxu0 %v527
        %2480 = vmatpush.msra.mxu0 %v523
        %2481 = vmatpush.msra.mxu0 %v519
        %2482 = vmatpush.msra.mxu0 %v515
        %2483 = vmatpush.msra.mxu0 %v511
        %2484 = vmatmul.f32.gmra.mxu0 %v349
        %v2485 = vpop.f32.mrf.mxu0
        %v2486 = vadd.f32 %v1113, %v2485
        %2487 = vmatmul.f32.gmra.mxu0 %v359
        %v2488 = vpop.f32.mrf.mxu0
        %v2489 = vadd.f32 %v1113, %v2488
        %2490 = vmatmul.f32.gmra.mxu0 %v369
        %v2491 = vpop.f32.mrf.mxu0
        %v2492 = vadd.f32 %v1113, %v2491
        %2493 = vmatmul.f32.gmra.mxu0 %v379
        %v2494 = vpop.f32.mrf.mxu0
        %v2495 = vadd.f32 %v1113, %v2494
        %2496 = vmatmul.f32.gmra.mxu0 %v389
        %v2497 = vpop.f32.mrf.mxu0
        %v2498 = vadd.f32 %v1113, %v2497
        %2499 = vmatmul.f32.gmra.mxu0 %v399
        %v2500 = vpop.f32.mrf.mxu0
        %v2501 = vadd.f32 %v1113, %v2500
        %2502 = vmatmul.f32.gmra.mxu0 %v409
        %v2503 = vpop.f32.mrf.mxu0
        %v2504 = vadd.f32 %v1113, %v2503
        %2505 = vmatmul.f32.gmra.mxu0 %v419
        %v2506 = vpop.f32.mrf.mxu0
        %v2507 = vadd.f32 %v1113, %v2506
        %2508 = vmatmul.f32.gmra.mxu0 %v429
        %v2509 = vpop.f32.mrf.mxu0
        %v2510 = vadd.f32 %v1113, %v2509
        %2511 = vmatmul.f32.gmra.mxu0 %v439
        %v2512 = vpop.f32.mrf.mxu0
        %v2513 = vadd.f32 %v1113, %v2512
        %2514 = vmatmul.f32.gmra.mxu0 %v449
        %v2515 = vpop.f32.mrf.mxu0
        %v2516 = vadd.f32 %v1113, %v2515
        %2517 = vmatmul.f32.gmra.mxu0 %v459
        %v2518 = vpop.f32.mrf.mxu0
        %v2519 = vadd.f32 %v1113, %v2518
        %2520 = vmatmul.f32.gmra.mxu0 %v469
        %v2521 = vpop.f32.mrf.mxu0
        %v2522 = vadd.f32 %v1113, %v2521
        %2523 = vmatmul.f32.gmra.mxu0 %v479
        %v2524 = vpop.f32.mrf.mxu0
        %v2525 = vadd.f32 %v1113, %v2524
        %2526 = vmatmul.f32.gmra.mxu0 %v489
        %v2527 = vpop.f32.mrf.mxu0
        %v2528 = vadd.f32 %v1113, %v2527
        %2529 = vmatmul.f32.gmra.mxu0 %v499
        %v2530 = vpop.f32.mrf.mxu0
        %v2531 = vadd.f32 %v1113, %v2530
        %2532 = vdwg.mxu0
        %2533 = vmatpush.msra.mxu0 %v635
        %2534 = vmatpush.msra.mxu0 %v631
        %2535 = vmatpush.msra.mxu0 %v627
        %2536 = vmatpush.msra.mxu0 %v623
        %2537 = vmatpush.msra.mxu0 %v619
        %2538 = vmatpush.msra.mxu0 %v615
        %2539 = vmatpush.msra.mxu0 %v611
        %2540 = vmatpush.msra.mxu0 %v607
        %2541 = vmatpush.msra.mxu0 %v603
        %2542 = vmatpush.msra.mxu0 %v599
        %2543 = vmatpush.msra.mxu0 %v595
        %2544 = vmatpush.msra.mxu0 %v591
        %2545 = vmatpush.msra.mxu0 %v587
        %2546 = vmatpush.msra.mxu0 %v583
        %2547 = vmatpush.msra.mxu0 %v579
        %2548 = vmatpush.msra.mxu0 %v575
        %2549 = vmatmul.f32.gmra.mxu0 %v350
        %v2550 = vpop.f32.mrf.mxu0
        %v2551 = vadd.f32 %v2486, %v2550
        %2552 = vmatmul.f32.gmra.mxu0 %v360
        %v2553 = vpop.f32.mrf.mxu0
        %v2554 = vadd.f32 %v2489, %v2553
        %2555 = vmatmul.f32.gmra.mxu0 %v370
        %v2556 = vpop.f32.mrf.mxu0
        %v2557 = vadd.f32 %v2492, %v2556
        %2558 = vmatmul.f32.gmra.mxu0 %v380
        %v2559 = vpop.f32.mrf.mxu0
        %v2560 = vadd.f32 %v2495, %v2559
        %2561 = vmatmul.f32.gmra.mxu0 %v390
        %v2562 = vpop.f32.mrf.mxu0
        %v2563 = vadd.f32 %v2498, %v2562
        %2564 = vmatmul.f32.gmra.mxu0 %v400
        %v2565 = vpop.f32.mrf.mxu0
        %v2566 = vadd.f32 %v2501, %v2565
        %2567 = vmatmul.f32.gmra.mxu0 %v410
        %v2568 = vpop.f32.mrf.mxu0
        %v2569 = vadd.f32 %v2504, %v2568
        %2570 = vmatmul.f32.gmra.mxu0 %v420
        %v2571 = vpop.f32.mrf.mxu0
        %v2572 = vadd.f32 %v2507, %v2571
        %2573 = vmatmul.f32.gmra.mxu0 %v430
        %v2574 = vpop.f32.mrf.mxu0
        %v2575 = vadd.f32 %v2510, %v2574
        %2576 = vmatmul.f32.gmra.mxu0 %v440
        %v2577 = vpop.f32.mrf.mxu0
        %v2578 = vadd.f32 %v2513, %v2577
        %2579 = vmatmul.f32.gmra.mxu0 %v450
        %v2580 = vpop.f32.mrf.mxu0
        %v2581 = vadd.f32 %v2516, %v2580
        %2582 = vmatmul.f32.gmra.mxu0 %v460
        %v2583 = vpop.f32.mrf.mxu0
        %v2584 = vadd.f32 %v2519, %v2583
        %2585 = vmatmul.f32.gmra.mxu0 %v470
        %v2586 = vpop.f32.mrf.mxu0
        %v2587 = vadd.f32 %v2522, %v2586
        %2588 = vmatmul.f32.gmra.mxu0 %v480
        %v2589 = vpop.f32.mrf.mxu0
        %v2590 = vadd.f32 %v2525, %v2589
        %2591 = vmatmul.f32.gmra.mxu0 %v490
        %v2592 = vpop.f32.mrf.mxu0
        %v2593 = vadd.f32 %v2528, %v2592
        %2594 = vmatmul.f32.gmra.mxu0 %v500
        %v2595 = vpop.f32.mrf.mxu0
        %v2596 = vadd.f32 %v2531, %v2595
        %2597 = vdwg.mxu0
        %2598 = vmatpush.msra.mxu0 %v699
        %2599 = vmatpush.msra.mxu0 %v695
        %2600 = vmatpush.msra.mxu0 %v691
        %2601 = vmatpush.msra.mxu0 %v687
        %2602 = vmatpush.msra.mxu0 %v683
        %2603 = vmatpush.msra.mxu0 %v679
        %2604 = vmatpush.msra.mxu0 %v675
        %2605 = vmatpush.msra.mxu0 %v671
        %2606 = vmatpush.msra.mxu0 %v667
        %2607 = vmatpush.msra.mxu0 %v663
        %2608 = vmatpush.msra.mxu0 %v659
        %2609 = vmatpush.msra.mxu0 %v655
        %2610 = vmatpush.msra.mxu0 %v651
        %2611 = vmatpush.msra.mxu0 %v647
        %2612 = vmatpush.msra.mxu0 %v643
        %2613 = vmatpush.msra.mxu0 %v639
        %2614 = vmatmul.f32.gmra.mxu0 %v351
        %v2615 = vpop.f32.mrf.mxu0
        %v2616 = vadd.f32 %v2551, %v2615
        %2617 = vmatmul.f32.gmra.mxu0 %v361
        %v2618 = vpop.f32.mrf.mxu0
        %v2619 = vadd.f32 %v2554, %v2618
        %2620 = vmatmul.f32.gmra.mxu0 %v371
        %v2621 = vpop.f32.mrf.mxu0
        %v2622 = vadd.f32 %v2557, %v2621
        %2623 = vmatmul.f32.gmra.mxu0 %v381
        %v2624 = vpop.f32.mrf.mxu0
        %v2625 = vadd.f32 %v2560, %v2624
        %2626 = vmatmul.f32.gmra.mxu0 %v391
        %v2627 = vpop.f32.mrf.mxu0
        %v2628 = vadd.f32 %v2563, %v2627
        %2629 = vmatmul.f32.gmra.mxu0 %v401
        %v2630 = vpop.f32.mrf.mxu0
        %v2631 = vadd.f32 %v2566, %v2630
        %2632 = vmatmul.f32.gmra.mxu0 %v411
        %v2633 = vpop.f32.mrf.mxu0
        %v2634 = vadd.f32 %v2569, %v2633
        %2635 = vmatmul.f32.gmra.mxu0 %v421
        %v2636 = vpop.f32.mrf.mxu0
        %v2637 = vadd.f32 %v2572, %v2636
        %2638 = vmatmul.f32.gmra.mxu0 %v431
        %v2639 = vpop.f32.mrf.mxu0
        %v2640 = vadd.f32 %v2575, %v2639
        %2641 = vmatmul.f32.gmra.mxu0 %v441
        %v2642 = vpop.f32.mrf.mxu0
        %v2643 = vadd.f32 %v2578, %v2642
        %2644 = vmatmul.f32.gmra.mxu0 %v451
        %v2645 = vpop.f32.mrf.mxu0
        %v2646 = vadd.f32 %v2581, %v2645
        %2647 = vmatmul.f32.gmra.mxu0 %v461
        %v2648 = vpop.f32.mrf.mxu0
        %v2649 = vadd.f32 %v2584, %v2648
        %2650 = vmatmul.f32.gmra.mxu0 %v471
        %v2651 = vpop.f32.mrf.mxu0
        %v2652 = vadd.f32 %v2587, %v2651
        %2653 = vmatmul.f32.gmra.mxu0 %v481
        %v2654 = vpop.f32.mrf.mxu0
        %v2655 = vadd.f32 %v2590, %v2654
        %2656 = vmatmul.f32.gmra.mxu0 %v491
        %v2657 = vpop.f32.mrf.mxu0
        %v2658 = vadd.f32 %v2593, %v2657
        %2659 = vmatmul.f32.gmra.mxu0 %v501
        %v2660 = vpop.f32.mrf.mxu0
        %v2661 = vadd.f32 %v2596, %v2660
        %2662 = vdwg.mxu0
        %2663 = vmatpush.msra.mxu0 %v763
        %2664 = vmatpush.msra.mxu0 %v759
        %2665 = vmatpush.msra.mxu0 %v755
        %2666 = vmatpush.msra.mxu0 %v751
        %2667 = vmatpush.msra.mxu0 %v747
        %2668 = vmatpush.msra.mxu0 %v743
        %2669 = vmatpush.msra.mxu0 %v739
        %2670 = vmatpush.msra.mxu0 %v735
        %2671 = vmatpush.msra.mxu0 %v731
        %2672 = vmatpush.msra.mxu0 %v727
        %2673 = vmatpush.msra.mxu0 %v723
        %2674 = vmatpush.msra.mxu0 %v719
        %2675 = vmatpush.msra.mxu0 %v715
        %2676 = vmatpush.msra.mxu0 %v711
        %2677 = vmatpush.msra.mxu0 %v707
        %2678 = vmatpush.msra.mxu0 %v703
        %2679 = vmatmul.f32.gmra.mxu0 %v352
        %v2680 = vpop.f32.mrf.mxu0
        %v2681 = vadd.f32 %v2616, %v2680
        %2682 = vmatmul.f32.gmra.mxu0 %v362
        %v2683 = vpop.f32.mrf.mxu0
        %v2684 = vadd.f32 %v2619, %v2683
        %2685 = vmatmul.f32.gmra.mxu0 %v372
        %v2686 = vpop.f32.mrf.mxu0
        %v2687 = vadd.f32 %v2622, %v2686
        %2688 = vmatmul.f32.gmra.mxu0 %v382
        %v2689 = vpop.f32.mrf.mxu0
        %v2690 = vadd.f32 %v2625, %v2689
        %2691 = vmatmul.f32.gmra.mxu0 %v392
        %v2692 = vpop.f32.mrf.mxu0
        %v2693 = vadd.f32 %v2628, %v2692
        %2694 = vmatmul.f32.gmra.mxu0 %v402
        %v2695 = vpop.f32.mrf.mxu0
        %v2696 = vadd.f32 %v2631, %v2695
        %2697 = vmatmul.f32.gmra.mxu0 %v412
        %v2698 = vpop.f32.mrf.mxu0
        %v2699 = vadd.f32 %v2634, %v2698
        %2700 = vmatmul.f32.gmra.mxu0 %v422
        %v2701 = vpop.f32.mrf.mxu0
        %v2702 = vadd.f32 %v2637, %v2701
        %2703 = vmatmul.f32.gmra.mxu0 %v432
        %v2704 = vpop.f32.mrf.mxu0
        %v2705 = vadd.f32 %v2640, %v2704
        %2706 = vmatmul.f32.gmra.mxu0 %v442
        %v2707 = vpop.f32.mrf.mxu0
        %v2708 = vadd.f32 %v2643, %v2707
        %2709 = vmatmul.f32.gmra.mxu0 %v452
        %v2710 = vpop.f32.mrf.mxu0
        %v2711 = vadd.f32 %v2646, %v2710
        %2712 = vmatmul.f32.gmra.mxu0 %v462
        %v2713 = vpop.f32.mrf.mxu0
        %v2714 = vadd.f32 %v2649, %v2713
        %2715 = vmatmul.f32.gmra.mxu0 %v472
        %v2716 = vpop.f32.mrf.mxu0
        %v2717 = vadd.f32 %v2652, %v2716
        %2718 = vmatmul.f32.gmra.mxu0 %v482
        %v2719 = vpop.f32.mrf.mxu0
        %v2720 = vadd.f32 %v2655, %v2719
        %2721 = vmatmul.f32.gmra.mxu0 %v492
        %v2722 = vpop.f32.mrf.mxu0
        %v2723 = vadd.f32 %v2658, %v2722
        %2724 = vmatmul.f32.gmra.mxu0 %v502
        %v2725 = vpop.f32.mrf.mxu0
        %v2726 = vadd.f32 %v2661, %v2725
        %2727 = vdwg.mxu0
        %2728 = vmatpush.msra.mxu0 %v827
        %2729 = vmatpush.msra.mxu0 %v823
        %2730 = vmatpush.msra.mxu0 %v819
        %2731 = vmatpush.msra.mxu0 %v815
        %2732 = vmatpush.msra.mxu0 %v811
        %2733 = vmatpush.msra.mxu0 %v807
        %2734 = vmatpush.msra.mxu0 %v803
        %2735 = vmatpush.msra.mxu0 %v799
        %2736 = vmatpush.msra.mxu0 %v795
        %2737 = vmatpush.msra.mxu0 %v791
        %2738 = vmatpush.msra.mxu0 %v787
        %2739 = vmatpush.msra.mxu0 %v783
        %2740 = vmatpush.msra.mxu0 %v779
        %2741 = vmatpush.msra.mxu0 %v775
        %2742 = vmatpush.msra.mxu0 %v771
        %2743 = vmatpush.msra.mxu0 %v767
        %2744 = vmatmul.f32.gmra.mxu0 %v353
        %v2745 = vpop.f32.mrf.mxu0
        %v2746 = vadd.f32 %v2681, %v2745
        %2747 = vmatmul.f32.gmra.mxu0 %v363
        %v2748 = vpop.f32.mrf.mxu0
        %v2749 = vadd.f32 %v2684, %v2748
        %2750 = vmatmul.f32.gmra.mxu0 %v373
        %v2751 = vpop.f32.mrf.mxu0
        %v2752 = vadd.f32 %v2687, %v2751
        %2753 = vmatmul.f32.gmra.mxu0 %v383
        %v2754 = vpop.f32.mrf.mxu0
        %v2755 = vadd.f32 %v2690, %v2754
        %2756 = vmatmul.f32.gmra.mxu0 %v393
        %v2757 = vpop.f32.mrf.mxu0
        %v2758 = vadd.f32 %v2693, %v2757
        %2759 = vmatmul.f32.gmra.mxu0 %v403
        %v2760 = vpop.f32.mrf.mxu0
        %v2761 = vadd.f32 %v2696, %v2760
        %2762 = vmatmul.f32.gmra.mxu0 %v413
        %v2763 = vpop.f32.mrf.mxu0
        %v2764 = vadd.f32 %v2699, %v2763
        %2765 = vmatmul.f32.gmra.mxu0 %v423
        %v2766 = vpop.f32.mrf.mxu0
        %v2767 = vadd.f32 %v2702, %v2766
        %2768 = vmatmul.f32.gmra.mxu0 %v433
        %v2769 = vpop.f32.mrf.mxu0
        %v2770 = vadd.f32 %v2705, %v2769
        %2771 = vmatmul.f32.gmra.mxu0 %v443
        %v2772 = vpop.f32.mrf.mxu0
        %v2773 = vadd.f32 %v2708, %v2772
        %2774 = vmatmul.f32.gmra.mxu0 %v453
        %v2775 = vpop.f32.mrf.mxu0
        %v2776 = vadd.f32 %v2711, %v2775
        %2777 = vmatmul.f32.gmra.mxu0 %v463
        %v2778 = vpop.f32.mrf.mxu0
        %v2779 = vadd.f32 %v2714, %v2778
        %2780 = vmatmul.f32.gmra.mxu0 %v473
        %v2781 = vpop.f32.mrf.mxu0
        %v2782 = vadd.f32 %v2717, %v2781
        %2783 = vmatmul.f32.gmra.mxu0 %v483
        %v2784 = vpop.f32.mrf.mxu0
        %v2785 = vadd.f32 %v2720, %v2784
        %2786 = vmatmul.f32.gmra.mxu0 %v493
        %v2787 = vpop.f32.mrf.mxu0
        %v2788 = vadd.f32 %v2723, %v2787
        %2789 = vmatmul.f32.gmra.mxu0 %v503
        %v2790 = vpop.f32.mrf.mxu0
        %v2791 = vadd.f32 %v2726, %v2790
        %2792 = vdwg.mxu0
        %2793 = vmatpush.msra.mxu0 %v891
        %2794 = vmatpush.msra.mxu0 %v887
        %2795 = vmatpush.msra.mxu0 %v883
        %2796 = vmatpush.msra.mxu0 %v879
        %2797 = vmatpush.msra.mxu0 %v875
        %2798 = vmatpush.msra.mxu0 %v871
        %2799 = vmatpush.msra.mxu0 %v867
        %2800 = vmatpush.msra.mxu0 %v863
        %2801 = vmatpush.msra.mxu0 %v859
        %2802 = vmatpush.msra.mxu0 %v855
        %2803 = vmatpush.msra.mxu0 %v851
        %2804 = vmatpush.msra.mxu0 %v847
        %2805 = vmatpush.msra.mxu0 %v843
        %2806 = vmatpush.msra.mxu0 %v839
        %2807 = vmatpush.msra.mxu0 %v835
        %2808 = vmatpush.msra.mxu0 %v831
        %2809 = vmatmul.f32.gmra.mxu0 %v354
        %v2810 = vpop.f32.mrf.mxu0
        %v2811 = vadd.f32 %v2746, %v2810
        %2812 = vmatmul.f32.gmra.mxu0 %v364
        %v2813 = vpop.f32.mrf.mxu0
        %v2814 = vadd.f32 %v2749, %v2813
        %2815 = vmatmul.f32.gmra.mxu0 %v374
        %v2816 = vpop.f32.mrf.mxu0
        %v2817 = vadd.f32 %v2752, %v2816
        %2818 = vmatmul.f32.gmra.mxu0 %v384
        %v2819 = vpop.f32.mrf.mxu0
        %v2820 = vadd.f32 %v2755, %v2819
        %2821 = vmatmul.f32.gmra.mxu0 %v394
        %v2822 = vpop.f32.mrf.mxu0
        %v2823 = vadd.f32 %v2758, %v2822
        %2824 = vmatmul.f32.gmra.mxu0 %v404
        %v2825 = vpop.f32.mrf.mxu0
        %v2826 = vadd.f32 %v2761, %v2825
        %2827 = vmatmul.f32.gmra.mxu0 %v414
        %v2828 = vpop.f32.mrf.mxu0
        %v2829 = vadd.f32 %v2764, %v2828
        %2830 = vmatmul.f32.gmra.mxu0 %v424
        %v2831 = vpop.f32.mrf.mxu0
        %v2832 = vadd.f32 %v2767, %v2831
        %2833 = vmatmul.f32.gmra.mxu0 %v434
        %v2834 = vpop.f32.mrf.mxu0
        %v2835 = vadd.f32 %v2770, %v2834
        %2836 = vmatmul.f32.gmra.mxu0 %v444
        %v2837 = vpop.f32.mrf.mxu0
        %v2838 = vadd.f32 %v2773, %v2837
        %2839 = vmatmul.f32.gmra.mxu0 %v454
        %v2840 = vpop.f32.mrf.mxu0
        %v2841 = vadd.f32 %v2776, %v2840
        %2842 = vmatmul.f32.gmra.mxu0 %v464
        %v2843 = vpop.f32.mrf.mxu0
        %v2844 = vadd.f32 %v2779, %v2843
        %2845 = vmatmul.f32.gmra.mxu0 %v474
        %v2846 = vpop.f32.mrf.mxu0
        %v2847 = vadd.f32 %v2782, %v2846
        %2848 = vmatmul.f32.gmra.mxu0 %v484
        %v2849 = vpop.f32.mrf.mxu0
        %v2850 = vadd.f32 %v2785, %v2849
        %2851 = vmatmul.f32.gmra.mxu0 %v494
        %v2852 = vpop.f32.mrf.mxu0
        %v2853 = vadd.f32 %v2788, %v2852
        %2854 = vmatmul.f32.gmra.mxu0 %v504
        %v2855 = vpop.f32.mrf.mxu0
        %v2856 = vadd.f32 %v2791, %v2855
        %2857 = vdwg.mxu0
        %2858 = vmatpush.msra.mxu0 %v955
        %2859 = vmatpush.msra.mxu0 %v951
        %2860 = vmatpush.msra.mxu0 %v947
        %2861 = vmatpush.msra.mxu0 %v943
        %2862 = vmatpush.msra.mxu0 %v939
        %2863 = vmatpush.msra.mxu0 %v935
        %2864 = vmatpush.msra.mxu0 %v931
        %2865 = vmatpush.msra.mxu0 %v927
        %2866 = vmatpush.msra.mxu0 %v923
        %2867 = vmatpush.msra.mxu0 %v919
        %2868 = vmatpush.msra.mxu0 %v915
        %2869 = vmatpush.msra.mxu0 %v911
        %2870 = vmatpush.msra.mxu0 %v907
        %2871 = vmatpush.msra.mxu0 %v903
        %2872 = vmatpush.msra.mxu0 %v899
        %2873 = vmatpush.msra.mxu0 %v895
        %2874 = vmatmul.f32.gmra.mxu0 %v355
        %v2875 = vpop.f32.mrf.mxu0
        %v2876 = vadd.f32 %v2811, %v2875
        %2877 = vmatmul.f32.gmra.mxu0 %v365
        %v2878 = vpop.f32.mrf.mxu0
        %v2879 = vadd.f32 %v2814, %v2878
        %2880 = vmatmul.f32.gmra.mxu0 %v375
        %v2881 = vpop.f32.mrf.mxu0
        %v2882 = vadd.f32 %v2817, %v2881
        %2883 = vmatmul.f32.gmra.mxu0 %v385
        %v2884 = vpop.f32.mrf.mxu0
        %v2885 = vadd.f32 %v2820, %v2884
        %2886 = vmatmul.f32.gmra.mxu0 %v395
        %v2887 = vpop.f32.mrf.mxu0
        %v2888 = vadd.f32 %v2823, %v2887
        %2889 = vmatmul.f32.gmra.mxu0 %v405
        %v2890 = vpop.f32.mrf.mxu0
        %v2891 = vadd.f32 %v2826, %v2890
        %2892 = vmatmul.f32.gmra.mxu0 %v415
        %v2893 = vpop.f32.mrf.mxu0
        %v2894 = vadd.f32 %v2829, %v2893
        %2895 = vmatmul.f32.gmra.mxu0 %v425
        %v2896 = vpop.f32.mrf.mxu0
        %v2897 = vadd.f32 %v2832, %v2896
        %2898 = vmatmul.f32.gmra.mxu0 %v435
        %v2899 = vpop.f32.mrf.mxu0
        %v2900 = vadd.f32 %v2835, %v2899
        %2901 = vmatmul.f32.gmra.mxu0 %v445
        %v2902 = vpop.f32.mrf.mxu0
        %v2903 = vadd.f32 %v2838, %v2902
        %2904 = vmatmul.f32.gmra.mxu0 %v455
        %v2905 = vpop.f32.mrf.mxu0
        %v2906 = vadd.f32 %v2841, %v2905
        %2907 = vmatmul.f32.gmra.mxu0 %v465
        %v2908 = vpop.f32.mrf.mxu0
        %v2909 = vadd.f32 %v2844, %v2908
        %2910 = vmatmul.f32.gmra.mxu0 %v475
        %v2911 = vpop.f32.mrf.mxu0
        %v2912 = vadd.f32 %v2847, %v2911
        %2913 = vmatmul.f32.gmra.mxu0 %v485
        %v2914 = vpop.f32.mrf.mxu0
        %v2915 = vadd.f32 %v2850, %v2914
        %2916 = vmatmul.f32.gmra.mxu0 %v495
        %v2917 = vpop.f32.mrf.mxu0
        %v2918 = vadd.f32 %v2853, %v2917
        %2919 = vmatmul.f32.gmra.mxu0 %v505
        %v2920 = vpop.f32.mrf.mxu0
        %v2921 = vadd.f32 %v2856, %v2920
        %2922 = vdwg.mxu0
        %2923 = vmatpush.msra.mxu0 %v1019
        %2924 = vmatpush.msra.mxu0 %v1015
        %2925 = vmatpush.msra.mxu0 %v1011
        %2926 = vmatpush.msra.mxu0 %v1007
        %2927 = vmatpush.msra.mxu0 %v1003
        %2928 = vmatpush.msra.mxu0 %v999
        %2929 = vmatpush.msra.mxu0 %v995
        %2930 = vmatpush.msra.mxu0 %v991
        %2931 = vmatpush.msra.mxu0 %v987
        %2932 = vmatpush.msra.mxu0 %v983
        %2933 = vmatpush.msra.mxu0 %v979
        %2934 = vmatpush.msra.mxu0 %v975
        %2935 = vmatpush.msra.mxu0 %v971
        %2936 = vmatpush.msra.mxu0 %v967
        %2937 = vmatpush.msra.mxu0 %v963
        %2938 = vmatpush.msra.mxu0 %v959
        %2939 = vmatmul.f32.gmra.mxu0 %v356
        %v2940 = vpop.f32.mrf.mxu0
        %v2941 = vadd.f32 %v2876, %v2940
        %2942 = vmatmul.f32.gmra.mxu0 %v366
        %v2943 = vpop.f32.mrf.mxu0
        %v2944 = vadd.f32 %v2879, %v2943
        %2945 = vmatmul.f32.gmra.mxu0 %v376
        %v2946 = vpop.f32.mrf.mxu0
        %v2947 = vadd.f32 %v2882, %v2946
        %2948 = vmatmul.f32.gmra.mxu0 %v386
        %v2949 = vpop.f32.mrf.mxu0
        %v2950 = vadd.f32 %v2885, %v2949
        %2951 = vmatmul.f32.gmra.mxu0 %v396
        %v2952 = vpop.f32.mrf.mxu0
        %v2953 = vadd.f32 %v2888, %v2952
        %2954 = vmatmul.f32.gmra.mxu0 %v406
        %v2955 = vpop.f32.mrf.mxu0
        %v2956 = vadd.f32 %v2891, %v2955
        %2957 = vmatmul.f32.gmra.mxu0 %v416
        %v2958 = vpop.f32.mrf.mxu0
        %v2959 = vadd.f32 %v2894, %v2958
        %2960 = vmatmul.f32.gmra.mxu0 %v426
        %v2961 = vpop.f32.mrf.mxu0
        %v2962 = vadd.f32 %v2897, %v2961
        %2963 = vmatmul.f32.gmra.mxu0 %v436
        %v2964 = vpop.f32.mrf.mxu0
        %v2965 = vadd.f32 %v2900, %v2964
        %2966 = vmatmul.f32.gmra.mxu0 %v446
        %v2967 = vpop.f32.mrf.mxu0
        %v2968 = vadd.f32 %v2903, %v2967
        %2969 = vmatmul.f32.gmra.mxu0 %v456
        %v2970 = vpop.f32.mrf.mxu0
        %v2971 = vadd.f32 %v2906, %v2970
        %2972 = vmatmul.f32.gmra.mxu0 %v466
        %v2973 = vpop.f32.mrf.mxu0
        %v2974 = vadd.f32 %v2909, %v2973
        %2975 = vmatmul.f32.gmra.mxu0 %v476
        %v2976 = vpop.f32.mrf.mxu0
        %v2977 = vadd.f32 %v2912, %v2976
        %2978 = vmatmul.f32.gmra.mxu0 %v486
        %v2979 = vpop.f32.mrf.mxu0
        %v2980 = vadd.f32 %v2915, %v2979
        %2981 = vmatmul.f32.gmra.mxu0 %v496
        %v2982 = vpop.f32.mrf.mxu0
        %v2983 = vadd.f32 %v2918, %v2982
        %2984 = vmatmul.f32.gmra.mxu0 %v506
        %v2985 = vpop.f32.mrf.mxu0
        %v2986 = vadd.f32 %v2921, %v2985
        %2987 = vdwg.mxu0
        %2988 = vmatpush.msra.mxu0 %v1083
        %2989 = vmatpush.msra.mxu0 %v1079
        %2990 = vmatpush.msra.mxu0 %v1075
        %2991 = vmatpush.msra.mxu0 %v1071
        %2992 = vmatpush.msra.mxu0 %v1067
        %2993 = vmatpush.msra.mxu0 %v1063
        %2994 = vmatpush.msra.mxu0 %v1059
        %2995 = vmatpush.msra.mxu0 %v1055
        %2996 = vmatpush.msra.mxu0 %v1051
        %2997 = vmatpush.msra.mxu0 %v1047
        %2998 = vmatpush.msra.mxu0 %v1043
        %2999 = vmatpush.msra.mxu0 %v1039
        %3000 = vmatpush.msra.mxu0 %v1035
        %3001 = vmatpush.msra.mxu0 %v1031
        %3002 = vmatpush.msra.mxu0 %v1027
        %3003 = vmatpush.msra.mxu0 %v1023
        %3004 = vmatmul.f32.gmra.mxu0 %v357
        %v3005 = vpop.f32.mrf.mxu0
        %v3006 = vadd.f32 %v2941, %v3005
        %3007 = vmatmul.f32.gmra.mxu0 %v367
        %v3008 = vpop.f32.mrf.mxu0
        %v3009 = vadd.f32 %v2944, %v3008
        %3010 = vmatmul.f32.gmra.mxu0 %v377
        %v3011 = vpop.f32.mrf.mxu0
        %v3012 = vadd.f32 %v2947, %v3011
        %3013 = vmatmul.f32.gmra.mxu0 %v387
        %v3014 = vpop.f32.mrf.mxu0
        %v3015 = vadd.f32 %v2950, %v3014
        %3016 = vmatmul.f32.gmra.mxu0 %v397
        %v3017 = vpop.f32.mrf.mxu0
        %v3018 = vadd.f32 %v2953, %v3017
        %3019 = vmatmul.f32.gmra.mxu0 %v407
        %v3020 = vpop.f32.mrf.mxu0
        %v3021 = vadd.f32 %v2956, %v3020
        %3022 = vmatmul.f32.gmra.mxu0 %v417
        %v3023 = vpop.f32.mrf.mxu0
        %v3024 = vadd.f32 %v2959, %v3023
        %3025 = vmatmul.f32.gmra.mxu0 %v427
        %v3026 = vpop.f32.mrf.mxu0
        %v3027 = vadd.f32 %v2962, %v3026
        %3028 = vmatmul.f32.gmra.mxu0 %v437
        %v3029 = vpop.f32.mrf.mxu0
        %v3030 = vadd.f32 %v2965, %v3029
        %3031 = vmatmul.f32.gmra.mxu0 %v447
        %v3032 = vpop.f32.mrf.mxu0
        %v3033 = vadd.f32 %v2968, %v3032
        %3034 = vmatmul.f32.gmra.mxu0 %v457
        %v3035 = vpop.f32.mrf.mxu0
        %v3036 = vadd.f32 %v2971, %v3035
        %3037 = vmatmul.f32.gmra.mxu0 %v467
        %v3038 = vpop.f32.mrf.mxu0
        %v3039 = vadd.f32 %v2974, %v3038
        %3040 = vmatmul.f32.gmra.mxu0 %v477
        %v3041 = vpop.f32.mrf.mxu0
        %v3042 = vadd.f32 %v2977, %v3041
        %3043 = vmatmul.f32.gmra.mxu0 %v487
        %v3044 = vpop.f32.mrf.mxu0
        %v3045 = vadd.f32 %v2980, %v3044
        %3046 = vmatmul.f32.gmra.mxu0 %v497
        %v3047 = vpop.f32.mrf.mxu0
        %v3048 = vadd.f32 %v2983, %v3047
        %3049 = vmatmul.f32.gmra.mxu0 %v507
        %v3050 = vpop.f32.mrf.mxu0
        %v3051 = vadd.f32 %v2986, %v3050
        %3052 = vdwg.mxu0
        %3053 = vmatpush.msra.mxu0 0.0
        %3054 = vmatpush.msra.mxu0 0.0
        %3055 = vmatpush.msra.mxu0 0.0
        %3056 = vmatpush.msra.mxu0 0.0
        %3057 = vmatpush.msra.mxu0 0.0
        %3058 = vmatpush.msra.mxu0 0.0
        %3059 = vmatpush.msra.mxu0 0.0
        %3060 = vmatpush.msra.mxu0 0.0
        %3061 = vmatpush.msra.mxu0 0.0
        %3062 = vmatpush.msra.mxu0 0.0
        %3063 = vmatpush.msra.mxu0 %v1107
        %3064 = vmatpush.msra.mxu0 %v1103
        %3065 = vmatpush.msra.mxu0 %v1099
        %3066 = vmatpush.msra.mxu0 %v1095
        %3067 = vmatpush.msra.mxu0 %v1091
        %3068 = vmatpush.msra.mxu0 %v1087
        %3069 = vmatmul.f32.gmra.mxu0 %v1121
        %v3070 = vpop.f32.mrf.mxu0
        %v3071 = vadd.f32 %v3006, %v3070
        %3072 = vmatmul.f32.gmra.mxu0 %v1124
        %v3073 = vpop.f32.mrf.mxu0
        %v3074 = vadd.f32 %v3009, %v3073
        %3075 = vmatmul.f32.gmra.mxu0 %v1127
        %v3076 = vpop.f32.mrf.mxu0
        %v3077 = vadd.f32 %v3012, %v3076
        %3078 = vmatmul.f32.gmra.mxu0 %v1130
        %v3079 = vpop.f32.mrf.mxu0
        %v3080 = vadd.f32 %v3015, %v3079
        %3081 = vmatmul.f32.gmra.mxu0 %v1133
        %v3082 = vpop.f32.mrf.mxu0
        %v3083 = vadd.f32 %v3018, %v3082
        %3084 = vmatmul.f32.gmra.mxu0 %v1136
        %v3085 = vpop.f32.mrf.mxu0
        %v3086 = vadd.f32 %v3021, %v3085
        %3087 = vmatmul.f32.gmra.mxu0 %v1139
        %v3088 = vpop.f32.mrf.mxu0
        %v3089 = vadd.f32 %v3024, %v3088
        %3090 = vmatmul.f32.gmra.mxu0 %v1142
        %v3091 = vpop.f32.mrf.mxu0
        %v3092 = vadd.f32 %v3027, %v3091
        %3093 = vmatmul.f32.gmra.mxu0 %v1145
        %v3094 = vpop.f32.mrf.mxu0
        %v3095 = vadd.f32 %v3030, %v3094
        %3096 = vmatmul.f32.gmra.mxu0 %v1148
        %v3097 = vpop.f32.mrf.mxu0
        %v3098 = vadd.f32 %v3033, %v3097
        %3099 = vmatmul.f32.gmra.mxu0 %v1151
        %v3100 = vpop.f32.mrf.mxu0
        %v3101 = vadd.f32 %v3036, %v3100
        %3102 = vmatmul.f32.gmra.mxu0 %v1154
        %v3103 = vpop.f32.mrf.mxu0
        %v3104 = vadd.f32 %v3039, %v3103
        %3105 = vmatmul.f32.gmra.mxu0 %v1157
        %v3106 = vpop.f32.mrf.mxu0
        %v3107 = vadd.f32 %v3042, %v3106
        %3108 = vmatmul.f32.gmra.mxu0 %v1160
        %v3109 = vpop.f32.mrf.mxu0
        %v3110 = vadd.f32 %v3045, %v3109
        %3111 = vmatmul.f32.gmra.mxu0 %v1163
        %v3112 = vpop.f32.mrf.mxu0
        %v3113 = vadd.f32 %v3048, %v3112
        %3114 = vmatmul.f32.gmra.mxu0 %v1166
        %v3115 = vpop.f32.mrf.mxu0
        %v3116 = vadd.f32 %v3051, %v3115
        %3117 = vdwg.mxu0
        %3118 = vmatpush.msra.mxu0 %v572
        %3119 = vmatpush.msra.mxu0 %v568
        %3120 = vmatpush.msra.mxu0 %v564
        %3121 = vmatpush.msra.mxu0 %v560
        %3122 = vmatpush.msra.mxu0 %v556
        %3123 = vmatpush.msra.mxu0 %v552
        %3124 = vmatpush.msra.mxu0 %v548
        %3125 = vmatpush.msra.mxu0 %v544
        %3126 = vmatpush.msra.mxu0 %v540
        %3127 = vmatpush.msra.mxu0 %v536
        %3128 = vmatpush.msra.mxu0 %v532
        %3129 = vmatpush.msra.mxu0 %v528
        %3130 = vmatpush.msra.mxu0 %v524
        %3131 = vmatpush.msra.mxu0 %v520
        %3132 = vmatpush.msra.mxu0 %v516
        %3133 = vmatpush.msra.mxu0 %v512
        %3134 = vmatmul.f32.gmra.mxu0 %v349
        %v3135 = vpop.f32.mrf.mxu0
        %v3136 = vadd.f32 %v1114, %v3135
        %3137 = vmatmul.f32.gmra.mxu0 %v359
        %v3138 = vpop.f32.mrf.mxu0
        %v3139 = vadd.f32 %v1114, %v3138
        %3140 = vmatmul.f32.gmra.mxu0 %v369
        %v3141 = vpop.f32.mrf.mxu0
        %v3142 = vadd.f32 %v1114, %v3141
        %3143 = vmatmul.f32.gmra.mxu0 %v379
        %v3144 = vpop.f32.mrf.mxu0
        %v3145 = vadd.f32 %v1114, %v3144
        %3146 = vmatmul.f32.gmra.mxu0 %v389
        %v3147 = vpop.f32.mrf.mxu0
        %v3148 = vadd.f32 %v1114, %v3147
        %3149 = vmatmul.f32.gmra.mxu0 %v399
        %v3150 = vpop.f32.mrf.mxu0
        %v3151 = vadd.f32 %v1114, %v3150
        %3152 = vmatmul.f32.gmra.mxu0 %v409
        %v3153 = vpop.f32.mrf.mxu0
        %v3154 = vadd.f32 %v1114, %v3153
        %3155 = vmatmul.f32.gmra.mxu0 %v419
        %v3156 = vpop.f32.mrf.mxu0
        %v3157 = vadd.f32 %v1114, %v3156
        %3158 = vmatmul.f32.gmra.mxu0 %v429
        %v3159 = vpop.f32.mrf.mxu0
        %v3160 = vadd.f32 %v1114, %v3159
        %3161 = vmatmul.f32.gmra.mxu0 %v439
        %v3162 = vpop.f32.mrf.mxu0
        %v3163 = vadd.f32 %v1114, %v3162
        %3164 = vmatmul.f32.gmra.mxu0 %v449
        %v3165 = vpop.f32.mrf.mxu0
        %v3166 = vadd.f32 %v1114, %v3165
        %3167 = vmatmul.f32.gmra.mxu0 %v459
        %v3168 = vpop.f32.mrf.mxu0
        %v3169 = vadd.f32 %v1114, %v3168
        %3170 = vmatmul.f32.gmra.mxu0 %v469
        %v3171 = vpop.f32.mrf.mxu0
        %v3172 = vadd.f32 %v1114, %v3171
        %3173 = vmatmul.f32.gmra.mxu0 %v479
        %v3174 = vpop.f32.mrf.mxu0
        %v3175 = vadd.f32 %v1114, %v3174
        %3176 = vmatmul.f32.gmra.mxu0 %v489
        %v3177 = vpop.f32.mrf.mxu0
        %v3178 = vadd.f32 %v1114, %v3177
        %3179 = vmatmul.f32.gmra.mxu0 %v499
        %v3180 = vpop.f32.mrf.mxu0
        %v3181 = vadd.f32 %v1114, %v3180
        %3182 = vdwg.mxu0
        %3183 = vmatpush.msra.mxu0 %v636
        %3184 = vmatpush.msra.mxu0 %v632
        %3185 = vmatpush.msra.mxu0 %v628
        %3186 = vmatpush.msra.mxu0 %v624
        %3187 = vmatpush.msra.mxu0 %v620
        %3188 = vmatpush.msra.mxu0 %v616
        %3189 = vmatpush.msra.mxu0 %v612
        %3190 = vmatpush.msra.mxu0 %v608
        %3191 = vmatpush.msra.mxu0 %v604
        %3192 = vmatpush.msra.mxu0 %v600
        %3193 = vmatpush.msra.mxu0 %v596
        %3194 = vmatpush.msra.mxu0 %v592
        %3195 = vmatpush.msra.mxu0 %v588
        %3196 = vmatpush.msra.mxu0 %v584
        %3197 = vmatpush.msra.mxu0 %v580
        %3198 = vmatpush.msra.mxu0 %v576
        %3199 = vmatmul.f32.gmra.mxu0 %v350
        %v3200 = vpop.f32.mrf.mxu0
        %v3201 = vadd.f32 %v3136, %v3200
        %3202 = vmatmul.f32.gmra.mxu0 %v360
        %v3203 = vpop.f32.mrf.mxu0
        %v3204 = vadd.f32 %v3139, %v3203
        %3205 = vmatmul.f32.gmra.mxu0 %v370
        %v3206 = vpop.f32.mrf.mxu0
        %v3207 = vadd.f32 %v3142, %v3206
        %3208 = vmatmul.f32.gmra.mxu0 %v380
        %v3209 = vpop.f32.mrf.mxu0
        %v3210 = vadd.f32 %v3145, %v3209
        %3211 = vmatmul.f32.gmra.mxu0 %v390
        %v3212 = vpop.f32.mrf.mxu0
        %v3213 = vadd.f32 %v3148, %v3212
        %3214 = vmatmul.f32.gmra.mxu0 %v400
        %v3215 = vpop.f32.mrf.mxu0
        %v3216 = vadd.f32 %v3151, %v3215
        %3217 = vmatmul.f32.gmra.mxu0 %v410
        %v3218 = vpop.f32.mrf.mxu0
        %v3219 = vadd.f32 %v3154, %v3218
        %3220 = vmatmul.f32.gmra.mxu0 %v420
        %v3221 = vpop.f32.mrf.mxu0
        %v3222 = vadd.f32 %v3157, %v3221
        %3223 = vmatmul.f32.gmra.mxu0 %v430
        %v3224 = vpop.f32.mrf.mxu0
        %v3225 = vadd.f32 %v3160, %v3224
        %3226 = vmatmul.f32.gmra.mxu0 %v440
        %v3227 = vpop.f32.mrf.mxu0
        %v3228 = vadd.f32 %v3163, %v3227
        %3229 = vmatmul.f32.gmra.mxu0 %v450
        %v3230 = vpop.f32.mrf.mxu0
        %v3231 = vadd.f32 %v3166, %v3230
        %3232 = vmatmul.f32.gmra.mxu0 %v460
        %v3233 = vpop.f32.mrf.mxu0
        %v3234 = vadd.f32 %v3169, %v3233
        %3235 = vmatmul.f32.gmra.mxu0 %v470
        %v3236 = vpop.f32.mrf.mxu0
        %v3237 = vadd.f32 %v3172, %v3236
        %3238 = vmatmul.f32.gmra.mxu0 %v480
        %v3239 = vpop.f32.mrf.mxu0
        %v3240 = vadd.f32 %v3175, %v3239
        %3241 = vmatmul.f32.gmra.mxu0 %v490
        %v3242 = vpop.f32.mrf.mxu0
        %v3243 = vadd.f32 %v3178, %v3242
        %3244 = vmatmul.f32.gmra.mxu0 %v500
        %v3245 = vpop.f32.mrf.mxu0
        %v3246 = vadd.f32 %v3181, %v3245
        %3247 = vdwg.mxu0
        %3248 = vmatpush.msra.mxu0 %v700
        %3249 = vmatpush.msra.mxu0 %v696
        %3250 = vmatpush.msra.mxu0 %v692
        %3251 = vmatpush.msra.mxu0 %v688
        %3252 = vmatpush.msra.mxu0 %v684
        %3253 = vmatpush.msra.mxu0 %v680
        %3254 = vmatpush.msra.mxu0 %v676
        %3255 = vmatpush.msra.mxu0 %v672
        %3256 = vmatpush.msra.mxu0 %v668
        %3257 = vmatpush.msra.mxu0 %v664
        %3258 = vmatpush.msra.mxu0 %v660
        %3259 = vmatpush.msra.mxu0 %v656
        %3260 = vmatpush.msra.mxu0 %v652
        %3261 = vmatpush.msra.mxu0 %v648
        %3262 = vmatpush.msra.mxu0 %v644
        %3263 = vmatpush.msra.mxu0 %v640
        %3264 = vmatmul.f32.gmra.mxu0 %v351
        %v3265 = vpop.f32.mrf.mxu0
        %v3266 = vadd.f32 %v3201, %v3265
        %3267 = vmatmul.f32.gmra.mxu0 %v361
        %v3268 = vpop.f32.mrf.mxu0
        %v3269 = vadd.f32 %v3204, %v3268
        %3270 = vmatmul.f32.gmra.mxu0 %v371
        %v3271 = vpop.f32.mrf.mxu0
        %v3272 = vadd.f32 %v3207, %v3271
        %3273 = vmatmul.f32.gmra.mxu0 %v381
        %v3274 = vpop.f32.mrf.mxu0
        %v3275 = vadd.f32 %v3210, %v3274
        %3276 = vmatmul.f32.gmra.mxu0 %v391
        %v3277 = vpop.f32.mrf.mxu0
        %v3278 = vadd.f32 %v3213, %v3277
        %3279 = vmatmul.f32.gmra.mxu0 %v401
        %v3280 = vpop.f32.mrf.mxu0
        %v3281 = vadd.f32 %v3216, %v3280
        %3282 = vmatmul.f32.gmra.mxu0 %v411
        %v3283 = vpop.f32.mrf.mxu0
        %v3284 = vadd.f32 %v3219, %v3283
        %3285 = vmatmul.f32.gmra.mxu0 %v421
        %v3286 = vpop.f32.mrf.mxu0
        %v3287 = vadd.f32 %v3222, %v3286
        %3288 = vmatmul.f32.gmra.mxu0 %v431
        %v3289 = vpop.f32.mrf.mxu0
        %v3290 = vadd.f32 %v3225, %v3289
        %3291 = vmatmul.f32.gmra.mxu0 %v441
        %v3292 = vpop.f32.mrf.mxu0
        %v3293 = vadd.f32 %v3228, %v3292
        %3294 = vmatmul.f32.gmra.mxu0 %v451
        %v3295 = vpop.f32.mrf.mxu0
        %v3296 = vadd.f32 %v3231, %v3295
        %3297 = vmatmul.f32.gmra.mxu0 %v461
        %v3298 = vpop.f32.mrf.mxu0
        %v3299 = vadd.f32 %v3234, %v3298
        %3300 = vmatmul.f32.gmra.mxu0 %v471
        %v3301 = vpop.f32.mrf.mxu0
        %v3302 = vadd.f32 %v3237, %v3301
        %3303 = vmatmul.f32.gmra.mxu0 %v481
        %v3304 = vpop.f32.mrf.mxu0
        %v3305 = vadd.f32 %v3240, %v3304
        %3306 = vmatmul.f32.gmra.mxu0 %v491
        %v3307 = vpop.f32.mrf.mxu0
        %v3308 = vadd.f32 %v3243, %v3307
        %3309 = vmatmul.f32.gmra.mxu0 %v501
        %v3310 = vpop.f32.mrf.mxu0
        %v3311 = vadd.f32 %v3246, %v3310
        %3312 = vdwg.mxu0
        %3313 = vmatpush.msra.mxu0 %v764
        %3314 = vmatpush.msra.mxu0 %v760
        %3315 = vmatpush.msra.mxu0 %v756
        %3316 = vmatpush.msra.mxu0 %v752
        %3317 = vmatpush.msra.mxu0 %v748
        %3318 = vmatpush.msra.mxu0 %v744
        %3319 = vmatpush.msra.mxu0 %v740
        %3320 = vmatpush.msra.mxu0 %v736
        %3321 = vmatpush.msra.mxu0 %v732
        %3322 = vmatpush.msra.mxu0 %v728
        %3323 = vmatpush.msra.mxu0 %v724
        %3324 = vmatpush.msra.mxu0 %v720
        %3325 = vmatpush.msra.mxu0 %v716
        %3326 = vmatpush.msra.mxu0 %v712
        %3327 = vmatpush.msra.mxu0 %v708
        %3328 = vmatpush.msra.mxu0 %v704
        %3329 = vmatmul.f32.gmra.mxu0 %v352
        %v3330 = vpop.f32.mrf.mxu0
        %v3331 = vadd.f32 %v3266, %v3330
        %3332 = vmatmul.f32.gmra.mxu0 %v362
        %v3333 = vpop.f32.mrf.mxu0
        %v3334 = vadd.f32 %v3269, %v3333
        %3335 = vmatmul.f32.gmra.mxu0 %v372
        %v3336 = vpop.f32.mrf.mxu0
        %v3337 = vadd.f32 %v3272, %v3336
        %3338 = vmatmul.f32.gmra.mxu0 %v382
        %v3339 = vpop.f32.mrf.mxu0
        %v3340 = vadd.f32 %v3275, %v3339
        %3341 = vmatmul.f32.gmra.mxu0 %v392
        %v3342 = vpop.f32.mrf.mxu0
        %v3343 = vadd.f32 %v3278, %v3342
        %3344 = vmatmul.f32.gmra.mxu0 %v402
        %v3345 = vpop.f32.mrf.mxu0
        %v3346 = vadd.f32 %v3281, %v3345
        %3347 = vmatmul.f32.gmra.mxu0 %v412
        %v3348 = vpop.f32.mrf.mxu0
        %v3349 = vadd.f32 %v3284, %v3348
        %3350 = vmatmul.f32.gmra.mxu0 %v422
        %v3351 = vpop.f32.mrf.mxu0
        %v3352 = vadd.f32 %v3287, %v3351
        %3353 = vmatmul.f32.gmra.mxu0 %v432
        %v3354 = vpop.f32.mrf.mxu0
        %v3355 = vadd.f32 %v3290, %v3354
        %3356 = vmatmul.f32.gmra.mxu0 %v442
        %v3357 = vpop.f32.mrf.mxu0
        %v3358 = vadd.f32 %v3293, %v3357
        %3359 = vmatmul.f32.gmra.mxu0 %v452
        %v3360 = vpop.f32.mrf.mxu0
        %v3361 = vadd.f32 %v3296, %v3360
        %3362 = vmatmul.f32.gmra.mxu0 %v462
        %v3363 = vpop.f32.mrf.mxu0
        %v3364 = vadd.f32 %v3299, %v3363
        %3365 = vmatmul.f32.gmra.mxu0 %v472
        %v3366 = vpop.f32.mrf.mxu0
        %v3367 = vadd.f32 %v3302, %v3366
        %3368 = vmatmul.f32.gmra.mxu0 %v482
        %v3369 = vpop.f32.mrf.mxu0
        %v3370 = vadd.f32 %v3305, %v3369
        %3371 = vmatmul.f32.gmra.mxu0 %v492
        %v3372 = vpop.f32.mrf.mxu0
        %v3373 = vadd.f32 %v3308, %v3372
        %3374 = vmatmul.f32.gmra.mxu0 %v502
        %v3375 = vpop.f32.mrf.mxu0
        %v3376 = vadd.f32 %v3311, %v3375
        %3377 = vdwg.mxu0
        %3378 = vmatpush.msra.mxu0 %v828
        %3379 = vmatpush.msra.mxu0 %v824
        %3380 = vmatpush.msra.mxu0 %v820
        %3381 = vmatpush.msra.mxu0 %v816
        %3382 = vmatpush.msra.mxu0 %v812
        %3383 = vmatpush.msra.mxu0 %v808
        %3384 = vmatpush.msra.mxu0 %v804
        %3385 = vmatpush.msra.mxu0 %v800
        %3386 = vmatpush.msra.mxu0 %v796
        %3387 = vmatpush.msra.mxu0 %v792
        %3388 = vmatpush.msra.mxu0 %v788
        %3389 = vmatpush.msra.mxu0 %v784
        %3390 = vmatpush.msra.mxu0 %v780
        %3391 = vmatpush.msra.mxu0 %v776
        %3392 = vmatpush.msra.mxu0 %v772
        %3393 = vmatpush.msra.mxu0 %v768
        %3394 = vmatmul.f32.gmra.mxu0 %v353
        %v3395 = vpop.f32.mrf.mxu0
        %v3396 = vadd.f32 %v3331, %v3395
        %3397 = vmatmul.f32.gmra.mxu0 %v363
        %v3398 = vpop.f32.mrf.mxu0
        %v3399 = vadd.f32 %v3334, %v3398
        %3400 = vmatmul.f32.gmra.mxu0 %v373
        %v3401 = vpop.f32.mrf.mxu0
        %v3402 = vadd.f32 %v3337, %v3401
        %3403 = vmatmul.f32.gmra.mxu0 %v383
        %v3404 = vpop.f32.mrf.mxu0
        %v3405 = vadd.f32 %v3340, %v3404
        %3406 = vmatmul.f32.gmra.mxu0 %v393
        %v3407 = vpop.f32.mrf.mxu0
        %v3408 = vadd.f32 %v3343, %v3407
        %3409 = vmatmul.f32.gmra.mxu0 %v403
        %v3410 = vpop.f32.mrf.mxu0
        %v3411 = vadd.f32 %v3346, %v3410
        %3412 = vmatmul.f32.gmra.mxu0 %v413
        %v3413 = vpop.f32.mrf.mxu0
        %v3414 = vadd.f32 %v3349, %v3413
        %3415 = vmatmul.f32.gmra.mxu0 %v423
        %v3416 = vpop.f32.mrf.mxu0
        %v3417 = vadd.f32 %v3352, %v3416
        %3418 = vmatmul.f32.gmra.mxu0 %v433
        %v3419 = vpop.f32.mrf.mxu0
        %v3420 = vadd.f32 %v3355, %v3419
        %3421 = vmatmul.f32.gmra.mxu0 %v443
        %v3422 = vpop.f32.mrf.mxu0
        %v3423 = vadd.f32 %v3358, %v3422
        %3424 = vmatmul.f32.gmra.mxu0 %v453
        %v3425 = vpop.f32.mrf.mxu0
        %v3426 = vadd.f32 %v3361, %v3425
        %3427 = vmatmul.f32.gmra.mxu0 %v463
        %v3428 = vpop.f32.mrf.mxu0
        %v3429 = vadd.f32 %v3364, %v3428
        %3430 = vmatmul.f32.gmra.mxu0 %v473
        %v3431 = vpop.f32.mrf.mxu0
        %v3432 = vadd.f32 %v3367, %v3431
        %3433 = vmatmul.f32.gmra.mxu0 %v483
        %v3434 = vpop.f32.mrf.mxu0
        %v3435 = vadd.f32 %v3370, %v3434
        %3436 = vmatmul.f32.gmra.mxu0 %v493
        %v3437 = vpop.f32.mrf.mxu0
        %v3438 = vadd.f32 %v3373, %v3437
        %3439 = vmatmul.f32.gmra.mxu0 %v503
        %v3440 = vpop.f32.mrf.mxu0
        %v3441 = vadd.f32 %v3376, %v3440
        %3442 = vdwg.mxu0
        %3443 = vmatpush.msra.mxu0 %v892
        %3444 = vmatpush.msra.mxu0 %v888
        %3445 = vmatpush.msra.mxu0 %v884
        %3446 = vmatpush.msra.mxu0 %v880
        %3447 = vmatpush.msra.mxu0 %v876
        %3448 = vmatpush.msra.mxu0 %v872
        %3449 = vmatpush.msra.mxu0 %v868
        %3450 = vmatpush.msra.mxu0 %v864
        %3451 = vmatpush.msra.mxu0 %v860
        %3452 = vmatpush.msra.mxu0 %v856
        %3453 = vmatpush.msra.mxu0 %v852
        %3454 = vmatpush.msra.mxu0 %v848
        %3455 = vmatpush.msra.mxu0 %v844
        %3456 = vmatpush.msra.mxu0 %v840
        %3457 = vmatpush.msra.mxu0 %v836
        %3458 = vmatpush.msra.mxu0 %v832
        %3459 = vmatmul.f32.gmra.mxu0 %v354
        %v3460 = vpop.f32.mrf.mxu0
        %v3461 = vadd.f32 %v3396, %v3460
        %3462 = vmatmul.f32.gmra.mxu0 %v364
        %v3463 = vpop.f32.mrf.mxu0
        %v3464 = vadd.f32 %v3399, %v3463
        %3465 = vmatmul.f32.gmra.mxu0 %v374
        %v3466 = vpop.f32.mrf.mxu0
        %v3467 = vadd.f32 %v3402, %v3466
        %3468 = vmatmul.f32.gmra.mxu0 %v384
        %v3469 = vpop.f32.mrf.mxu0
        %v3470 = vadd.f32 %v3405, %v3469
        %3471 = vmatmul.f32.gmra.mxu0 %v394
        %v3472 = vpop.f32.mrf.mxu0
        %v3473 = vadd.f32 %v3408, %v3472
        %3474 = vmatmul.f32.gmra.mxu0 %v404
        %v3475 = vpop.f32.mrf.mxu0
        %v3476 = vadd.f32 %v3411, %v3475
        %3477 = vmatmul.f32.gmra.mxu0 %v414
        %v3478 = vpop.f32.mrf.mxu0
        %v3479 = vadd.f32 %v3414, %v3478
        %3480 = vmatmul.f32.gmra.mxu0 %v424
        %v3481 = vpop.f32.mrf.mxu0
        %v3482 = vadd.f32 %v3417, %v3481
        %3483 = vmatmul.f32.gmra.mxu0 %v434
        %v3484 = vpop.f32.mrf.mxu0
        %v3485 = vadd.f32 %v3420, %v3484
        %3486 = vmatmul.f32.gmra.mxu0 %v444
        %v3487 = vpop.f32.mrf.mxu0
        %v3488 = vadd.f32 %v3423, %v3487
        %3489 = vmatmul.f32.gmra.mxu0 %v454
        %v3490 = vpop.f32.mrf.mxu0
        %v3491 = vadd.f32 %v3426, %v3490
        %3492 = vmatmul.f32.gmra.mxu0 %v464
        %v3493 = vpop.f32.mrf.mxu0
        %v3494 = vadd.f32 %v3429, %v3493
        %3495 = vmatmul.f32.gmra.mxu0 %v474
        %v3496 = vpop.f32.mrf.mxu0
        %v3497 = vadd.f32 %v3432, %v3496
        %3498 = vmatmul.f32.gmra.mxu0 %v484
        %v3499 = vpop.f32.mrf.mxu0
        %v3500 = vadd.f32 %v3435, %v3499
        %3501 = vmatmul.f32.gmra.mxu0 %v494
        %v3502 = vpop.f32.mrf.mxu0
        %v3503 = vadd.f32 %v3438, %v3502
        %3504 = vmatmul.f32.gmra.mxu0 %v504
        %v3505 = vpop.f32.mrf.mxu0
        %v3506 = vadd.f32 %v3441, %v3505
        %3507 = vdwg.mxu0
        %3508 = vmatpush.msra.mxu0 %v956
        %3509 = vmatpush.msra.mxu0 %v952
        %3510 = vmatpush.msra.mxu0 %v948
        %3511 = vmatpush.msra.mxu0 %v944
        %3512 = vmatpush.msra.mxu0 %v940
        %3513 = vmatpush.msra.mxu0 %v936
        %3514 = vmatpush.msra.mxu0 %v932
        %3515 = vmatpush.msra.mxu0 %v928
        %3516 = vmatpush.msra.mxu0 %v924
        %3517 = vmatpush.msra.mxu0 %v920
        %3518 = vmatpush.msra.mxu0 %v916
        %3519 = vmatpush.msra.mxu0 %v912
        %3520 = vmatpush.msra.mxu0 %v908
        %3521 = vmatpush.msra.mxu0 %v904
        %3522 = vmatpush.msra.mxu0 %v900
        %3523 = vmatpush.msra.mxu0 %v896
        %3524 = vmatmul.f32.gmra.mxu0 %v355
        %v3525 = vpop.f32.mrf.mxu0
        %v3526 = vadd.f32 %v3461, %v3525
        %3527 = vmatmul.f32.gmra.mxu0 %v365
        %v3528 = vpop.f32.mrf.mxu0
        %v3529 = vadd.f32 %v3464, %v3528
        %3530 = vmatmul.f32.gmra.mxu0 %v375
        %v3531 = vpop.f32.mrf.mxu0
        %v3532 = vadd.f32 %v3467, %v3531
        %3533 = vmatmul.f32.gmra.mxu0 %v385
        %v3534 = vpop.f32.mrf.mxu0
        %v3535 = vadd.f32 %v3470, %v3534
        %3536 = vmatmul.f32.gmra.mxu0 %v395
        %v3537 = vpop.f32.mrf.mxu0
        %v3538 = vadd.f32 %v3473, %v3537
        %3539 = vmatmul.f32.gmra.mxu0 %v405
        %v3540 = vpop.f32.mrf.mxu0
        %v3541 = vadd.f32 %v3476, %v3540
        %3542 = vmatmul.f32.gmra.mxu0 %v415
        %v3543 = vpop.f32.mrf.mxu0
        %v3544 = vadd.f32 %v3479, %v3543
        %3545 = vmatmul.f32.gmra.mxu0 %v425
        %v3546 = vpop.f32.mrf.mxu0
        %v3547 = vadd.f32 %v3482, %v3546
        %3548 = vmatmul.f32.gmra.mxu0 %v435
        %v3549 = vpop.f32.mrf.mxu0
        %v3550 = vadd.f32 %v3485, %v3549
        %3551 = vmatmul.f32.gmra.mxu0 %v445
        %v3552 = vpop.f32.mrf.mxu0
        %v3553 = vadd.f32 %v3488, %v3552
        %3554 = vmatmul.f32.gmra.mxu0 %v455
        %v3555 = vpop.f32.mrf.mxu0
        %v3556 = vadd.f32 %v3491, %v3555
        %3557 = vmatmul.f32.gmra.mxu0 %v465
        %v3558 = vpop.f32.mrf.mxu0
        %v3559 = vadd.f32 %v3494, %v3558
        %3560 = vmatmul.f32.gmra.mxu0 %v475
        %v3561 = vpop.f32.mrf.mxu0
        %v3562 = vadd.f32 %v3497, %v3561
        %3563 = vmatmul.f32.gmra.mxu0 %v485
        %v3564 = vpop.f32.mrf.mxu0
        %v3565 = vadd.f32 %v3500, %v3564
        %3566 = vmatmul.f32.gmra.mxu0 %v495
        %v3567 = vpop.f32.mrf.mxu0
        %v3568 = vadd.f32 %v3503, %v3567
        %3569 = vmatmul.f32.gmra.mxu0 %v505
        %v3570 = vpop.f32.mrf.mxu0
        %v3571 = vadd.f32 %v3506, %v3570
        %3572 = vdwg.mxu0
        %3573 = vmatpush.msra.mxu0 %v1020
        %3574 = vmatpush.msra.mxu0 %v1016
        %3575 = vmatpush.msra.mxu0 %v1012
        %3576 = vmatpush.msra.mxu0 %v1008
        %3577 = vmatpush.msra.mxu0 %v1004
        %3578 = vmatpush.msra.mxu0 %v1000
        %3579 = vmatpush.msra.mxu0 %v996
        %3580 = vmatpush.msra.mxu0 %v992
        %3581 = vmatpush.msra.mxu0 %v988
        %3582 = vmatpush.msra.mxu0 %v984
        %3583 = vmatpush.msra.mxu0 %v980
        %3584 = vmatpush.msra.mxu0 %v976
        %3585 = vmatpush.msra.mxu0 %v972
        %3586 = vmatpush.msra.mxu0 %v968
        %3587 = vmatpush.msra.mxu0 %v964
        %3588 = vmatpush.msra.mxu0 %v960
        %3589 = vmatmul.f32.gmra.mxu0 %v356
        %v3590 = vpop.f32.mrf.mxu0
        %v3591 = vadd.f32 %v3526, %v3590
        %3592 = vmatmul.f32.gmra.mxu0 %v366
        %v3593 = vpop.f32.mrf.mxu0
        %v3594 = vadd.f32 %v3529, %v3593
        %3595 = vmatmul.f32.gmra.mxu0 %v376
        %v3596 = vpop.f32.mrf.mxu0
        %v3597 = vadd.f32 %v3532, %v3596
        %3598 = vmatmul.f32.gmra.mxu0 %v386
        %v3599 = vpop.f32.mrf.mxu0
        %v3600 = vadd.f32 %v3535, %v3599
        %3601 = vmatmul.f32.gmra.mxu0 %v396
        %v3602 = vpop.f32.mrf.mxu0
        %v3603 = vadd.f32 %v3538, %v3602
        %3604 = vmatmul.f32.gmra.mxu0 %v406
        %v3605 = vpop.f32.mrf.mxu0
        %v3606 = vadd.f32 %v3541, %v3605
        %3607 = vmatmul.f32.gmra.mxu0 %v416
        %v3608 = vpop.f32.mrf.mxu0
        %v3609 = vadd.f32 %v3544, %v3608
        %3610 = vmatmul.f32.gmra.mxu0 %v426
        %v3611 = vpop.f32.mrf.mxu0
        %v3612 = vadd.f32 %v3547, %v3611
        %3613 = vmatmul.f32.gmra.mxu0 %v436
        %v3614 = vpop.f32.mrf.mxu0
        %v3615 = vadd.f32 %v3550, %v3614
        %3616 = vmatmul.f32.gmra.mxu0 %v446
        %v3617 = vpop.f32.mrf.mxu0
        %v3618 = vadd.f32 %v3553, %v3617
        %3619 = vmatmul.f32.gmra.mxu0 %v456
        %v3620 = vpop.f32.mrf.mxu0
        %v3621 = vadd.f32 %v3556, %v3620
        %3622 = vmatmul.f32.gmra.mxu0 %v466
        %v3623 = vpop.f32.mrf.mxu0
        %v3624 = vadd.f32 %v3559, %v3623
        %3625 = vmatmul.f32.gmra.mxu0 %v476
        %v3626 = vpop.f32.mrf.mxu0
        %v3627 = vadd.f32 %v3562, %v3626
        %3628 = vmatmul.f32.gmra.mxu0 %v486
        %v3629 = vpop.f32.mrf.mxu0
        %v3630 = vadd.f32 %v3565, %v3629
        %3631 = vmatmul.f32.gmra.mxu0 %v496
        %v3632 = vpop.f32.mrf.mxu0
        %v3633 = vadd.f32 %v3568, %v3632
        %3634 = vmatmul.f32.gmra.mxu0 %v506
        %v3635 = vpop.f32.mrf.mxu0
        %v3636 = vadd.f32 %v3571, %v3635
        %3637 = vdwg.mxu0
        %3638 = vmatpush.msra.mxu0 %v1084
        %3639 = vmatpush.msra.mxu0 %v1080
        %3640 = vmatpush.msra.mxu0 %v1076
        %3641 = vmatpush.msra.mxu0 %v1072
        %3642 = vmatpush.msra.mxu0 %v1068
        %3643 = vmatpush.msra.mxu0 %v1064
        %3644 = vmatpush.msra.mxu0 %v1060
        %3645 = vmatpush.msra.mxu0 %v1056
        %3646 = vmatpush.msra.mxu0 %v1052
        %3647 = vmatpush.msra.mxu0 %v1048
        %3648 = vmatpush.msra.mxu0 %v1044
        %3649 = vmatpush.msra.mxu0 %v1040
        %3650 = vmatpush.msra.mxu0 %v1036
        %3651 = vmatpush.msra.mxu0 %v1032
        %3652 = vmatpush.msra.mxu0 %v1028
        %3653 = vmatpush.msra.mxu0 %v1024
        %3654 = vmatmul.f32.gmra.mxu0 %v357
        %v3655 = vpop.f32.mrf.mxu0
        %v3656 = vadd.f32 %v3591, %v3655
        %3657 = vmatmul.f32.gmra.mxu0 %v367
        %v3658 = vpop.f32.mrf.mxu0
        %v3659 = vadd.f32 %v3594, %v3658
        %3660 = vmatmul.f32.gmra.mxu0 %v377
        %v3661 = vpop.f32.mrf.mxu0
        %v3662 = vadd.f32 %v3597, %v3661
        %3663 = vmatmul.f32.gmra.mxu0 %v387
        %v3664 = vpop.f32.mrf.mxu0
        %v3665 = vadd.f32 %v3600, %v3664
        %3666 = vmatmul.f32.gmra.mxu0 %v397
        %v3667 = vpop.f32.mrf.mxu0
        %v3668 = vadd.f32 %v3603, %v3667
        %3669 = vmatmul.f32.gmra.mxu0 %v407
        %v3670 = vpop.f32.mrf.mxu0
        %v3671 = vadd.f32 %v3606, %v3670
        %3672 = vmatmul.f32.gmra.mxu0 %v417
        %v3673 = vpop.f32.mrf.mxu0
        %v3674 = vadd.f32 %v3609, %v3673
        %3675 = vmatmul.f32.gmra.mxu0 %v427
        %v3676 = vpop.f32.mrf.mxu0
        %v3677 = vadd.f32 %v3612, %v3676
        %3678 = vmatmul.f32.gmra.mxu0 %v437
        %v3679 = vpop.f32.mrf.mxu0
        %v3680 = vadd.f32 %v3615, %v3679
        %3681 = vmatmul.f32.gmra.mxu0 %v447
        %v3682 = vpop.f32.mrf.mxu0
        %v3683 = vadd.f32 %v3618, %v3682
        %3684 = vmatmul.f32.gmra.mxu0 %v457
        %v3685 = vpop.f32.mrf.mxu0
        %v3686 = vadd.f32 %v3621, %v3685
        %3687 = vmatmul.f32.gmra.mxu0 %v467
        %v3688 = vpop.f32.mrf.mxu0
        %v3689 = vadd.f32 %v3624, %v3688
        %3690 = vmatmul.f32.gmra.mxu0 %v477
        %v3691 = vpop.f32.mrf.mxu0
        %v3692 = vadd.f32 %v3627, %v3691
        %3693 = vmatmul.f32.gmra.mxu0 %v487
        %v3694 = vpop.f32.mrf.mxu0
        %v3695 = vadd.f32 %v3630, %v3694
        %3696 = vmatmul.f32.gmra.mxu0 %v497
        %v3697 = vpop.f32.mrf.mxu0
        %v3698 = vadd.f32 %v3633, %v3697
        %3699 = vmatmul.f32.gmra.mxu0 %v507
        %v3700 = vpop.f32.mrf.mxu0
        %v3701 = vadd.f32 %v3636, %v3700
        %3702 = vdwg.mxu0
        %3703 = vmatpush.msra.mxu0 0.0
        %3704 = vmatpush.msra.mxu0 0.0
        %3705 = vmatpush.msra.mxu0 0.0
        %3706 = vmatpush.msra.mxu0 0.0
        %3707 = vmatpush.msra.mxu0 0.0
        %3708 = vmatpush.msra.mxu0 0.0
        %3709 = vmatpush.msra.mxu0 0.0
        %3710 = vmatpush.msra.mxu0 0.0
        %3711 = vmatpush.msra.mxu0 0.0
        %3712 = vmatpush.msra.mxu0 0.0
        %3713 = vmatpush.msra.mxu0 %v1108
        %3714 = vmatpush.msra.mxu0 %v1104
        %3715 = vmatpush.msra.mxu0 %v1100
        %3716 = vmatpush.msra.mxu0 %v1096
        %3717 = vmatpush.msra.mxu0 %v1092
        %3718 = vmatpush.msra.mxu0 %v1088
        %3719 = vmatmul.f32.gmra.mxu0 %v1121
        %v3720 = vpop.f32.mrf.mxu0
        %v3721 = vadd.f32 %v3656, %v3720
        %3722 = vmatmul.f32.gmra.mxu0 %v1124
        %v3723 = vpop.f32.mrf.mxu0
        %v3724 = vadd.f32 %v3659, %v3723
        %3725 = vmatmul.f32.gmra.mxu0 %v1127
        %v3726 = vpop.f32.mrf.mxu0
        %v3727 = vadd.f32 %v3662, %v3726
        %3728 = vmatmul.f32.gmra.mxu0 %v1130
        %v3729 = vpop.f32.mrf.mxu0
        %v3730 = vadd.f32 %v3665, %v3729
        %3731 = vmatmul.f32.gmra.mxu0 %v1133
        %v3732 = vpop.f32.mrf.mxu0
        %v3733 = vadd.f32 %v3668, %v3732
        %3734 = vmatmul.f32.gmra.mxu0 %v1136
        %v3735 = vpop.f32.mrf.mxu0
        %v3736 = vadd.f32 %v3671, %v3735
        %3737 = vmatmul.f32.gmra.mxu0 %v1139
        %v3738 = vpop.f32.mrf.mxu0
        %v3739 = vadd.f32 %v3674, %v3738
        %3740 = vmatmul.f32.gmra.mxu0 %v1142
        %v3741 = vpop.f32.mrf.mxu0
        %v3742 = vadd.f32 %v3677, %v3741
        %3743 = vmatmul.f32.gmra.mxu0 %v1145
        %v3744 = vpop.f32.mrf.mxu0
        %v3745 = vadd.f32 %v3680, %v3744
        %3746 = vmatmul.f32.gmra.mxu0 %v1148
        %v3747 = vpop.f32.mrf.mxu0
        %v3748 = vadd.f32 %v3683, %v3747
        %3749 = vmatmul.f32.gmra.mxu0 %v1151
        %v3750 = vpop.f32.mrf.mxu0
        %v3751 = vadd.f32 %v3686, %v3750
        %3752 = vmatmul.f32.gmra.mxu0 %v1154
        %v3753 = vpop.f32.mrf.mxu0
        %v3754 = vadd.f32 %v3689, %v3753
        %3755 = vmatmul.f32.gmra.mxu0 %v1157
        %v3756 = vpop.f32.mrf.mxu0
        %v3757 = vadd.f32 %v3692, %v3756
        %3758 = vmatmul.f32.gmra.mxu0 %v1160
        %v3759 = vpop.f32.mrf.mxu0
        %v3760 = vadd.f32 %v3695, %v3759
        %3761 = vmatmul.f32.gmra.mxu0 %v1163
        %v3762 = vpop.f32.mrf.mxu0
        %v3763 = vadd.f32 %v3698, %v3762
        %3764 = vmatmul.f32.gmra.mxu0 %v1166
        %v3765 = vpop.f32.mrf.mxu0
        %v3766 = vadd.f32 %v3701, %v3765
        %3767 = vdwg.mxu0
        %v3768 = vld [vmem:[%s346] sm:$0xff]
        %v3769 = vld [vmem:[%s346 + $0x8] sm:$0xff]
        %v3770 = vld [vmem:[%s346 + $0x10] sm:$0xff]
        %v3771 = vld [vmem:[%s346 + $0x18] sm:$0xff]
        %v3772 = vld [vmem:[%s346 + $0x20] sm:$0xff]
        %v3773 = vld [vmem:[%s346 + $0x28] sm:$0xff]
        %v3774 = vld [vmem:[%s346 + $0x30] sm:$0xff]
        %v3775 = vld [vmem:[%s346 + $0x38] sm:$0xff]
        %v3776 = vld [vmem:[%s346 + $0x40] sm:$0xff]
        %v3777 = vld [vmem:[%s346 + $0x48] sm:$0xff]
        %v3778 = vld [vmem:[%s346 + $0x50] sm:$0xff]
        %v3779 = vld [vmem:[%s346 + $0x58] sm:$0xff]
        %v3780 = vld [vmem:[%s346 + $0x60] sm:$0xff]
        %v3781 = vld [vmem:[%s346 + $0x68] sm:$0xff]
        %v3782 = vld [vmem:[%s346 + $0x70] sm:$0xff]
        %v3783 = vld [vmem:[%s346 + $0x78] sm:$0xff]
        %v3784 = vld [vmem:[%s3] sm:$0xff]
        %v3785 = vld [vmem:[%s3 + $0x8] sm:$0xff]
        %3787 = vset.pattern.permute.xlu0 0
        %3788 = vperm.xlu0 %3787, %v3768
        %v3789 = vpop.permute.xlu0 %3788
        %3792 = vset.pattern.permute.xlu0 0
        %3793 = vperm.xlu0 %3792, %v3769
        %v3794 = vpop.permute.xlu0 %3793
        %3797 = vset.pattern.permute.xlu0 0
        %3798 = vperm.xlu0 %3797, %v3770
        %v3799 = vpop.permute.xlu0 %3798
        %3802 = vset.pattern.permute.xlu0 0
        %3803 = vperm.xlu0 %3802, %v3771
        %v3804 = vpop.permute.xlu0 %3803
        %3807 = vset.pattern.permute.xlu0 0
        %3808 = vperm.xlu0 %3807, %v3772
        %v3809 = vpop.permute.xlu0 %3808
        %3812 = vset.pattern.permute.xlu0 0
        %3813 = vperm.xlu0 %3812, %v3773
        %v3814 = vpop.permute.xlu0 %3813
        %3817 = vset.pattern.permute.xlu0 0
        %3818 = vperm.xlu0 %3817, %v3774
        %v3819 = vpop.permute.xlu0 %3818
        %3822 = vset.pattern.permute.xlu0 0
        %3823 = vperm.xlu0 %3822, %v3775
        %v3824 = vpop.permute.xlu0 %3823
        %3827 = vset.pattern.permute.xlu0 0
        %3828 = vperm.xlu0 %3827, %v3776
        %v3829 = vpop.permute.xlu0 %3828
        %3832 = vset.pattern.permute.xlu0 0
        %3833 = vperm.xlu0 %3832, %v3777
        %v3834 = vpop.permute.xlu0 %3833
        %3837 = vset.pattern.permute.xlu0 0
        %3838 = vperm.xlu0 %3837, %v3778
        %v3839 = vpop.permute.xlu0 %3838
        %3842 = vset.pattern.permute.xlu0 0
        %3843 = vperm.xlu0 %3842, %v3779
        %v3844 = vpop.permute.xlu0 %3843
        %3847 = vset.pattern.permute.xlu0 0
        %3848 = vperm.xlu0 %3847, %v3780
        %v3849 = vpop.permute.xlu0 %3848
        %3852 = vset.pattern.permute.xlu0 0
        %3853 = vperm.xlu0 %3852, %v3781
        %v3854 = vpop.permute.xlu0 %3853
        %3857 = vset.pattern.permute.xlu0 0
        %3858 = vperm.xlu0 %3857, %v3782
        %v3859 = vpop.permute.xlu0 %3858
        %3862 = vset.pattern.permute.xlu0 0
        %3863 = vperm.xlu0 %3862, %v3783
        %v3864 = vpop.permute.xlu0 %3863
        %v3868 = vperm.slane %v3784, 0
        %v3869 = vperm.slane %v3784, 4
        %v3870 = vperm.slane %v3785, 0
        %v3871 = vperm.slane %v3785, 4
        %v3876 = vperm.slane %v3868, 0
        %v3877 = vperm.slane %v3869, 0
        %v3878 = vperm.slane %v3870, 0
        %v3879 = vperm.slane %v3871, 0
        %v3880 = vmul.f32 %v3789, %v3876
        %v3881 = vmul.f32 %v3789, %v3877
        %v3882 = vmul.f32 %v3789, %v3878
        %v3883 = vmul.f32 %v3789, %v3879
        %v3884 = vmul.f32 %v3794, %v3876
        %v3885 = vmul.f32 %v3794, %v3877
        %v3886 = vmul.f32 %v3794, %v3878
        %v3887 = vmul.f32 %v3794, %v3879
        %v3888 = vmul.f32 %v3799, %v3876
        %v3889 = vmul.f32 %v3799, %v3877
        %v3890 = vmul.f32 %v3799, %v3878
        %v3891 = vmul.f32 %v3799, %v3879
        %v3892 = vmul.f32 %v3804, %v3876
        %v3893 = vmul.f32 %v3804, %v3877
        %v3894 = vmul.f32 %v3804, %v3878
        %v3895 = vmul.f32 %v3804, %v3879
        %v3896 = vmul.f32 %v3809, %v3876
        %v3897 = vmul.f32 %v3809, %v3877
        %v3898 = vmul.f32 %v3809, %v3878
        %v3899 = vmul.f32 %v3809, %v3879
        %v3900 = vmul.f32 %v3814, %v3876
        %v3901 = vmul.f32 %v3814, %v3877
        %v3902 = vmul.f32 %v3814, %v3878
        %v3903 = vmul.f32 %v3814, %v3879
        %v3904 = vmul.f32 %v3819, %v3876
        %v3905 = vmul.f32 %v3819, %v3877
        %v3906 = vmul.f32 %v3819, %v3878
        %v3907 = vmul.f32 %v3819, %v3879
        %v3908 = vmul.f32 %v3824, %v3876
        %v3909 = vmul.f32 %v3824, %v3877
        %v3910 = vmul.f32 %v3824, %v3878
        %v3911 = vmul.f32 %v3824, %v3879
        %v3912 = vmul.f32 %v3829, %v3876
        %v3913 = vmul.f32 %v3829, %v3877
        %v3914 = vmul.f32 %v3829, %v3878
        %v3915 = vmul.f32 %v3829, %v3879
        %v3916 = vmul.f32 %v3834, %v3876
        %v3917 = vmul.f32 %v3834, %v3877
        %v3918 = vmul.f32 %v3834, %v3878
        %v3919 = vmul.f32 %v3834, %v3879
        %v3920 = vmul.f32 %v3839, %v3876
        %v3921 = vmul.f32 %v3839, %v3877
        %v3922 = vmul.f32 %v3839, %v3878
        %v3923 = vmul.f32 %v3839, %v3879
        %v3924 = vmul.f32 %v3844, %v3876
        %v3925 = vmul.f32 %v3844, %v3877
        %v3926 = vmul.f32 %v3844, %v3878
        %v3927 = vmul.f32 %v3844, %v3879
        %v3928 = vmul.f32 %v3849, %v3876
        %v3929 = vmul.f32 %v3849, %v3877
        %v3930 = vmul.f32 %v3849, %v3878
        %v3931 = vmul.f32 %v3849, %v3879
        %v3932 = vmul.f32 %v3854, %v3876
        %v3933 = vmul.f32 %v3854, %v3877
        %v3934 = vmul.f32 %v3854, %v3878
        %v3935 = vmul.f32 %v3854, %v3879
        %v3936 = vmul.f32 %v3859, %v3876
        %v3937 = vmul.f32 %v3859, %v3877
        %v3938 = vmul.f32 %v3859, %v3878
        %v3939 = vmul.f32 %v3859, %v3879
        %v3940 = vmul.f32 %v3864, %v3876
        %v3941 = vmul.f32 %v3864, %v3877
        %v3942 = vmul.f32 %v3864, %v3878
        %v3943 = vmul.f32 %v3864, %v3879
        %v3944 = vadd.f32 %v1771, %v3880
        %v3945 = vadd.f32 %v2421, %v3881
        %v3946 = vadd.f32 %v3071, %v3882
        %v3947 = vadd.f32 %v3721, %v3883
        %v3948 = vadd.f32 %v1774, %v3884
        %v3949 = vadd.f32 %v2424, %v3885
        %v3950 = vadd.f32 %v3074, %v3886
        %v3951 = vadd.f32 %v3724, %v3887
        %v3952 = vadd.f32 %v1777, %v3888
        %v3953 = vadd.f32 %v2427, %v3889
        %v3954 = vadd.f32 %v3077, %v3890
        %v3955 = vadd.f32 %v3727, %v3891
        %v3956 = vadd.f32 %v1780, %v3892
        %v3957 = vadd.f32 %v2430, %v3893
        %v3958 = vadd.f32 %v3080, %v3894
        %v3959 = vadd.f32 %v3730, %v3895
        %v3960 = vadd.f32 %v1783, %v3896
        %v3961 = vadd.f32 %v2433, %v3897
        %v3962 = vadd.f32 %v3083, %v3898
        %v3963 = vadd.f32 %v3733, %v3899
        %v3964 = vadd.f32 %v1786, %v3900
        %v3965 = vadd.f32 %v2436, %v3901
        %v3966 = vadd.f32 %v3086, %v3902
        %v3967 = vadd.f32 %v3736, %v3903
        %v3968 = vadd.f32 %v1789, %v3904
        %v3969 = vadd.f32 %v2439, %v3905
        %v3970 = vadd.f32 %v3089, %v3906
        %v3971 = vadd.f32 %v3739, %v3907
        %v3972 = vadd.f32 %v1792, %v3908
        %v3973 = vadd.f32 %v2442, %v3909
        %v3974 = vadd.f32 %v3092, %v3910
        %v3975 = vadd.f32 %v3742, %v3911
        %v3976 = vadd.f32 %v1795, %v3912
        %v3977 = vadd.f32 %v2445, %v3913
        %v3978 = vadd.f32 %v3095, %v3914
        %v3979 = vadd.f32 %v3745, %v3915
        %v3980 = vadd.f32 %v1798, %v3916
        %v3981 = vadd.f32 %v2448, %v3917
        %v3982 = vadd.f32 %v3098, %v3918
        %v3983 = vadd.f32 %v3748, %v3919
        %v3984 = vadd.f32 %v1801, %v3920
        %v3985 = vadd.f32 %v2451, %v3921
        %v3986 = vadd.f32 %v3101, %v3922
        %v3987 = vadd.f32 %v3751, %v3923
        %v3988 = vadd.f32 %v1804, %v3924
        %v3989 = vadd.f32 %v2454, %v3925
        %v3990 = vadd.f32 %v3104, %v3926
        %v3991 = vadd.f32 %v3754, %v3927
        %v3992 = vadd.f32 %v1807, %v3928
        %v3993 = vadd.f32 %v2457, %v3929
        %v3994 = vadd.f32 %v3107, %v3930
        %v3995 = vadd.f32 %v3757, %v3931
        %v3996 = vadd.f32 %v1810, %v3932
        %v3997 = vadd.f32 %v2460, %v3933
        %v3998 = vadd.f32 %v3110, %v3934
        %v3999 = vadd.f32 %v3760, %v3935
        %v4000 = vadd.f32 %v1813, %v3936
        %v4001 = vadd.f32 %v2463, %v3937
        %v4002 = vadd.f32 %v3113, %v3938
        %v4003 = vadd.f32 %v3763, %v3939
        %v4004 = vadd.f32 %v1816, %v3940
        %v4005 = vadd.f32 %v2466, %v3941
        %v4006 = vadd.f32 %v3116, %v3942
        %v4007 = vadd.f32 %v3766, %v3943
        %4008 = vset.pattern.permute.xlu0 1
        %4009 = vperm.xlu0 %4008, %v3768
        %v4010 = vpop.permute.xlu0 %4009
        %4012 = vset.pattern.permute.xlu0 1
        %4013 = vperm.xlu0 %4012, %v3769
        %v4014 = vpop.permute.xlu0 %4013
        %4016 = vset.pattern.permute.xlu0 1
        %4017 = vperm.xlu0 %4016, %v3770
        %v4018 = vpop.permute.xlu0 %4017
        %4020 = vset.pattern.permute.xlu0 1
        %4021 = vperm.xlu0 %4020, %v3771
        %v4022 = vpop.permute.xlu0 %4021
        %4024 = vset.pattern.permute.xlu0 1
        %4025 = vperm.xlu0 %4024, %v3772
        %v4026 = vpop.permute.xlu0 %4025
        %4028 = vset.pattern.permute.xlu0 1
        %4029 = vperm.xlu0 %4028, %v3773
        %v4030 = vpop.permute.xlu0 %4029
        %4032 = vset.pattern.permute.xlu0 1
        %4033 = vperm.xlu0 %4032, %v3774
        %v4034 = vpop.permute.xlu0 %4033
        %4036 = vset.pattern.permute.xlu0 1
        %4037 = vperm.xlu0 %4036, %v3775
        %v4038 = vpop.permute.xlu0 %4037
        %4040 = vset.pattern.permute.xlu0 1
        %4041 = vperm.xlu0 %4040, %v3776
        %v4042 = vpop.permute.xlu0 %4041
        %4044 = vset.pattern.permute.xlu0 1
        %4045 = vperm.xlu0 %4044, %v3777
        %v4046 = vpop.permute.xlu0 %4045
        %4048 = vset.pattern.permute.xlu0 1
        %4049 = vperm.xlu0 %4048, %v3778
        %v4050 = vpop.permute.xlu0 %4049
        %4052 = vset.pattern.permute.xlu0 1
        %4053 = vperm.xlu0 %4052, %v3779
        %v4054 = vpop.permute.xlu0 %4053
        %4056 = vset.pattern.permute.xlu0 1
        %4057 = vperm.xlu0 %4056, %v3780
        %v4058 = vpop.permute.xlu0 %4057
        %4060 = vset.pattern.permute.xlu0 1
        %4061 = vperm.xlu0 %4060, %v3781
        %v4062 = vpop.permute.xlu0 %4061
        %4064 = vset.pattern.permute.xlu0 1
        %4065 = vperm.xlu0 %4064, %v3782
        %v4066 = vpop.permute.xlu0 %4065
        %4068 = vset.pattern.permute.xlu0 1
        %4069 = vperm.xlu0 %4068, %v3783
        %v4070 = vpop.permute.xlu0 %4069
        %v4072 = vperm.slane %v3784, 1
        %v4073 = vperm.slane %v3784, 5
        %v4074 = vperm.slane %v3785, 1
        %v4075 = vperm.slane %v3785, 5
        %v4080 = vperm.slane %v4072, 1
        %v4081 = vperm.slane %v4073, 1
        %v4082 = vperm.slane %v4074, 1
        %v4083 = vperm.slane %v4075, 1
        %v4084 = vmul.f32 %v4010, %v4080
        %v4085 = vmul.f32 %v4010, %v4081
        %v4086 = vmul.f32 %v4010, %v4082
        %v4087 = vmul.f32 %v4010, %v4083
        %v4088 = vmul.f32 %v4014, %v4080
        %v4089 = vmul.f32 %v4014, %v4081
        %v4090 = vmul.f32 %v4014, %v4082
        %v4091 = vmul.f32 %v4014, %v4083
        %v4092 = vmul.f32 %v4018, %v4080
        %v4093 = vmul.f32 %v4018, %v4081
        %v4094 = vmul.f32 %v4018, %v4082
        %v4095 = vmul.f32 %v4018, %v4083
        %v4096 = vmul.f32 %v4022, %v4080
        %v4097 = vmul.f32 %v4022, %v4081
        %v4098 = vmul.f32 %v4022, %v4082
        %v4099 = vmul.f32 %v4022, %v4083
        %v4100 = vmul.f32 %v4026, %v4080
        %v4101 = vmul.f32 %v4026, %v4081
        %v4102 = vmul.f32 %v4026, %v4082
        %v4103 = vmul.f32 %v4026, %v4083
        %v4104 = vmul.f32 %v4030, %v4080
        %v4105 = vmul.f32 %v4030, %v4081
        %v4106 = vmul.f32 %v4030, %v4082
        %v4107 = vmul.f32 %v4030, %v4083
        %v4108 = vmul.f32 %v4034, %v4080
        %v4109 = vmul.f32 %v4034, %v4081
        %v4110 = vmul.f32 %v4034, %v4082
        %v4111 = vmul.f32 %v4034, %v4083
        %v4112 = vmul.f32 %v4038, %v4080
        %v4113 = vmul.f32 %v4038, %v4081
        %v4114 = vmul.f32 %v4038, %v4082
        %v4115 = vmul.f32 %v4038, %v4083
        %v4116 = vmul.f32 %v4042, %v4080
        %v4117 = vmul.f32 %v4042, %v4081
        %v4118 = vmul.f32 %v4042, %v4082
        %v4119 = vmul.f32 %v4042, %v4083
        %v4120 = vmul.f32 %v4046, %v4080
        %v4121 = vmul.f32 %v4046, %v4081
        %v4122 = vmul.f32 %v4046, %v4082
        %v4123 = vmul.f32 %v4046, %v4083
        %v4124 = vmul.f32 %v4050, %v4080
        %v4125 = vmul.f32 %v4050, %v4081
        %v4126 = vmul.f32 %v4050, %v4082
        %v4127 = vmul.f32 %v4050, %v4083
        %v4128 = vmul.f32 %v4054, %v4080
        %v4129 = vmul.f32 %v4054, %v4081
        %v4130 = vmul.f32 %v4054, %v4082
        %v4131 = vmul.f32 %v4054, %v4083
        %v4132 = vmul.f32 %v4058, %v4080
        %v4133 = vmul.f32 %v4058, %v4081
        %v4134 = vmul.f32 %v4058, %v4082
        %v4135 = vmul.f32 %v4058, %v4083
        %v4136 = vmul.f32 %v4062, %v4080
        %v4137 = vmul.f32 %v4062, %v4081
        %v4138 = vmul.f32 %v4062, %v4082
        %v4139 = vmul.f32 %v4062, %v4083
        %v4140 = vmul.f32 %v4066, %v4080
        %v4141 = vmul.f32 %v4066, %v4081
        %v4142 = vmul.f32 %v4066, %v4082
        %v4143 = vmul.f32 %v4066, %v4083
        %v4144 = vmul.f32 %v4070, %v4080
        %v4145 = vmul.f32 %v4070, %v4081
        %v4146 = vmul.f32 %v4070, %v4082
        %v4147 = vmul.f32 %v4070, %v4083
        %v4148 = vadd.f32 %v3944, %v4084
        %v4149 = vadd.f32 %v3945, %v4085
        %v4150 = vadd.f32 %v3946, %v4086
        %v4151 = vadd.f32 %v3947, %v4087
        %v4152 = vadd.f32 %v3948, %v4088
        %v4153 = vadd.f32 %v3949, %v4089
        %v4154 = vadd.f32 %v3950, %v4090
        %v4155 = vadd.f32 %v3951, %v4091
        %v4156 = vadd.f32 %v3952, %v4092
        %v4157 = vadd.f32 %v3953, %v4093
        %v4158 = vadd.f32 %v3954, %v4094
        %v4159 = vadd.f32 %v3955, %v4095
        %v4160 = vadd.f32 %v3956, %v4096
        %v4161 = vadd.f32 %v3957, %v4097
        %v4162 = vadd.f32 %v3958, %v4098
        %v4163 = vadd.f32 %v3959, %v4099
        %v4164 = vadd.f32 %v3960, %v4100
        %v4165 = vadd.f32 %v3961, %v4101
        %v4166 = vadd.f32 %v3962, %v4102
        %v4167 = vadd.f32 %v3963, %v4103
        %v4168 = vadd.f32 %v3964, %v4104
        %v4169 = vadd.f32 %v3965, %v4105
        %v4170 = vadd.f32 %v3966, %v4106
        %v4171 = vadd.f32 %v3967, %v4107
        %v4172 = vadd.f32 %v3968, %v4108
        %v4173 = vadd.f32 %v3969, %v4109
        %v4174 = vadd.f32 %v3970, %v4110
        %v4175 = vadd.f32 %v3971, %v4111
        %v4176 = vadd.f32 %v3972, %v4112
        %v4177 = vadd.f32 %v3973, %v4113
        %v4178 = vadd.f32 %v3974, %v4114
        %v4179 = vadd.f32 %v3975, %v4115
        %v4180 = vadd.f32 %v3976, %v4116
        %v4181 = vadd.f32 %v3977, %v4117
        %v4182 = vadd.f32 %v3978, %v4118
        %v4183 = vadd.f32 %v3979, %v4119
        %v4184 = vadd.f32 %v3980, %v4120
        %v4185 = vadd.f32 %v3981, %v4121
        %v4186 = vadd.f32 %v3982, %v4122
        %v4187 = vadd.f32 %v3983, %v4123
        %v4188 = vadd.f32 %v3984, %v4124
        %v4189 = vadd.f32 %v3985, %v4125
        %v4190 = vadd.f32 %v3986, %v4126
        %v4191 = vadd.f32 %v3987, %v4127
        %v4192 = vadd.f32 %v3988, %v4128
        %v4193 = vadd.f32 %v3989, %v4129
        %v4194 = vadd.f32 %v3990, %v4130
        %v4195 = vadd.f32 %v3991, %v4131
        %v4196 = vadd.f32 %v3992, %v4132
        %v4197 = vadd.f32 %v3993, %v4133
        %v4198 = vadd.f32 %v3994, %v4134
        %v4199 = vadd.f32 %v3995, %v4135
        %v4200 = vadd.f32 %v3996, %v4136
        %v4201 = vadd.f32 %v3997, %v4137
        %v4202 = vadd.f32 %v3998, %v4138
        %v4203 = vadd.f32 %v3999, %v4139
        %v4204 = vadd.f32 %v4000, %v4140
        %v4205 = vadd.f32 %v4001, %v4141
        %v4206 = vadd.f32 %v4002, %v4142
        %v4207 = vadd.f32 %v4003, %v4143
        %v4208 = vadd.f32 %v4004, %v4144
        %v4209 = vadd.f32 %v4005, %v4145
        %v4210 = vadd.f32 %v4006, %v4146
        %v4211 = vadd.f32 %v4007, %v4147
        %4212 = vset.pattern.permute.xlu0 2
        %4213 = vperm.xlu0 %4212, %v3768
        %v4214 = vpop.permute.xlu0 %4213
        %4216 = vset.pattern.permute.xlu0 2
        %4217 = vperm.xlu0 %4216, %v3769
        %v4218 = vpop.permute.xlu0 %4217
        %4220 = vset.pattern.permute.xlu0 2
        %4221 = vperm.xlu0 %4220, %v3770
        %v4222 = vpop.permute.xlu0 %4221
        %4224 = vset.pattern.permute.xlu0 2
        %4225 = vperm.xlu0 %4224, %v3771
        %v4226 = vpop.permute.xlu0 %4225
        %4228 = vset.pattern.permute.xlu0 2
        %4229 = vperm.xlu0 %4228, %v3772
        %v4230 = vpop.permute.xlu0 %4229
        %4232 = vset.pattern.permute.xlu0 2
        %4233 = vperm.xlu0 %4232, %v3773
        %v4234 = vpop.permute.xlu0 %4233
        %4236 = vset.pattern.permute.xlu0 2
        %4237 = vperm.xlu0 %4236, %v3774
        %v4238 = vpop.permute.xlu0 %4237
        %4240 = vset.pattern.permute.xlu0 2
        %4241 = vperm.xlu0 %4240, %v3775
        %v4242 = vpop.permute.xlu0 %4241
        %4244 = vset.pattern.permute.xlu0 2
        %4245 = vperm.xlu0 %4244, %v3776
        %v4246 = vpop.permute.xlu0 %4245
        %4248 = vset.pattern.permute.xlu0 2
        %4249 = vperm.xlu0 %4248, %v3777
        %v4250 = vpop.permute.xlu0 %4249
        %4252 = vset.pattern.permute.xlu0 2
        %4253 = vperm.xlu0 %4252, %v3778
        %v4254 = vpop.permute.xlu0 %4253
        %4256 = vset.pattern.permute.xlu0 2
        %4257 = vperm.xlu0 %4256, %v3779
        %v4258 = vpop.permute.xlu0 %4257
        %4260 = vset.pattern.permute.xlu0 2
        %4261 = vperm.xlu0 %4260, %v3780
        %v4262 = vpop.permute.xlu0 %4261
        %4264 = vset.pattern.permute.xlu0 2
        %4265 = vperm.xlu0 %4264, %v3781
        %v4266 = vpop.permute.xlu0 %4265
        %4268 = vset.pattern.permute.xlu0 2
        %4269 = vperm.xlu0 %4268, %v3782
        %v4270 = vpop.permute.xlu0 %4269
        %4272 = vset.pattern.permute.xlu0 2
        %4273 = vperm.xlu0 %4272, %v3783
        %v4274 = vpop.permute.xlu0 %4273
        %v4276 = vperm.slane %v3784, 2
        %v4277 = vperm.slane %v3784, 6
        %v4278 = vperm.slane %v3785, 2
        %v4279 = vperm.slane %v3785, 6
        %v4284 = vperm.slane %v4276, 2
        %v4285 = vperm.slane %v4277, 2
        %v4286 = vperm.slane %v4278, 2
        %v4287 = vperm.slane %v4279, 2
        %v4288 = vmul.f32 %v4214, %v4284
        %v4289 = vmul.f32 %v4214, %v4285
        %v4290 = vmul.f32 %v4214, %v4286
        %v4291 = vmul.f32 %v4214, %v4287
        %v4292 = vmul.f32 %v4218, %v4284
        %v4293 = vmul.f32 %v4218, %v4285
        %v4294 = vmul.f32 %v4218, %v4286
        %v4295 = vmul.f32 %v4218, %v4287
        %v4296 = vmul.f32 %v4222, %v4284
        %v4297 = vmul.f32 %v4222, %v4285
        %v4298 = vmul.f32 %v4222, %v4286
        %v4299 = vmul.f32 %v4222, %v4287
        %v4300 = vmul.f32 %v4226, %v4284
        %v4301 = vmul.f32 %v4226, %v4285
        %v4302 = vmul.f32 %v4226, %v4286
        %v4303 = vmul.f32 %v4226, %v4287
        %v4304 = vmul.f32 %v4230, %v4284
        %v4305 = vmul.f32 %v4230, %v4285
        %v4306 = vmul.f32 %v4230, %v4286
        %v4307 = vmul.f32 %v4230, %v4287
        %v4308 = vmul.f32 %v4234, %v4284
        %v4309 = vmul.f32 %v4234, %v4285
        %v4310 = vmul.f32 %v4234, %v4286
        %v4311 = vmul.f32 %v4234, %v4287
        %v4312 = vmul.f32 %v4238, %v4284
        %v4313 = vmul.f32 %v4238, %v4285
        %v4314 = vmul.f32 %v4238, %v4286
        %v4315 = vmul.f32 %v4238, %v4287
        %v4316 = vmul.f32 %v4242, %v4284
        %v4317 = vmul.f32 %v4242, %v4285
        %v4318 = vmul.f32 %v4242, %v4286
        %v4319 = vmul.f32 %v4242, %v4287
        %v4320 = vmul.f32 %v4246, %v4284
        %v4321 = vmul.f32 %v4246, %v4285
        %v4322 = vmul.f32 %v4246, %v4286
        %v4323 = vmul.f32 %v4246, %v4287
        %v4324 = vmul.f32 %v4250, %v4284
        %v4325 = vmul.f32 %v4250, %v4285
        %v4326 = vmul.f32 %v4250, %v4286
        %v4327 = vmul.f32 %v4250, %v4287
        %v4328 = vmul.f32 %v4254, %v4284
        %v4329 = vmul.f32 %v4254, %v4285
        %v4330 = vmul.f32 %v4254, %v4286
        %v4331 = vmul.f32 %v4254, %v4287
        %v4332 = vmul.f32 %v4258, %v4284
        %v4333 = vmul.f32 %v4258, %v4285
        %v4334 = vmul.f32 %v4258, %v4286
        %v4335 = vmul.f32 %v4258, %v4287
        %v4336 = vmul.f32 %v4262, %v4284
        %v4337 = vmul.f32 %v4262, %v4285
        %v4338 = vmul.f32 %v4262, %v4286
        %v4339 = vmul.f32 %v4262, %v4287
        %v4340 = vmul.f32 %v4266, %v4284
        %v4341 = vmul.f32 %v4266, %v4285
        %v4342 = vmul.f32 %v4266, %v4286
        %v4343 = vmul.f32 %v4266, %v4287
        %v4344 = vmul.f32 %v4270, %v4284
        %v4345 = vmul.f32 %v4270, %v4285
        %v4346 = vmul.f32 %v4270, %v4286
        %v4347 = vmul.f32 %v4270, %v4287
        %v4348 = vmul.f32 %v4274, %v4284
        %v4349 = vmul.f32 %v4274, %v4285
        %v4350 = vmul.f32 %v4274, %v4286
        %v4351 = vmul.f32 %v4274, %v4287
        %v4352 = vadd.f32 %v4148, %v4288
        %v4353 = vadd.f32 %v4149, %v4289
        %v4354 = vadd.f32 %v4150, %v4290
        %v4355 = vadd.f32 %v4151, %v4291
        %v4356 = vadd.f32 %v4152, %v4292
        %v4357 = vadd.f32 %v4153, %v4293
        %v4358 = vadd.f32 %v4154, %v4294
        %v4359 = vadd.f32 %v4155, %v4295
        %v4360 = vadd.f32 %v4156, %v4296
        %v4361 = vadd.f32 %v4157, %v4297
        %v4362 = vadd.f32 %v4158, %v4298
        %v4363 = vadd.f32 %v4159, %v4299
        %v4364 = vadd.f32 %v4160, %v4300
        %v4365 = vadd.f32 %v4161, %v4301
        %v4366 = vadd.f32 %v4162, %v4302
        %v4367 = vadd.f32 %v4163, %v4303
        %v4368 = vadd.f32 %v4164, %v4304
        %v4369 = vadd.f32 %v4165, %v4305
        %v4370 = vadd.f32 %v4166, %v4306
        %v4371 = vadd.f32 %v4167, %v4307
        %v4372 = vadd.f32 %v4168, %v4308
        %v4373 = vadd.f32 %v4169, %v4309
        %v4374 = vadd.f32 %v4170, %v4310
        %v4375 = vadd.f32 %v4171, %v4311
        %v4376 = vadd.f32 %v4172, %v4312
        %v4377 = vadd.f32 %v4173, %v4313
        %v4378 = vadd.f32 %v4174, %v4314
        %v4379 = vadd.f32 %v4175, %v4315
        %v4380 = vadd.f32 %v4176, %v4316
        %v4381 = vadd.f32 %v4177, %v4317
        %v4382 = vadd.f32 %v4178, %v4318
        %v4383 = vadd.f32 %v4179, %v4319
        %v4384 = vadd.f32 %v4180, %v4320
        %v4385 = vadd.f32 %v4181, %v4321
        %v4386 = vadd.f32 %v4182, %v4322
        %v4387 = vadd.f32 %v4183, %v4323
        %v4388 = vadd.f32 %v4184, %v4324
        %v4389 = vadd.f32 %v4185, %v4325
        %v4390 = vadd.f32 %v4186, %v4326
        %v4391 = vadd.f32 %v4187, %v4327
        %v4392 = vadd.f32 %v4188, %v4328
        %v4393 = vadd.f32 %v4189, %v4329
        %v4394 = vadd.f32 %v4190, %v4330
        %v4395 = vadd.f32 %v4191, %v4331
        %v4396 = vadd.f32 %v4192, %v4332
        %v4397 = vadd.f32 %v4193, %v4333
        %v4398 = vadd.f32 %v4194, %v4334
        %v4399 = vadd.f32 %v4195, %v4335
        %v4400 = vadd.f32 %v4196, %v4336
        %v4401 = vadd.f32 %v4197, %v4337
        %v4402 = vadd.f32 %v4198, %v4338
        %v4403 = vadd.f32 %v4199, %v4339
        %v4404 = vadd.f32 %v4200, %v4340
        %v4405 = vadd.f32 %v4201, %v4341
        %v4406 = vadd.f32 %v4202, %v4342
        %v4407 = vadd.f32 %v4203, %v4343
        %v4408 = vadd.f32 %v4204, %v4344
        %v4409 = vadd.f32 %v4205, %v4345
        %v4410 = vadd.f32 %v4206, %v4346
        %v4411 = vadd.f32 %v4207, %v4347
        %v4412 = vadd.f32 %v4208, %v4348
        %v4413 = vadd.f32 %v4209, %v4349
        %v4414 = vadd.f32 %v4210, %v4350
        %v4415 = vadd.f32 %v4211, %v4351
        %4416 = vset.pattern.permute.xlu0 3
        %4417 = vperm.xlu0 %4416, %v3768
        %v4418 = vpop.permute.xlu0 %4417
        %4420 = vset.pattern.permute.xlu0 3
        %4421 = vperm.xlu0 %4420, %v3769
        %v4422 = vpop.permute.xlu0 %4421
        %4424 = vset.pattern.permute.xlu0 3
        %4425 = vperm.xlu0 %4424, %v3770
        %v4426 = vpop.permute.xlu0 %4425
        %4428 = vset.pattern.permute.xlu0 3
        %4429 = vperm.xlu0 %4428, %v3771
        %v4430 = vpop.permute.xlu0 %4429
        %4432 = vset.pattern.permute.xlu0 3
        %4433 = vperm.xlu0 %4432, %v3772
        %v4434 = vpop.permute.xlu0 %4433
        %4436 = vset.pattern.permute.xlu0 3
        %4437 = vperm.xlu0 %4436, %v3773
        %v4438 = vpop.permute.xlu0 %4437
        %4440 = vset.pattern.permute.xlu0 3
        %4441 = vperm.xlu0 %4440, %v3774
        %v4442 = vpop.permute.xlu0 %4441
        %4444 = vset.pattern.permute.xlu0 3
        %4445 = vperm.xlu0 %4444, %v3775
        %v4446 = vpop.permute.xlu0 %4445
        %4448 = vset.pattern.permute.xlu0 3
        %4449 = vperm.xlu0 %4448, %v3776
        %v4450 = vpop.permute.xlu0 %4449
        %4452 = vset.pattern.permute.xlu0 3
        %4453 = vperm.xlu0 %4452, %v3777
        %v4454 = vpop.permute.xlu0 %4453
        %4456 = vset.pattern.permute.xlu0 3
        %4457 = vperm.xlu0 %4456, %v3778
        %v4458 = vpop.permute.xlu0 %4457
        %4460 = vset.pattern.permute.xlu0 3
        %4461 = vperm.xlu0 %4460, %v3779
        %v4462 = vpop.permute.xlu0 %4461
        %4464 = vset.pattern.permute.xlu0 3
        %4465 = vperm.xlu0 %4464, %v3780
        %v4466 = vpop.permute.xlu0 %4465
        %4468 = vset.pattern.permute.xlu0 3
        %4469 = vperm.xlu0 %4468, %v3781
        %v4470 = vpop.permute.xlu0 %4469
        %4472 = vset.pattern.permute.xlu0 3
        %4473 = vperm.xlu0 %4472, %v3782
        %v4474 = vpop.permute.xlu0 %4473
        %4476 = vset.pattern.permute.xlu0 3
        %4477 = vperm.xlu0 %4476, %v3783
        %v4478 = vpop.permute.xlu0 %4477
        %v4480 = vperm.slane %v3784, 3
        %v4481 = vperm.slane %v3784, 7
        %v4482 = vperm.slane %v3785, 3
        %v4483 = vperm.slane %v3785, 7
        %v4488 = vperm.slane %v4480, 3
        %v4489 = vperm.slane %v4481, 3
        %v4490 = vperm.slane %v4482, 3
        %v4491 = vperm.slane %v4483, 3
        %v4492 = vmul.f32 %v4418, %v4488
        %v4493 = vmul.f32 %v4418, %v4489
        %v4494 = vmul.f32 %v4418, %v4490
        %v4495 = vmul.f32 %v4418, %v4491
        %v4496 = vmul.f32 %v4422, %v4488
        %v4497 = vmul.f32 %v4422, %v4489
        %v4498 = vmul.f32 %v4422, %v4490
        %v4499 = vmul.f32 %v4422, %v4491
        %v4500 = vmul.f32 %v4426, %v4488
        %v4501 = vmul.f32 %v4426, %v4489
        %v4502 = vmul.f32 %v4426, %v4490
        %v4503 = vmul.f32 %v4426, %v4491
        %v4504 = vmul.f32 %v4430, %v4488
        %v4505 = vmul.f32 %v4430, %v4489
        %v4506 = vmul.f32 %v4430, %v4490
        %v4507 = vmul.f32 %v4430, %v4491
        %v4508 = vmul.f32 %v4434, %v4488
        %v4509 = vmul.f32 %v4434, %v4489
        %v4510 = vmul.f32 %v4434, %v4490
        %v4511 = vmul.f32 %v4434, %v4491
        %v4512 = vmul.f32 %v4438, %v4488
        %v4513 = vmul.f32 %v4438, %v4489
        %v4514 = vmul.f32 %v4438, %v4490
        %v4515 = vmul.f32 %v4438, %v4491
        %v4516 = vmul.f32 %v4442, %v4488
        %v4517 = vmul.f32 %v4442, %v4489
        %v4518 = vmul.f32 %v4442, %v4490
        %v4519 = vmul.f32 %v4442, %v4491
        %v4520 = vmul.f32 %v4446, %v4488
        %v4521 = vmul.f32 %v4446, %v4489
        %v4522 = vmul.f32 %v4446, %v4490
        %v4523 = vmul.f32 %v4446, %v4491
        %v4524 = vmul.f32 %v4450, %v4488
        %v4525 = vmul.f32 %v4450, %v4489
        %v4526 = vmul.f32 %v4450, %v4490
        %v4527 = vmul.f32 %v4450, %v4491
        %v4528 = vmul.f32 %v4454, %v4488
        %v4529 = vmul.f32 %v4454, %v4489
        %v4530 = vmul.f32 %v4454, %v4490
        %v4531 = vmul.f32 %v4454, %v4491
        %v4532 = vmul.f32 %v4458, %v4488
        %v4533 = vmul.f32 %v4458, %v4489
        %v4534 = vmul.f32 %v4458, %v4490
        %v4535 = vmul.f32 %v4458, %v4491
        %v4536 = vmul.f32 %v4462, %v4488
        %v4537 = vmul.f32 %v4462, %v4489
        %v4538 = vmul.f32 %v4462, %v4490
        %v4539 = vmul.f32 %v4462, %v4491
        %v4540 = vmul.f32 %v4466, %v4488
        %v4541 = vmul.f32 %v4466, %v4489
        %v4542 = vmul.f32 %v4466, %v4490
        %v4543 = vmul.f32 %v4466, %v4491
        %v4544 = vmul.f32 %v4470, %v4488
        %v4545 = vmul.f32 %v4470, %v4489
        %v4546 = vmul.f32 %v4470, %v4490
        %v4547 = vmul.f32 %v4470, %v4491
        %v4548 = vmul.f32 %v4474, %v4488
        %v4549 = vmul.f32 %v4474, %v4489
        %v4550 = vmul.f32 %v4474, %v4490
        %v4551 = vmul.f32 %v4474, %v4491
        %v4552 = vmul.f32 %v4478, %v4488
        %v4553 = vmul.f32 %v4478, %v4489
        %v4554 = vmul.f32 %v4478, %v4490
        %v4555 = vmul.f32 %v4478, %v4491
        %v4556 = vadd.f32 %v4352, %v4492
        %v4557 = vadd.f32 %v4353, %v4493
        %v4558 = vadd.f32 %v4354, %v4494
        %v4559 = vadd.f32 %v4355, %v4495
        %v4560 = vadd.f32 %v4356, %v4496
        %v4561 = vadd.f32 %v4357, %v4497
        %v4562 = vadd.f32 %v4358, %v4498
        %v4563 = vadd.f32 %v4359, %v4499
        %v4564 = vadd.f32 %v4360, %v4500
        %v4565 = vadd.f32 %v4361, %v4501
        %v4566 = vadd.f32 %v4362, %v4502
        %v4567 = vadd.f32 %v4363, %v4503
        %v4568 = vadd.f32 %v4364, %v4504
        %v4569 = vadd.f32 %v4365, %v4505
        %v4570 = vadd.f32 %v4366, %v4506
        %v4571 = vadd.f32 %v4367, %v4507
        %v4572 = vadd.f32 %v4368, %v4508
        %v4573 = vadd.f32 %v4369, %v4509
        %v4574 = vadd.f32 %v4370, %v4510
        %v4575 = vadd.f32 %v4371, %v4511
        %v4576 = vadd.f32 %v4372, %v4512
        %v4577 = vadd.f32 %v4373, %v4513
        %v4578 = vadd.f32 %v4374, %v4514
        %v4579 = vadd.f32 %v4375, %v4515
        %v4580 = vadd.f32 %v4376, %v4516
        %v4581 = vadd.f32 %v4377, %v4517
        %v4582 = vadd.f32 %v4378, %v4518
        %v4583 = vadd.f32 %v4379, %v4519
        %v4584 = vadd.f32 %v4380, %v4520
        %v4585 = vadd.f32 %v4381, %v4521
        %v4586 = vadd.f32 %v4382, %v4522
        %v4587 = vadd.f32 %v4383, %v4523
        %v4588 = vadd.f32 %v4384, %v4524
        %v4589 = vadd.f32 %v4385, %v4525
        %v4590 = vadd.f32 %v4386, %v4526
        %v4591 = vadd.f32 %v4387, %v4527
        %v4592 = vadd.f32 %v4388, %v4528
        %v4593 = vadd.f32 %v4389, %v4529
        %v4594 = vadd.f32 %v4390, %v4530
        %v4595 = vadd.f32 %v4391, %v4531
        %v4596 = vadd.f32 %v4392, %v4532
        %v4597 = vadd.f32 %v4393, %v4533
        %v4598 = vadd.f32 %v4394, %v4534
        %v4599 = vadd.f32 %v4395, %v4535
        %v4600 = vadd.f32 %v4396, %v4536
        %v4601 = vadd.f32 %v4397, %v4537
        %v4602 = vadd.f32 %v4398, %v4538
        %v4603 = vadd.f32 %v4399, %v4539
        %v4604 = vadd.f32 %v4400, %v4540
        %v4605 = vadd.f32 %v4401, %v4541
        %v4606 = vadd.f32 %v4402, %v4542
        %v4607 = vadd.f32 %v4403, %v4543
        %v4608 = vadd.f32 %v4404, %v4544
        %v4609 = vadd.f32 %v4405, %v4545
        %v4610 = vadd.f32 %v4406, %v4546
        %v4611 = vadd.f32 %v4407, %v4547
        %v4612 = vadd.f32 %v4408, %v4548
        %v4613 = vadd.f32 %v4409, %v4549
        %v4614 = vadd.f32 %v4410, %v4550
        %v4615 = vadd.f32 %v4411, %v4551
        %v4616 = vadd.f32 %v4412, %v4552
        %v4617 = vadd.f32 %v4413, %v4553
        %v4618 = vadd.f32 %v4414, %v4554
        %v4619 = vadd.f32 %v4415, %v4555
        %vm4620 = vcmp.gt.f32.partialorder %v4556, 0.0
        %vm4621 = vcmp.gt.f32.partialorder %v4557, 0.0
        %vm4622 = vcmp.gt.f32.partialorder %v4558, 0.0
        %vm4623 = vcmp.gt.f32.partialorder %v4559, 0.0
        %vm4624 = vcmp.gt.f32.partialorder %v4560, 0.0
        %vm4625 = vcmp.gt.f32.partialorder %v4561, 0.0
        %vm4626 = vcmp.gt.f32.partialorder %v4562, 0.0
        %vm4627 = vcmp.gt.f32.partialorder %v4563, 0.0
        %vm4628 = vcmp.gt.f32.partialorder %v4564, 0.0
        %vm4629 = vcmp.gt.f32.partialorder %v4565, 0.0
        %vm4630 = vcmp.gt.f32.partialorder %v4566, 0.0
        %vm4631 = vcmp.gt.f32.partialorder %v4567, 0.0
        %vm4632 = vcmp.gt.f32.partialorder %v4568, 0.0
        %vm4633 = vcmp.gt.f32.partialorder %v4569, 0.0
        %vm4634 = vcmp.gt.f32.partialorder %v4570, 0.0
        %vm4635 = vcmp.gt.f32.partialorder %v4571, 0.0
        %vm4636 = vcmp.gt.f32.partialorder %v4572, 0.0
        %vm4637 = vcmp.gt.f32.partialorder %v4573, 0.0
        %vm4638 = vcmp.gt.f32.partialorder %v4574, 0.0
        %vm4639 = vcmp.gt.f32.partialorder %v4575, 0.0
        %vm4640 = vcmp.gt.f32.partialorder %v4576, 0.0
        %vm4641 = vcmp.gt.f32.partialorder %v4577, 0.0
        %vm4642 = vcmp.gt.f32.partialorder %v4578, 0.0
        %vm4643 = vcmp.gt.f32.partialorder %v4579, 0.0
        %vm4644 = vcmp.gt.f32.partialorder %v4580, 0.0
        %vm4645 = vcmp.gt.f32.partialorder %v4581, 0.0
        %vm4646 = vcmp.gt.f32.partialorder %v4582, 0.0
        %vm4647 = vcmp.gt.f32.partialorder %v4583, 0.0
        %vm4648 = vcmp.gt.f32.partialorder %v4584, 0.0
        %vm4649 = vcmp.gt.f32.partialorder %v4585, 0.0
        %vm4650 = vcmp.gt.f32.partialorder %v4586, 0.0
        %vm4651 = vcmp.gt.f32.partialorder %v4587, 0.0
        %vm4652 = vcmp.gt.f32.partialorder %v4588, 0.0
        %vm4653 = vcmp.gt.f32.partialorder %v4589, 0.0
        %vm4654 = vcmp.gt.f32.partialorder %v4590, 0.0
        %vm4655 = vcmp.gt.f32.partialorder %v4591, 0.0
        %vm4656 = vcmp.gt.f32.partialorder %v4592, 0.0
        %vm4657 = vcmp.gt.f32.partialorder %v4593, 0.0
        %vm4658 = vcmp.gt.f32.partialorder %v4594, 0.0
        %vm4659 = vcmp.gt.f32.partialorder %v4595, 0.0
        %vm4660 = vcmp.gt.f32.partialorder %v4596, 0.0
        %vm4661 = vcmp.gt.f32.partialorder %v4597, 0.0
        %vm4662 = vcmp.gt.f32.partialorder %v4598, 0.0
        %vm4663 = vcmp.gt.f32.partialorder %v4599, 0.0
        %vm4664 = vcmp.gt.f32.partialorder %v4600, 0.0
        %vm4665 = vcmp.gt.f32.partialorder %v4601, 0.0
        %vm4666 = vcmp.gt.f32.partialorder %v4602, 0.0
        %vm4667 = vcmp.gt.f32.partialorder %v4603, 0.0
        %vm4668 = vcmp.gt.f32.partialorder %v4604, 0.0
        %vm4669 = vcmp.gt.f32.partialorder %v4605, 0.0
        %vm4670 = vcmp.gt.f32.partialorder %v4606, 0.0
        %vm4671 = vcmp.gt.f32.partialorder %v4607, 0.0
        %vm4672 = vcmp.gt.f32.partialorder %v4608, 0.0
        %vm4673 = vcmp.gt.f32.partialorder %v4609, 0.0
        %vm4674 = vcmp.gt.f32.partialorder %v4610, 0.0
        %vm4675 = vcmp.gt.f32.partialorder %v4611, 0.0
        %vm4676 = vcmp.gt.f32.partialorder %v4612, 0.0
        %vm4677 = vcmp.gt.f32.partialorder %v4613, 0.0
        %vm4678 = vcmp.gt.f32.partialorder %v4614, 0.0
        %vm4679 = vcmp.gt.f32.partialorder %v4615, 0.0
        %vm4680 = vcmp.gt.f32.partialorder %v4616, 0.0
        %vm4681 = vcmp.gt.f32.partialorder %v4617, 0.0
        %vm4682 = vcmp.gt.f32.partialorder %v4618, 0.0
        %vm4683 = vcmp.gt.f32.partialorder %v4619, 0.0
        %v4684 = vmul.f32 %v4556, 0.2
        %v4685 = vmul.f32 %v4557, 0.2
        %v4686 = vmul.f32 %v4558, 0.2
        %v4687 = vmul.f32 %v4559, 0.2
        %v4688 = vmul.f32 %v4560, 0.2
        %v4689 = vmul.f32 %v4561, 0.2
        %v4690 = vmul.f32 %v4562, 0.2
        %v4691 = vmul.f32 %v4563, 0.2
        %v4692 = vmul.f32 %v4564, 0.2
        %v4693 = vmul.f32 %v4565, 0.2
        %v4694 = vmul.f32 %v4566, 0.2
        %v4695 = vmul.f32 %v4567, 0.2
        %v4696 = vmul.f32 %v4568, 0.2
        %v4697 = vmul.f32 %v4569, 0.2
        %v4698 = vmul.f32 %v4570, 0.2
        %v4699 = vmul.f32 %v4571, 0.2
        %v4700 = vmul.f32 %v4572, 0.2
        %v4701 = vmul.f32 %v4573, 0.2
        %v4702 = vmul.f32 %v4574, 0.2
        %v4703 = vmul.f32 %v4575, 0.2
        %v4704 = vmul.f32 %v4576, 0.2
        %v4705 = vmul.f32 %v4577, 0.2
        %v4706 = vmul.f32 %v4578, 0.2
        %v4707 = vmul.f32 %v4579, 0.2
        %v4708 = vmul.f32 %v4580, 0.2
        %v4709 = vmul.f32 %v4581, 0.2
        %v4710 = vmul.f32 %v4582, 0.2
        %v4711 = vmul.f32 %v4583, 0.2
        %v4712 = vmul.f32 %v4584, 0.2
        %v4713 = vmul.f32 %v4585, 0.2
        %v4714 = vmul.f32 %v4586, 0.2
        %v4715 = vmul.f32 %v4587, 0.2
        %v4716 = vmul.f32 %v4588, 0.2
        %v4717 = vmul.f32 %v4589, 0.2
        %v4718 = vmul.f32 %v4590, 0.2
        %v4719 = vmul.f32 %v4591, 0.2
        %v4720 = vmul.f32 %v4592, 0.2
        %v4721 = vmul.f32 %v4593, 0.2
        %v4722 = vmul.f32 %v4594, 0.2
        %v4723 = vmul.f32 %v4595, 0.2
        %v4724 = vmul.f32 %v4596, 0.2
        %v4725 = vmul.f32 %v4597, 0.2
        %v4726 = vmul.f32 %v4598, 0.2
        %v4727 = vmul.f32 %v4599, 0.2
        %v4728 = vmul.f32 %v4600, 0.2
        %v4729 = vmul.f32 %v4601, 0.2
        %v4730 = vmul.f32 %v4602, 0.2
        %v4731 = vmul.f32 %v4603, 0.2
        %v4732 = vmul.f32 %v4604, 0.2
        %v4733 = vmul.f32 %v4605, 0.2
        %v4734 = vmul.f32 %v4606, 0.2
        %v4735 = vmul.f32 %v4607, 0.2
        %v4736 = vmul.f32 %v4608, 0.2
        %v4737 = vmul.f32 %v4609, 0.2
        %v4738 = vmul.f32 %v4610, 0.2
        %v4739 = vmul.f32 %v4611, 0.2
        %v4740 = vmul.f32 %v4612, 0.2
        %v4741 = vmul.f32 %v4613, 0.2
        %v4742 = vmul.f32 %v4614, 0.2
        %v4743 = vmul.f32 %v4615, 0.2
        %v4744 = vmul.f32 %v4616, 0.2
        %v4745 = vmul.f32 %v4617, 0.2
        %v4746 = vmul.f32 %v4618, 0.2
        %v4747 = vmul.f32 %v4619, 0.2
        %v4748 = vsel %vm4620, %v4556, %v4684
        %v4749 = vsel %vm4621, %v4557, %v4685
        %v4750 = vsel %vm4622, %v4558, %v4686
        %v4751 = vsel %vm4623, %v4559, %v4687
        %v4752 = vsel %vm4624, %v4560, %v4688
        %v4753 = vsel %vm4625, %v4561, %v4689
        %v4754 = vsel %vm4626, %v4562, %v4690
        %v4755 = vsel %vm4627, %v4563, %v4691
        %v4756 = vsel %vm4628, %v4564, %v4692
        %v4757 = vsel %vm4629, %v4565, %v4693
        %v4758 = vsel %vm4630, %v4566, %v4694
        %v4759 = vsel %vm4631, %v4567, %v4695
        %v4760 = vsel %vm4632, %v4568, %v4696
        %v4761 = vsel %vm4633, %v4569, %v4697
        %v4762 = vsel %vm4634, %v4570, %v4698
        %v4763 = vsel %vm4635, %v4571, %v4699
        %v4764 = vsel %vm4636, %v4572, %v4700
        %v4765 = vsel %vm4637, %v4573, %v4701
        %v4766 = vsel %vm4638, %v4574, %v4702
        %v4767 = vsel %vm4639, %v4575, %v4703
        %v4768 = vsel %vm4640, %v4576, %v4704
        %v4769 = vsel %vm4641, %v4577, %v4705
        %v4770 = vsel %vm4642, %v4578, %v4706
        %v4771 = vsel %vm4643, %v4579, %v4707
        %v4772 = vsel %vm4644, %v4580, %v4708
        %v4773 = vsel %vm4645, %v4581, %v4709
        %v4774 = vsel %vm4646, %v4582, %v4710
        %v4775 = vsel %vm4647, %v4583, %v4711
        %v4776 = vsel %vm4648, %v4584, %v4712
        %v4777 = vsel %vm4649, %v4585, %v4713
        %v4778 = vsel %vm4650, %v4586, %v4714
        %v4779 = vsel %vm4651, %v4587, %v4715
        %v4780 = vsel %vm4652, %v4588, %v4716
        %v4781 = vsel %vm4653, %v4589, %v4717
        %v4782 = vsel %vm4654, %v4590, %v4718
        %v4783 = vsel %vm4655, %v4591, %v4719
        %v4784 = vsel %vm4656, %v4592, %v4720
        %v4785 = vsel %vm4657, %v4593, %v4721
        %v4786 = vsel %vm4658, %v4594, %v4722
        %v4787 = vsel %vm4659, %v4595, %v4723
        %v4788 = vsel %vm4660, %v4596, %v4724
        %v4789 = vsel %vm4661, %v4597, %v4725
        %v4790 = vsel %vm4662, %v4598, %v4726
        %v4791 = vsel %vm4663, %v4599, %v4727
        %v4792 = vsel %vm4664, %v4600, %v4728
        %v4793 = vsel %vm4665, %v4601, %v4729
        %v4794 = vsel %vm4666, %v4602, %v4730
        %v4795 = vsel %vm4667, %v4603, %v4731
        %v4796 = vsel %vm4668, %v4604, %v4732
        %v4797 = vsel %vm4669, %v4605, %v4733
        %v4798 = vsel %vm4670, %v4606, %v4734
        %v4799 = vsel %vm4671, %v4607, %v4735
        %v4800 = vsel %vm4672, %v4608, %v4736
        %v4801 = vsel %vm4673, %v4609, %v4737
        %v4802 = vsel %vm4674, %v4610, %v4738
        %v4803 = vsel %vm4675, %v4611, %v4739
        %v4804 = vsel %vm4676, %v4612, %v4740
        %v4805 = vsel %vm4677, %v4613, %v4741
        %v4806 = vsel %vm4678, %v4614, %v4742
        %v4807 = vsel %vm4679, %v4615, %v4743
        %v4808 = vsel %vm4680, %v4616, %v4744
        %v4809 = vsel %vm4681, %v4617, %v4745
        %v4810 = vsel %vm4682, %v4618, %v4746
        %v4811 = vsel %vm4683, %v4619, %v4747
        %v4812 = vld [vmem:[#allocation2] sm:$0xff]
        %v4813 = vld [vmem:[#allocation2 + $0x8] sm:$0xff]
        %v4814 = vld [vmem:[#allocation2 + $0x10] sm:$0xff]
        %v4815 = vld [vmem:[#allocation2 + $0x18] sm:$0xff]
        %v4816 = vld [vmem:[#allocation2 + $0x20] sm:$0xff]
        %v4817 = vld [vmem:[#allocation2 + $0x28] sm:$0xff]
        %v4818 = vld [vmem:[#allocation2 + $0x30] sm:$0xff]
        %v4819 = vld [vmem:[#allocation2 + $0x38] sm:$0xff]
        %v4820 = vld [vmem:[#allocation2 + $0x40] sm:$0xff]
        %v4821 = vld [vmem:[#allocation2 + $0x48] sm:$0xff]
        %v4822 = vld [vmem:[#allocation2 + $0x50] sm:$0xff]
        %v4823 = vld [vmem:[#allocation2 + $0x58] sm:$0xff]
        %v4824 = vld [vmem:[#allocation2 + $0x60] sm:$0xff]
        %v4825 = vld [vmem:[#allocation2 + $0x68] sm:$0xff]
        %v4826 = vld [vmem:[#allocation2 + $0x70] sm:$0xff]
        %v4827 = vld [vmem:[#allocation2 + $0x78] sm:$0xff]
        %v4828 = vld [vmem:[#allocation2 + $0x80] sm:$0xff]
        %v4829 = vld [vmem:[#allocation2 + $0x88] sm:$0xff]
        %v4830 = vld [vmem:[#allocation2 + $0x90] sm:$0xff]
        %v4831 = vld [vmem:[#allocation2 + $0x98] sm:$0xff]
        %v4832 = vld [vmem:[#allocation2 + $0xa0] sm:$0xff]
        %v4833 = vld [vmem:[#allocation2 + $0xa8] sm:$0xff]
        %v4834 = vld [vmem:[#allocation2 + $0xb0] sm:$0xff]
        %v4835 = vld [vmem:[#allocation2 + $0xb8] sm:$0xff]
        %v4836 = vld [vmem:[#allocation2 + $0xc0] sm:$0xff]
        %v4837 = vld [vmem:[#allocation2 + $0xc8] sm:$0xff]
        %v4838 = vld [vmem:[#allocation2 + $0xd0] sm:$0xff]
        %v4839 = vld [vmem:[#allocation2 + $0xd8] sm:$0xff]
        %v4840 = vld [vmem:[#allocation2 + $0xe0] sm:$0xff]
        %v4841 = vld [vmem:[#allocation2 + $0xe8] sm:$0xff]
        %v4842 = vld [vmem:[#allocation2 + $0xf0] sm:$0xff]
        %v4843 = vld [vmem:[#allocation2 + $0xf8] sm:$0xff]
        %v4844 = vld [vmem:[#allocation2 + $0x100] sm:$0xff]
        %v4845 = vld [vmem:[#allocation2 + $0x108] sm:$0xff]
        %v4846 = vld [vmem:[#allocation2 + $0x110] sm:$0xff]
        %v4847 = vld [vmem:[#allocation2 + $0x118] sm:$0xff]
        %v4848 = vld [vmem:[#allocation2 + $0x120] sm:$0xff]
        %v4849 = vld [vmem:[#allocation2 + $0x128] sm:$0xff]
        %v4850 = vld [vmem:[#allocation2 + $0x130] sm:$0xff]
        %v4851 = vld [vmem:[#allocation2 + $0x138] sm:$0xff]
        %v4852 = vld [vmem:[#allocation2 + $0x140] sm:$0xff]
        %v4853 = vld [vmem:[#allocation2 + $0x148] sm:$0xff]
        %v4854 = vld [vmem:[#allocation2 + $0x150] sm:$0xff]
        %v4855 = vld [vmem:[#allocation2 + $0x158] sm:$0xff]
        %v4856 = vld [vmem:[#allocation2 + $0x160] sm:$0xff]
        %v4857 = vld [vmem:[#allocation2 + $0x168] sm:$0xff]
        %v4858 = vld [vmem:[#allocation2 + $0x170] sm:$0xff]
        %v4859 = vld [vmem:[#allocation2 + $0x178] sm:$0xff]
        %v4860 = vld [vmem:[#allocation2 + $0x180] sm:$0xff]
        %v4861 = vld [vmem:[#allocation2 + $0x188] sm:$0xff]
        %v4862 = vld [vmem:[#allocation2 + $0x190] sm:$0xff]
        %v4863 = vld [vmem:[#allocation2 + $0x198] sm:$0xff]
        %v4864 = vld [vmem:[#allocation2 + $0x1a0] sm:$0xff]
        %v4865 = vld [vmem:[#allocation2 + $0x1a8] sm:$0xff]
        %v4866 = vld [vmem:[#allocation2 + $0x1b0] sm:$0xff]
        %v4867 = vld [vmem:[#allocation2 + $0x1b8] sm:$0xff]
        %v4868 = vld [vmem:[#allocation2 + $0x1c0] sm:$0xff]
        %v4869 = vld [vmem:[#allocation2 + $0x1c8] sm:$0xff]
        %v4870 = vld [vmem:[#allocation2 + $0x1d0] sm:$0xff]
        %v4871 = vld [vmem:[#allocation2 + $0x1d8] sm:$0xff]
        %v4872 = vld [vmem:[#allocation2 + $0x1e0] sm:$0xff]
        %v4873 = vld [vmem:[#allocation2 + $0x1e8] sm:$0xff]
        %v4874 = vld [vmem:[#allocation2 + $0x1f0] sm:$0xff]
        %v4875 = vld [vmem:[#allocation2 + $0x1f8] sm:$0xff]
        %v4876 = vld [vmem:[#allocation2 + $0x200] sm:$0xff]
        %v4877 = vld [vmem:[#allocation2 + $0x208] sm:$0xff]
        %v4878 = vld [vmem:[#allocation2 + $0x210] sm:$0xff]
        %v4879 = vld [vmem:[#allocation2 + $0x218] sm:$0xff]
        %v4880 = vld [vmem:[#allocation2 + $0x220] sm:$0xff]
        %v4881 = vld [vmem:[#allocation2 + $0x228] sm:$0xff]
        %v4882 = vld [vmem:[#allocation2 + $0x230] sm:$0xff]
        %v4883 = vld [vmem:[#allocation2 + $0x238] sm:$0xff]
        %v4884 = vld [vmem:[#allocation2 + $0x240] sm:$0xff]
        %v4885 = vld [vmem:[#allocation2 + $0x248] sm:$0xff]
        %v4886 = vld [vmem:[#allocation2 + $0x250] sm:$0xff]
        %v4887 = vld [vmem:[#allocation2 + $0x258] sm:$0xff]
        %v4888 = vld [vmem:[#allocation2 + $0x260] sm:$0xff]
        %v4889 = vld [vmem:[#allocation2 + $0x268] sm:$0xff]
        %v4890 = vld [vmem:[#allocation2 + $0x270] sm:$0xff]
        %v4891 = vld [vmem:[#allocation2 + $0x278] sm:$0xff]
        %v4892 = vld [vmem:[#allocation2 + $0x280] sm:$0xff]
        %v4893 = vld [vmem:[#allocation2 + $0x288] sm:$0xff]
        %v4894 = vld [vmem:[#allocation2 + $0x290] sm:$0xff]
        %v4895 = vld [vmem:[#allocation2 + $0x298] sm:$0xff]
        %v4896 = vld [vmem:[#allocation2 + $0x2a0] sm:$0xff]
        %v4897 = vld [vmem:[#allocation2 + $0x2a8] sm:$0xff]
        %v4898 = vld [vmem:[#allocation2 + $0x2b0] sm:$0xff]
        %v4899 = vld [vmem:[#allocation2 + $0x2b8] sm:$0xff]
        %v4900 = vld [vmem:[#allocation2 + $0x2c0] sm:$0xff]
        %v4901 = vld [vmem:[#allocation2 + $0x2c8] sm:$0xff]
        %v4902 = vld [vmem:[#allocation2 + $0x2d0] sm:$0xff]
        %v4903 = vld [vmem:[#allocation2 + $0x2d8] sm:$0xff]
        %v4904 = vld [vmem:[#allocation2 + $0x2e0] sm:$0xff]
        %v4905 = vld [vmem:[#allocation2 + $0x2e8] sm:$0xff]
        %v4906 = vld [vmem:[#allocation2 + $0x2f0] sm:$0xff]
        %v4907 = vld [vmem:[#allocation2 + $0x2f8] sm:$0xff]
        %v4908 = vld [vmem:[#allocation2 + $0x300] sm:$0xff]
        %v4909 = vld [vmem:[#allocation2 + $0x308] sm:$0xff]
        %v4910 = vld [vmem:[#allocation2 + $0x310] sm:$0xff]
        %v4911 = vld [vmem:[#allocation2 + $0x318] sm:$0xff]
        %v4912 = vld [vmem:[#allocation2 + $0x320] sm:$0xff]
        %v4913 = vld [vmem:[#allocation2 + $0x328] sm:$0xff]
        %v4914 = vld [vmem:[#allocation2 + $0x330] sm:$0xff]
        %v4915 = vld [vmem:[#allocation2 + $0x338] sm:$0xff]
        %v4916 = vld [vmem:[#allocation2 + $0x340] sm:$0xff]
        %v4917 = vld [vmem:[#allocation2 + $0x348] sm:$0xff]
        %v4918 = vld [vmem:[#allocation2 + $0x350] sm:$0xff]
        %v4919 = vld [vmem:[#allocation2 + $0x358] sm:$0xff]
        %v4920 = vld [vmem:[#allocation2 + $0x360] sm:$0xff]
        %v4921 = vld [vmem:[#allocation2 + $0x368] sm:$0xff]
        %v4922 = vld [vmem:[#allocation2 + $0x370] sm:$0xff]
        %v4923 = vld [vmem:[#allocation2 + $0x378] sm:$0xff]
        %v4924 = vld [vmem:[#allocation2 + $0x380] sm:$0xff]
        %v4925 = vld [vmem:[#allocation2 + $0x388] sm:$0xff]
        %v4926 = vld [vmem:[#allocation2 + $0x390] sm:$0xff]
        %v4927 = vld [vmem:[#allocation2 + $0x398] sm:$0xff]
        %v4928 = vld [vmem:[#allocation2 + $0x3a0] sm:$0xff]
        %v4929 = vld [vmem:[#allocation2 + $0x3a8] sm:$0xff]
        %v4930 = vld [vmem:[#allocation2 + $0x3b0] sm:$0xff]
        %v4931 = vld [vmem:[#allocation2 + $0x3b8] sm:$0xff]
        %v4932 = vld [vmem:[#allocation2 + $0x3c0] sm:$0xff]
        %v4933 = vld [vmem:[#allocation2 + $0x3c8] sm:$0xff]
        %v4934 = vld [vmem:[#allocation2 + $0x3d0] sm:$0xff]
        %v4935 = vld [vmem:[#allocation2 + $0x3d8] sm:$0xff]
        %v4936 = vld [vmem:[#allocation2 + $0x3e0] sm:$0xff]
        %v4937 = vld [vmem:[#allocation2 + $0x3e8] sm:$0xff]
        %v4938 = vld [vmem:[#allocation2 + $0x3f0] sm:$0xff]
        %v4939 = vld [vmem:[#allocation2 + $0x3f8] sm:$0xff]
        %v4940 = vld [vmem:[%s6] sm:$0x3]
        %v4942 = vperm.slane %v4940, 0
        %v4943 = vperm.slane %v4940, 1
        %4946 = vmatpush.msra.mxu0 %v4842
        %4947 = vmatpush.msra.mxu0 %v4840
        %4948 = vmatpush.msra.mxu0 %v4838
        %4949 = vmatpush.msra.mxu0 %v4836
        %4950 = vmatpush.msra.mxu0 %v4834
        %4951 = vmatpush.msra.mxu0 %v4832
        %4952 = vmatpush.msra.mxu0 %v4830
        %4953 = vmatpush.msra.mxu0 %v4828
        %4954 = vmatpush.msra.mxu0 %v4826
        %4955 = vmatpush.msra.mxu0 %v4824
        %4956 = vmatpush.msra.mxu0 %v4822
        %4957 = vmatpush.msra.mxu0 %v4820
        %4958 = vmatpush.msra.mxu0 %v4818
        %4959 = vmatpush.msra.mxu0 %v4816
        %4960 = vmatpush.msra.mxu0 %v4814
        %4961 = vmatpush.msra.mxu0 %v4812
        %4962 = vmatmul.f32.gmra.mxu0 %v4748
        %v4963 = vpop.f32.mrf.mxu0
        %v4964 = vadd.f32 %v4942, %v4963
        %4965 = vmatmul.f32.gmra.mxu0 %v4752
        %v4966 = vpop.f32.mrf.mxu0
        %v4967 = vadd.f32 %v4942, %v4966
        %4968 = vmatmul.f32.gmra.mxu0 %v4756
        %v4969 = vpop.f32.mrf.mxu0
        %v4970 = vadd.f32 %v4942, %v4969
        %4971 = vmatmul.f32.gmra.mxu0 %v4760
        %v4972 = vpop.f32.mrf.mxu0
        %v4973 = vadd.f32 %v4942, %v4972
        %4974 = vmatmul.f32.gmra.mxu0 %v4764
        %v4975 = vpop.f32.mrf.mxu0
        %v4976 = vadd.f32 %v4942, %v4975
        %4977 = vmatmul.f32.gmra.mxu0 %v4768
        %v4978 = vpop.f32.mrf.mxu0
        %v4979 = vadd.f32 %v4942, %v4978
        %4980 = vmatmul.f32.gmra.mxu0 %v4772
        %v4981 = vpop.f32.mrf.mxu0
        %v4982 = vadd.f32 %v4942, %v4981
        %4983 = vmatmul.f32.gmra.mxu0 %v4776
        %v4984 = vpop.f32.mrf.mxu0
        %v4985 = vadd.f32 %v4942, %v4984
        %4986 = vmatmul.f32.gmra.mxu0 %v4780
        %v4987 = vpop.f32.mrf.mxu0
        %v4988 = vadd.f32 %v4942, %v4987
        %4989 = vmatmul.f32.gmra.mxu0 %v4784
        %v4990 = vpop.f32.mrf.mxu0
        %v4991 = vadd.f32 %v4942, %v4990
        %4992 = vmatmul.f32.gmra.mxu0 %v4788
        %v4993 = vpop.f32.mrf.mxu0
        %v4994 = vadd.f32 %v4942, %v4993
        %4995 = vmatmul.f32.gmra.mxu0 %v4792
        %v4996 = vpop.f32.mrf.mxu0
        %v4997 = vadd.f32 %v4942, %v4996
        %4998 = vmatmul.f32.gmra.mxu0 %v4796
        %v4999 = vpop.f32.mrf.mxu0
        %v5000 = vadd.f32 %v4942, %v4999
        %5001 = vmatmul.f32.gmra.mxu0 %v4800
        %v5002 = vpop.f32.mrf.mxu0
        %v5003 = vadd.f32 %v4942, %v5002
        %5004 = vmatmul.f32.gmra.mxu0 %v4804
        %v5005 = vpop.f32.mrf.mxu0
        %v5006 = vadd.f32 %v4942, %v5005
        %5007 = vmatmul.f32.gmra.mxu0 %v4808
        %v5008 = vpop.f32.mrf.mxu0
        %v5009 = vadd.f32 %v4942, %v5008
        %5010 = vdwg.mxu0
        %5011 = vmatpush.msra.mxu0 %v4874
        %5012 = vmatpush.msra.mxu0 %v4872
        %5013 = vmatpush.msra.mxu0 %v4870
        %5014 = vmatpush.msra.mxu0 %v4868
        %5015 = vmatpush.msra.mxu0 %v4866
        %5016 = vmatpush.msra.mxu0 %v4864
        %5017 = vmatpush.msra.mxu0 %v4862
        %5018 = vmatpush.msra.mxu0 %v4860
        %5019 = vmatpush.msra.mxu0 %v4858
        %5020 = vmatpush.msra.mxu0 %v4856
        %5021 = vmatpush.msra.mxu0 %v4854
        %5022 = vmatpush.msra.mxu0 %v4852
        %5023 = vmatpush.msra.mxu0 %v4850
        %5024 = vmatpush.msra.mxu0 %v4848
        %5025 = vmatpush.msra.mxu0 %v4846
        %5026 = vmatpush.msra.mxu0 %v4844
        %5027 = vmatmul.f32.gmra.mxu0 %v4749
        %v5028 = vpop.f32.mrf.mxu0
        %v5029 = vadd.f32 %v4964, %v5028
        %5030 = vmatmul.f32.gmra.mxu0 %v4753
        %v5031 = vpop.f32.mrf.mxu0
        %v5032 = vadd.f32 %v4967, %v5031
        %5033 = vmatmul.f32.gmra.mxu0 %v4757
        %v5034 = vpop.f32.mrf.mxu0
        %v5035 = vadd.f32 %v4970, %v5034
        %5036 = vmatmul.f32.gmra.mxu0 %v4761
        %v5037 = vpop.f32.mrf.mxu0
        %v5038 = vadd.f32 %v4973, %v5037
        %5039 = vmatmul.f32.gmra.mxu0 %v4765
        %v5040 = vpop.f32.mrf.mxu0
        %v5041 = vadd.f32 %v4976, %v5040
        %5042 = vmatmul.f32.gmra.mxu0 %v4769
        %v5043 = vpop.f32.mrf.mxu0
        %v5044 = vadd.f32 %v4979, %v5043
        %5045 = vmatmul.f32.gmra.mxu0 %v4773
        %v5046 = vpop.f32.mrf.mxu0
        %v5047 = vadd.f32 %v4982, %v5046
        %5048 = vmatmul.f32.gmra.mxu0 %v4777
        %v5049 = vpop.f32.mrf.mxu0
        %v5050 = vadd.f32 %v4985, %v5049
        %5051 = vmatmul.f32.gmra.mxu0 %v4781
        %v5052 = vpop.f32.mrf.mxu0
        %v5053 = vadd.f32 %v4988, %v5052
        %5054 = vmatmul.f32.gmra.mxu0 %v4785
        %v5055 = vpop.f32.mrf.mxu0
        %v5056 = vadd.f32 %v4991, %v5055
        %5057 = vmatmul.f32.gmra.mxu0 %v4789
        %v5058 = vpop.f32.mrf.mxu0
        %v5059 = vadd.f32 %v4994, %v5058
        %5060 = vmatmul.f32.gmra.mxu0 %v4793
        %v5061 = vpop.f32.mrf.mxu0
        %v5062 = vadd.f32 %v4997, %v5061
        %5063 = vmatmul.f32.gmra.mxu0 %v4797
        %v5064 = vpop.f32.mrf.mxu0
        %v5065 = vadd.f32 %v5000, %v5064
        %5066 = vmatmul.f32.gmra.mxu0 %v4801
        %v5067 = vpop.f32.mrf.mxu0
        %v5068 = vadd.f32 %v5003, %v5067
        %5069 = vmatmul.f32.gmra.mxu0 %v4805
        %v5070 = vpop.f32.mrf.mxu0
        %v5071 = vadd.f32 %v5006, %v5070
        %5072 = vmatmul.f32.gmra.mxu0 %v4809
        %v5073 = vpop.f32.mrf.mxu0
        %v5074 = vadd.f32 %v5009, %v5073
        %5075 = vdwg.mxu0
        %5076 = vmatpush.msra.mxu0 %v4906
        %5077 = vmatpush.msra.mxu0 %v4904
        %5078 = vmatpush.msra.mxu0 %v4902
        %5079 = vmatpush.msra.mxu0 %v4900
        %5080 = vmatpush.msra.mxu0 %v4898
        %5081 = vmatpush.msra.mxu0 %v4896
        %5082 = vmatpush.msra.mxu0 %v4894
        %5083 = vmatpush.msra.mxu0 %v4892
        %5084 = vmatpush.msra.mxu0 %v4890
        %5085 = vmatpush.msra.mxu0 %v4888
        %5086 = vmatpush.msra.mxu0 %v4886
        %5087 = vmatpush.msra.mxu0 %v4884
        %5088 = vmatpush.msra.mxu0 %v4882
        %5089 = vmatpush.msra.mxu0 %v4880
        %5090 = vmatpush.msra.mxu0 %v4878
        %5091 = vmatpush.msra.mxu0 %v4876
        %5092 = vmatmul.f32.gmra.mxu0 %v4750
        %v5093 = vpop.f32.mrf.mxu0
        %v5094 = vadd.f32 %v5029, %v5093
        %5095 = vmatmul.f32.gmra.mxu0 %v4754
        %v5096 = vpop.f32.mrf.mxu0
        %v5097 = vadd.f32 %v5032, %v5096
        %5098 = vmatmul.f32.gmra.mxu0 %v4758
        %v5099 = vpop.f32.mrf.mxu0
        %v5100 = vadd.f32 %v5035, %v5099
        %5101 = vmatmul.f32.gmra.mxu0 %v4762
        %v5102 = vpop.f32.mrf.mxu0
        %v5103 = vadd.f32 %v5038, %v5102
        %5104 = vmatmul.f32.gmra.mxu0 %v4766
        %v5105 = vpop.f32.mrf.mxu0
        %v5106 = vadd.f32 %v5041, %v5105
        %5107 = vmatmul.f32.gmra.mxu0 %v4770
        %v5108 = vpop.f32.mrf.mxu0
        %v5109 = vadd.f32 %v5044, %v5108
        %5110 = vmatmul.f32.gmra.mxu0 %v4774
        %v5111 = vpop.f32.mrf.mxu0
        %v5112 = vadd.f32 %v5047, %v5111
        %5113 = vmatmul.f32.gmra.mxu0 %v4778
        %v5114 = vpop.f32.mrf.mxu0
        %v5115 = vadd.f32 %v5050, %v5114
        %5116 = vmatmul.f32.gmra.mxu0 %v4782
        %v5117 = vpop.f32.mrf.mxu0
        %v5118 = vadd.f32 %v5053, %v5117
        %5119 = vmatmul.f32.gmra.mxu0 %v4786
        %v5120 = vpop.f32.mrf.mxu0
        %v5121 = vadd.f32 %v5056, %v5120
        %5122 = vmatmul.f32.gmra.mxu0 %v4790
        %v5123 = vpop.f32.mrf.mxu0
        %v5124 = vadd.f32 %v5059, %v5123
        %5125 = vmatmul.f32.gmra.mxu0 %v4794
        %v5126 = vpop.f32.mrf.mxu0
        %v5127 = vadd.f32 %v5062, %v5126
        %5128 = vmatmul.f32.gmra.mxu0 %v4798
        %v5129 = vpop.f32.mrf.mxu0
        %v5130 = vadd.f32 %v5065, %v5129
        %5131 = vmatmul.f32.gmra.mxu0 %v4802
        %v5132 = vpop.f32.mrf.mxu0
        %v5133 = vadd.f32 %v5068, %v5132
        %5134 = vmatmul.f32.gmra.mxu0 %v4806
        %v5135 = vpop.f32.mrf.mxu0
        %v5136 = vadd.f32 %v5071, %v5135
        %5137 = vmatmul.f32.gmra.mxu0 %v4810
        %v5138 = vpop.f32.mrf.mxu0
        %v5139 = vadd.f32 %v5074, %v5138
        %5140 = vdwg.mxu0
        %5141 = vmatpush.msra.mxu0 %v4938
        %5142 = vmatpush.msra.mxu0 %v4936
        %5143 = vmatpush.msra.mxu0 %v4934
        %5144 = vmatpush.msra.mxu0 %v4932
        %5145 = vmatpush.msra.mxu0 %v4930
        %5146 = vmatpush.msra.mxu0 %v4928
        %5147 = vmatpush.msra.mxu0 %v4926
        %5148 = vmatpush.msra.mxu0 %v4924
        %5149 = vmatpush.msra.mxu0 %v4922
        %5150 = vmatpush.msra.mxu0 %v4920
        %5151 = vmatpush.msra.mxu0 %v4918
        %5152 = vmatpush.msra.mxu0 %v4916
        %5153 = vmatpush.msra.mxu0 %v4914
        %5154 = vmatpush.msra.mxu0 %v4912
        %5155 = vmatpush.msra.mxu0 %v4910
        %5156 = vmatpush.msra.mxu0 %v4908
        %5157 = vmatmul.f32.gmra.mxu0 %v4751
        %v5158 = vpop.f32.mrf.mxu0
        %v5159 = vadd.f32 %v5094, %v5158
        %5160 = vmatmul.f32.gmra.mxu0 %v4755
        %v5161 = vpop.f32.mrf.mxu0
        %v5162 = vadd.f32 %v5097, %v5161
        %5163 = vmatmul.f32.gmra.mxu0 %v4759
        %v5164 = vpop.f32.mrf.mxu0
        %v5165 = vadd.f32 %v5100, %v5164
        %5166 = vmatmul.f32.gmra.mxu0 %v4763
        %v5167 = vpop.f32.mrf.mxu0
        %v5168 = vadd.f32 %v5103, %v5167
        %5169 = vmatmul.f32.gmra.mxu0 %v4767
        %v5170 = vpop.f32.mrf.mxu0
        %v5171 = vadd.f32 %v5106, %v5170
        %5172 = vmatmul.f32.gmra.mxu0 %v4771
        %v5173 = vpop.f32.mrf.mxu0
        %v5174 = vadd.f32 %v5109, %v5173
        %5175 = vmatmul.f32.gmra.mxu0 %v4775
        %v5176 = vpop.f32.mrf.mxu0
        %v5177 = vadd.f32 %v5112, %v5176
        %5178 = vmatmul.f32.gmra.mxu0 %v4779
        %v5179 = vpop.f32.mrf.mxu0
        %v5180 = vadd.f32 %v5115, %v5179
        %5181 = vmatmul.f32.gmra.mxu0 %v4783
        %v5182 = vpop.f32.mrf.mxu0
        %v5183 = vadd.f32 %v5118, %v5182
        %5184 = vmatmul.f32.gmra.mxu0 %v4787
        %v5185 = vpop.f32.mrf.mxu0
        %v5186 = vadd.f32 %v5121, %v5185
        %5187 = vmatmul.f32.gmra.mxu0 %v4791
        %v5188 = vpop.f32.mrf.mxu0
        %v5189 = vadd.f32 %v5124, %v5188
        %5190 = vmatmul.f32.gmra.mxu0 %v4795
        %v5191 = vpop.f32.mrf.mxu0
        %v5192 = vadd.f32 %v5127, %v5191
        %5193 = vmatmul.f32.gmra.mxu0 %v4799
        %v5194 = vpop.f32.mrf.mxu0
        %v5195 = vadd.f32 %v5130, %v5194
        %5196 = vmatmul.f32.gmra.mxu0 %v4803
        %v5197 = vpop.f32.mrf.mxu0
        %v5198 = vadd.f32 %v5133, %v5197
        %5199 = vmatmul.f32.gmra.mxu0 %v4807
        %v5200 = vpop.f32.mrf.mxu0
        %v5201 = vadd.f32 %v5136, %v5200
        %5202 = vmatmul.f32.gmra.mxu0 %v4811
        %v5203 = vpop.f32.mrf.mxu0
        %v5204 = vadd.f32 %v5139, %v5203
        %5205 = vdwg.mxu0
        %5206 = vmatpush.msra.mxu0 %v4843
        %5207 = vmatpush.msra.mxu0 %v4841
        %5208 = vmatpush.msra.mxu0 %v4839
        %5209 = vmatpush.msra.mxu0 %v4837
        %5210 = vmatpush.msra.mxu0 %v4835
        %5211 = vmatpush.msra.mxu0 %v4833
        %5212 = vmatpush.msra.mxu0 %v4831
        %5213 = vmatpush.msra.mxu0 %v4829
        %5214 = vmatpush.msra.mxu0 %v4827
        %5215 = vmatpush.msra.mxu0 %v4825
        %5216 = vmatpush.msra.mxu0 %v4823
        %5217 = vmatpush.msra.mxu0 %v4821
        %5218 = vmatpush.msra.mxu0 %v4819
        %5219 = vmatpush.msra.mxu0 %v4817
        %5220 = vmatpush.msra.mxu0 %v4815
        %5221 = vmatpush.msra.mxu0 %v4813
        %5222 = vmatmul.f32.gmra.mxu0 %v4748
        %v5223 = vpop.f32.mrf.mxu0
        %v5224 = vadd.f32 %v4943, %v5223
        %5225 = vmatmul.f32.gmra.mxu0 %v4752
        %v5226 = vpop.f32.mrf.mxu0
        %v5227 = vadd.f32 %v4943, %v5226
        %5228 = vmatmul.f32.gmra.mxu0 %v4756
        %v5229 = vpop.f32.mrf.mxu0
        %v5230 = vadd.f32 %v4943, %v5229
        %5231 = vmatmul.f32.gmra.mxu0 %v4760
        %v5232 = vpop.f32.mrf.mxu0
        %v5233 = vadd.f32 %v4943, %v5232
        %5234 = vmatmul.f32.gmra.mxu0 %v4764
        %v5235 = vpop.f32.mrf.mxu0
        %v5236 = vadd.f32 %v4943, %v5235
        %5237 = vmatmul.f32.gmra.mxu0 %v4768
        %v5238 = vpop.f32.mrf.mxu0
        %v5239 = vadd.f32 %v4943, %v5238
        %5240 = vmatmul.f32.gmra.mxu0 %v4772
        %v5241 = vpop.f32.mrf.mxu0
        %v5242 = vadd.f32 %v4943, %v5241
        %5243 = vmatmul.f32.gmra.mxu0 %v4776
        %v5244 = vpop.f32.mrf.mxu0
        %v5245 = vadd.f32 %v4943, %v5244
        %5246 = vmatmul.f32.gmra.mxu0 %v4780
        %v5247 = vpop.f32.mrf.mxu0
        %v5248 = vadd.f32 %v4943, %v5247
        %5249 = vmatmul.f32.gmra.mxu0 %v4784
        %v5250 = vpop.f32.mrf.mxu0
        %v5251 = vadd.f32 %v4943, %v5250
        %5252 = vmatmul.f32.gmra.mxu0 %v4788
        %v5253 = vpop.f32.mrf.mxu0
        %v5254 = vadd.f32 %v4943, %v5253
        %5255 = vmatmul.f32.gmra.mxu0 %v4792
        %v5256 = vpop.f32.mrf.mxu0
        %v5257 = vadd.f32 %v4943, %v5256
        %5258 = vmatmul.f32.gmra.mxu0 %v4796
        %v5259 = vpop.f32.mrf.mxu0
        %v5260 = vadd.f32 %v4943, %v5259
        %5261 = vmatmul.f32.gmra.mxu0 %v4800
        %v5262 = vpop.f32.mrf.mxu0
        %v5263 = vadd.f32 %v4943, %v5262
        %5264 = vmatmul.f32.gmra.mxu0 %v4804
        %v5265 = vpop.f32.mrf.mxu0
        %v5266 = vadd.f32 %v4943, %v5265
        %5267 = vmatmul.f32.gmra.mxu0 %v4808
        %v5268 = vpop.f32.mrf.mxu0
        %v5269 = vadd.f32 %v4943, %v5268
        %5270 = vdwg.mxu0
        %5271 = vmatpush.msra.mxu0 %v4875
        %5272 = vmatpush.msra.mxu0 %v4873
        %5273 = vmatpush.msra.mxu0 %v4871
        %5274 = vmatpush.msra.mxu0 %v4869
        %5275 = vmatpush.msra.mxu0 %v4867
        %5276 = vmatpush.msra.mxu0 %v4865
        %5277 = vmatpush.msra.mxu0 %v4863
        %5278 = vmatpush.msra.mxu0 %v4861
        %5279 = vmatpush.msra.mxu0 %v4859
        %5280 = vmatpush.msra.mxu0 %v4857
        %5281 = vmatpush.msra.mxu0 %v4855
        %5282 = vmatpush.msra.mxu0 %v4853
        %5283 = vmatpush.msra.mxu0 %v4851
        %5284 = vmatpush.msra.mxu0 %v4849
        %5285 = vmatpush.msra.mxu0 %v4847
        %5286 = vmatpush.msra.mxu0 %v4845
        %5287 = vmatmul.f32.gmra.mxu0 %v4749
        %v5288 = vpop.f32.mrf.mxu0
        %v5289 = vadd.f32 %v5224, %v5288
        %5290 = vmatmul.f32.gmra.mxu0 %v4753
        %v5291 = vpop.f32.mrf.mxu0
        %v5292 = vadd.f32 %v5227, %v5291
        %5293 = vmatmul.f32.gmra.mxu0 %v4757
        %v5294 = vpop.f32.mrf.mxu0
        %v5295 = vadd.f32 %v5230, %v5294
        %5296 = vmatmul.f32.gmra.mxu0 %v4761
        %v5297 = vpop.f32.mrf.mxu0
        %v5298 = vadd.f32 %v5233, %v5297
        %5299 = vmatmul.f32.gmra.mxu0 %v4765
        %v5300 = vpop.f32.mrf.mxu0
        %v5301 = vadd.f32 %v5236, %v5300
        %5302 = vmatmul.f32.gmra.mxu0 %v4769
        %v5303 = vpop.f32.mrf.mxu0
        %v5304 = vadd.f32 %v5239, %v5303
        %5305 = vmatmul.f32.gmra.mxu0 %v4773
        %v5306 = vpop.f32.mrf.mxu0
        %v5307 = vadd.f32 %v5242, %v5306
        %5308 = vmatmul.f32.gmra.mxu0 %v4777
        %v5309 = vpop.f32.mrf.mxu0
        %v5310 = vadd.f32 %v5245, %v5309
        %5311 = vmatmul.f32.gmra.mxu0 %v4781
        %v5312 = vpop.f32.mrf.mxu0
        %v5313 = vadd.f32 %v5248, %v5312
        %5314 = vmatmul.f32.gmra.mxu0 %v4785
        %v5315 = vpop.f32.mrf.mxu0
        %v5316 = vadd.f32 %v5251, %v5315
        %5317 = vmatmul.f32.gmra.mxu0 %v4789
        %v5318 = vpop.f32.mrf.mxu0
        %v5319 = vadd.f32 %v5254, %v5318
        %5320 = vmatmul.f32.gmra.mxu0 %v4793
        %v5321 = vpop.f32.mrf.mxu0
        %v5322 = vadd.f32 %v5257, %v5321
        %5323 = vmatmul.f32.gmra.mxu0 %v4797
        %v5324 = vpop.f32.mrf.mxu0
        %v5325 = vadd.f32 %v5260, %v5324
        %5326 = vmatmul.f32.gmra.mxu0 %v4801
        %v5327 = vpop.f32.mrf.mxu0
        %v5328 = vadd.f32 %v5263, %v5327
        %5329 = vmatmul.f32.gmra.mxu0 %v4805
        %v5330 = vpop.f32.mrf.mxu0
        %v5331 = vadd.f32 %v5266, %v5330
        %5332 = vmatmul.f32.gmra.mxu0 %v4809
        %v5333 = vpop.f32.mrf.mxu0
        %v5334 = vadd.f32 %v5269, %v5333
        %5335 = vdwg.mxu0
        %5336 = vmatpush.msra.mxu0 %v4907
        %5337 = vmatpush.msra.mxu0 %v4905
        %5338 = vmatpush.msra.mxu0 %v4903
        %5339 = vmatpush.msra.mxu0 %v4901
        %5340 = vmatpush.msra.mxu0 %v4899
        %5341 = vmatpush.msra.mxu0 %v4897
        %5342 = vmatpush.msra.mxu0 %v4895
        %5343 = vmatpush.msra.mxu0 %v4893
        %5344 = vmatpush.msra.mxu0 %v4891
        %5345 = vmatpush.msra.mxu0 %v4889
        %5346 = vmatpush.msra.mxu0 %v4887
        %5347 = vmatpush.msra.mxu0 %v4885
        %5348 = vmatpush.msra.mxu0 %v4883
        %5349 = vmatpush.msra.mxu0 %v4881
        %5350 = vmatpush.msra.mxu0 %v4879
        %5351 = vmatpush.msra.mxu0 %v4877
        %5352 = vmatmul.f32.gmra.mxu0 %v4750
        %v5353 = vpop.f32.mrf.mxu0
        %v5354 = vadd.f32 %v5289, %v5353
        %5355 = vmatmul.f32.gmra.mxu0 %v4754
        %v5356 = vpop.f32.mrf.mxu0
        %v5357 = vadd.f32 %v5292, %v5356
        %5358 = vmatmul.f32.gmra.mxu0 %v4758
        %v5359 = vpop.f32.mrf.mxu0
        %v5360 = vadd.f32 %v5295, %v5359
        %5361 = vmatmul.f32.gmra.mxu0 %v4762
        %v5362 = vpop.f32.mrf.mxu0
        %v5363 = vadd.f32 %v5298, %v5362
        %5364 = vmatmul.f32.gmra.mxu0 %v4766
        %v5365 = vpop.f32.mrf.mxu0
        %v5366 = vadd.f32 %v5301, %v5365
        %5367 = vmatmul.f32.gmra.mxu0 %v4770
        %v5368 = vpop.f32.mrf.mxu0
        %v5369 = vadd.f32 %v5304, %v5368
        %5370 = vmatmul.f32.gmra.mxu0 %v4774
        %v5371 = vpop.f32.mrf.mxu0
        %v5372 = vadd.f32 %v5307, %v5371
        %5373 = vmatmul.f32.gmra.mxu0 %v4778
        %v5374 = vpop.f32.mrf.mxu0
        %v5375 = vadd.f32 %v5310, %v5374
        %5376 = vmatmul.f32.gmra.mxu0 %v4782
        %v5377 = vpop.f32.mrf.mxu0
        %v5378 = vadd.f32 %v5313, %v5377
        %5379 = vmatmul.f32.gmra.mxu0 %v4786
        %v5380 = vpop.f32.mrf.mxu0
        %v5381 = vadd.f32 %v5316, %v5380
        %5382 = vmatmul.f32.gmra.mxu0 %v4790
        %v5383 = vpop.f32.mrf.mxu0
        %v5384 = vadd.f32 %v5319, %v5383
        %5385 = vmatmul.f32.gmra.mxu0 %v4794
        %v5386 = vpop.f32.mrf.mxu0
        %v5387 = vadd.f32 %v5322, %v5386
        %5388 = vmatmul.f32.gmra.mxu0 %v4798
        %v5389 = vpop.f32.mrf.mxu0
        %v5390 = vadd.f32 %v5325, %v5389
        %5391 = vmatmul.f32.gmra.mxu0 %v4802
        %v5392 = vpop.f32.mrf.mxu0
        %v5393 = vadd.f32 %v5328, %v5392
        %5394 = vmatmul.f32.gmra.mxu0 %v4806
        %v5395 = vpop.f32.mrf.mxu0
        %v5396 = vadd.f32 %v5331, %v5395
        %5397 = vmatmul.f32.gmra.mxu0 %v4810
        %v5398 = vpop.f32.mrf.mxu0
        %v5399 = vadd.f32 %v5334, %v5398
        %5400 = vdwg.mxu0
        %5401 = vmatpush.msra.mxu0 %v4939
        %5402 = vmatpush.msra.mxu0 %v4937
        %5403 = vmatpush.msra.mxu0 %v4935
        %5404 = vmatpush.msra.mxu0 %v4933
        %5405 = vmatpush.msra.mxu0 %v4931
        %5406 = vmatpush.msra.mxu0 %v4929
        %5407 = vmatpush.msra.mxu0 %v4927
        %5408 = vmatpush.msra.mxu0 %v4925
        %5409 = vmatpush.msra.mxu0 %v4923
        %5410 = vmatpush.msra.mxu0 %v4921
        %5411 = vmatpush.msra.mxu0 %v4919
        %5412 = vmatpush.msra.mxu0 %v4917
        %5413 = vmatpush.msra.mxu0 %v4915
        %5414 = vmatpush.msra.mxu0 %v4913
        %5415 = vmatpush.msra.mxu0 %v4911
        %5416 = vmatpush.msra.mxu0 %v4909
        %5417 = vmatmul.f32.gmra.mxu0 %v4751
        %v5418 = vpop.f32.mrf.mxu0
        %v5419 = vadd.f32 %v5354, %v5418
        %5420 = vmatmul.f32.gmra.mxu0 %v4755
        %v5421 = vpop.f32.mrf.mxu0
        %v5422 = vadd.f32 %v5357, %v5421
        %5423 = vmatmul.f32.gmra.mxu0 %v4759
        %v5424 = vpop.f32.mrf.mxu0
        %v5425 = vadd.f32 %v5360, %v5424
        %5426 = vmatmul.f32.gmra.mxu0 %v4763
        %v5427 = vpop.f32.mrf.mxu0
        %v5428 = vadd.f32 %v5363, %v5427
        %5429 = vmatmul.f32.gmra.mxu0 %v4767
        %v5430 = vpop.f32.mrf.mxu0
        %v5431 = vadd.f32 %v5366, %v5430
        %5432 = vmatmul.f32.gmra.mxu0 %v4771
        %v5433 = vpop.f32.mrf.mxu0
        %v5434 = vadd.f32 %v5369, %v5433
        %5435 = vmatmul.f32.gmra.mxu0 %v4775
        %v5436 = vpop.f32.mrf.mxu0
        %v5437 = vadd.f32 %v5372, %v5436
        %5438 = vmatmul.f32.gmra.mxu0 %v4779
        %v5439 = vpop.f32.mrf.mxu0
        %v5440 = vadd.f32 %v5375, %v5439
        %5441 = vmatmul.f32.gmra.mxu0 %v4783
        %v5442 = vpop.f32.mrf.mxu0
        %v5443 = vadd.f32 %v5378, %v5442
        %5444 = vmatmul.f32.gmra.mxu0 %v4787
        %v5445 = vpop.f32.mrf.mxu0
        %v5446 = vadd.f32 %v5381, %v5445
        %5447 = vmatmul.f32.gmra.mxu0 %v4791
        %v5448 = vpop.f32.mrf.mxu0
        %v5449 = vadd.f32 %v5384, %v5448
        %5450 = vmatmul.f32.gmra.mxu0 %v4795
        %v5451 = vpop.f32.mrf.mxu0
        %v5452 = vadd.f32 %v5387, %v5451
        %5453 = vmatmul.f32.gmra.mxu0 %v4799
        %v5454 = vpop.f32.mrf.mxu0
        %v5455 = vadd.f32 %v5390, %v5454
        %5456 = vmatmul.f32.gmra.mxu0 %v4803
        %v5457 = vpop.f32.mrf.mxu0
        %v5458 = vadd.f32 %v5393, %v5457
        %5459 = vmatmul.f32.gmra.mxu0 %v4807
        %v5460 = vpop.f32.mrf.mxu0
        %v5461 = vadd.f32 %v5396, %v5460
        %5462 = vmatmul.f32.gmra.mxu0 %v4811
        %v5463 = vpop.f32.mrf.mxu0
        %v5464 = vadd.f32 %v5399, %v5463
        %5465 = vdwg.mxu0
        %vm5466 = vcmp.gt.f32.partialorder %v5159, 0.0
        %vm5467 = vcmp.gt.f32.partialorder %v5419, 0.0
        %vm5468 = vcmp.gt.f32.partialorder %v5162, 0.0
        %vm5469 = vcmp.gt.f32.partialorder %v5422, 0.0
        %vm5470 = vcmp.gt.f32.partialorder %v5165, 0.0
        %vm5471 = vcmp.gt.f32.partialorder %v5425, 0.0
        %vm5472 = vcmp.gt.f32.partialorder %v5168, 0.0
        %vm5473 = vcmp.gt.f32.partialorder %v5428, 0.0
        %vm5474 = vcmp.gt.f32.partialorder %v5171, 0.0
        %vm5475 = vcmp.gt.f32.partialorder %v5431, 0.0
        %vm5476 = vcmp.gt.f32.partialorder %v5174, 0.0
        %vm5477 = vcmp.gt.f32.partialorder %v5434, 0.0
        %vm5478 = vcmp.gt.f32.partialorder %v5177, 0.0
        %vm5479 = vcmp.gt.f32.partialorder %v5437, 0.0
        %vm5480 = vcmp.gt.f32.partialorder %v5180, 0.0
        %vm5481 = vcmp.gt.f32.partialorder %v5440, 0.0
        %vm5482 = vcmp.gt.f32.partialorder %v5183, 0.0
        %vm5483 = vcmp.gt.f32.partialorder %v5443, 0.0
        %vm5484 = vcmp.gt.f32.partialorder %v5186, 0.0
        %vm5485 = vcmp.gt.f32.partialorder %v5446, 0.0
        %vm5486 = vcmp.gt.f32.partialorder %v5189, 0.0
        %vm5487 = vcmp.gt.f32.partialorder %v5449, 0.0
        %vm5488 = vcmp.gt.f32.partialorder %v5192, 0.0
        %vm5489 = vcmp.gt.f32.partialorder %v5452, 0.0
        %vm5490 = vcmp.gt.f32.partialorder %v5195, 0.0
        %vm5491 = vcmp.gt.f32.partialorder %v5455, 0.0
        %vm5492 = vcmp.gt.f32.partialorder %v5198, 0.0
        %vm5493 = vcmp.gt.f32.partialorder %v5458, 0.0
        %vm5494 = vcmp.gt.f32.partialorder %v5201, 0.0
        %vm5495 = vcmp.gt.f32.partialorder %v5461, 0.0
        %vm5496 = vcmp.gt.f32.partialorder %v5204, 0.0
        %vm5497 = vcmp.gt.f32.partialorder %v5464, 0.0
        %v5498 = vmul.f32 %v5159, 0.2
        %v5499 = vmul.f32 %v5419, 0.2
        %v5500 = vmul.f32 %v5162, 0.2
        %v5501 = vmul.f32 %v5422, 0.2
        %v5502 = vmul.f32 %v5165, 0.2
        %v5503 = vmul.f32 %v5425, 0.2
        %v5504 = vmul.f32 %v5168, 0.2
        %v5505 = vmul.f32 %v5428, 0.2
        %v5506 = vmul.f32 %v5171, 0.2
        %v5507 = vmul.f32 %v5431, 0.2
        %v5508 = vmul.f32 %v5174, 0.2
        %v5509 = vmul.f32 %v5434, 0.2
        %v5510 = vmul.f32 %v5177, 0.2
        %v5511 = vmul.f32 %v5437, 0.2
        %v5512 = vmul.f32 %v5180, 0.2
        %v5513 = vmul.f32 %v5440, 0.2
        %v5514 = vmul.f32 %v5183, 0.2
        %v5515 = vmul.f32 %v5443, 0.2
        %v5516 = vmul.f32 %v5186, 0.2
        %v5517 = vmul.f32 %v5446, 0.2
        %v5518 = vmul.f32 %v5189, 0.2
        %v5519 = vmul.f32 %v5449, 0.2
        %v5520 = vmul.f32 %v5192, 0.2
        %v5521 = vmul.f32 %v5452, 0.2
        %v5522 = vmul.f32 %v5195, 0.2
        %v5523 = vmul.f32 %v5455, 0.2
        %v5524 = vmul.f32 %v5198, 0.2
        %v5525 = vmul.f32 %v5458, 0.2
        %v5526 = vmul.f32 %v5201, 0.2
        %v5527 = vmul.f32 %v5461, 0.2
        %v5528 = vmul.f32 %v5204, 0.2
        %v5529 = vmul.f32 %v5464, 0.2
        %v5530 = vsel %vm5466, %v5159, %v5498
        %v5531 = vsel %vm5467, %v5419, %v5499
        %v5532 = vsel %vm5468, %v5162, %v5500
        %v5533 = vsel %vm5469, %v5422, %v5501
        %v5534 = vsel %vm5470, %v5165, %v5502
        %v5535 = vsel %vm5471, %v5425, %v5503
        %v5536 = vsel %vm5472, %v5168, %v5504
        %v5537 = vsel %vm5473, %v5428, %v5505
        %v5538 = vsel %vm5474, %v5171, %v5506
        %v5539 = vsel %vm5475, %v5431, %v5507
        %v5540 = vsel %vm5476, %v5174, %v5508
        %v5541 = vsel %vm5477, %v5434, %v5509
        %v5542 = vsel %vm5478, %v5177, %v5510
        %v5543 = vsel %vm5479, %v5437, %v5511
        %v5544 = vsel %vm5480, %v5180, %v5512
        %v5545 = vsel %vm5481, %v5440, %v5513
        %v5546 = vsel %vm5482, %v5183, %v5514
        %v5547 = vsel %vm5483, %v5443, %v5515
        %v5548 = vsel %vm5484, %v5186, %v5516
        %v5549 = vsel %vm5485, %v5446, %v5517
        %v5550 = vsel %vm5486, %v5189, %v5518
        %v5551 = vsel %vm5487, %v5449, %v5519
        %v5552 = vsel %vm5488, %v5192, %v5520
        %v5553 = vsel %vm5489, %v5452, %v5521
        %v5554 = vsel %vm5490, %v5195, %v5522
        %v5555 = vsel %vm5491, %v5455, %v5523
        %v5556 = vsel %vm5492, %v5198, %v5524
        %v5557 = vsel %vm5493, %v5458, %v5525
        %v5558 = vsel %vm5494, %v5201, %v5526
        %v5559 = vsel %vm5495, %v5461, %v5527
        %v5560 = vsel %vm5496, %v5204, %v5528
        %v5561 = vsel %vm5497, %v5464, %v5529
        %v5562 = vld [vmem:[%s7] sm:$0x3]
        %v5564 = vperm.slane %v5562, 0
        %v5565 = vperm.slane %v5562, 1
        %v5568 = vmul.f32 %v5530, %v5564
        %v5569 = vmul.f32 %v5531, %v5565
        %v5570 = vmul.f32 %v5532, %v5564
        %v5571 = vmul.f32 %v5533, %v5565
        %v5572 = vmul.f32 %v5534, %v5564
        %v5573 = vmul.f32 %v5535, %v5565
        %v5574 = vmul.f32 %v5536, %v5564
        %v5575 = vmul.f32 %v5537, %v5565
        %v5576 = vmul.f32 %v5538, %v5564
        %v5577 = vmul.f32 %v5539, %v5565
        %v5578 = vmul.f32 %v5540, %v5564
        %v5579 = vmul.f32 %v5541, %v5565
        %v5580 = vmul.f32 %v5542, %v5564
        %v5581 = vmul.f32 %v5543, %v5565
        %v5582 = vmul.f32 %v5544, %v5564
        %v5583 = vmul.f32 %v5545, %v5565
        %v5584 = vmul.f32 %v5546, %v5564
        %v5585 = vmul.f32 %v5547, %v5565
        %v5586 = vmul.f32 %v5548, %v5564
        %v5587 = vmul.f32 %v5549, %v5565
        %v5588 = vmul.f32 %v5550, %v5564
        %v5589 = vmul.f32 %v5551, %v5565
        %v5590 = vmul.f32 %v5552, %v5564
        %v5591 = vmul.f32 %v5553, %v5565
        %v5592 = vmul.f32 %v5554, %v5564
        %v5593 = vmul.f32 %v5555, %v5565
        %v5594 = vmul.f32 %v5556, %v5564
        %v5595 = vmul.f32 %v5557, %v5565
        %v5596 = vmul.f32 %v5558, %v5564
        %v5597 = vmul.f32 %v5559, %v5565
        %v5598 = vmul.f32 %v5560, %v5564
        %v5599 = vmul.f32 %v5561, %v5565
        %v5600 = vadd.f32 %v5568, %v5569
        %5601 = vadd.xlane.f32.xlu0 %v5600
        %v5602 = vpop.xlane.xlu0 %5601
        %v5603 = vadd.f32 %v5570, %v5571
        %5604 = vadd.xlane.f32.xlu0 %v5603
        %v5605 = vpop.xlane.xlu0 %5604
        %v5606 = vadd.f32 %v5572, %v5573
        %5607 = vadd.xlane.f32.xlu0 %v5606
        %v5608 = vpop.xlane.xlu0 %5607
        %v5609 = vadd.f32 %v5574, %v5575
        %5610 = vadd.xlane.f32.xlu0 %v5609
        %v5611 = vpop.xlane.xlu0 %5610
        %v5612 = vadd.f32 %v5576, %v5577
        %5613 = vadd.xlane.f32.xlu0 %v5612
        %v5614 = vpop.xlane.xlu0 %5613
        %v5615 = vadd.f32 %v5578, %v5579
        %5616 = vadd.xlane.f32.xlu0 %v5615
        %v5617 = vpop.xlane.xlu0 %5616
        %v5618 = vadd.f32 %v5580, %v5581
        %5619 = vadd.xlane.f32.xlu0 %v5618
        %v5620 = vpop.xlane.xlu0 %5619
        %v5621 = vadd.f32 %v5582, %v5583
        %5622 = vadd.xlane.f32.xlu0 %v5621
        %v5623 = vpop.xlane.xlu0 %5622
        %v5624 = vadd.f32 %v5584, %v5585
        %5625 = vadd.xlane.f32.xlu0 %v5624
        %v5626 = vpop.xlane.xlu0 %5625
        %v5627 = vadd.f32 %v5586, %v5587
        %5628 = vadd.xlane.f32.xlu0 %v5627
        %v5629 = vpop.xlane.xlu0 %5628
        %v5630 = vadd.f32 %v5588, %v5589
        %5631 = vadd.xlane.f32.xlu0 %v5630
        %v5632 = vpop.xlane.xlu0 %5631
        %v5633 = vadd.f32 %v5590, %v5591
        %5634 = vadd.xlane.f32.xlu0 %v5633
        %v5635 = vpop.xlane.xlu0 %5634
        %v5636 = vadd.f32 %v5592, %v5593
        %5637 = vadd.xlane.f32.xlu0 %v5636
        %v5638 = vpop.xlane.xlu0 %5637
        %v5639 = vadd.f32 %v5594, %v5595
        %5640 = vadd.xlane.f32.xlu0 %v5639
        %v5641 = vpop.xlane.xlu0 %5640
        %v5642 = vadd.f32 %v5596, %v5597
        %5643 = vadd.xlane.f32.xlu0 %v5642
        %v5644 = vpop.xlane.xlu0 %5643
        %v5645 = vadd.f32 %v5598, %v5599
        %5646 = vadd.xlane.f32.xlu0 %v5645
        %v5647 = vpop.xlane.xlu0 %5646
        %5648 = vst [vmem:[%s334] sm:$0xff] %v5602
        %5649 = vst [vmem:[%s334 + $0x8] sm:$0xff] %v5605
        %5650 = vst [vmem:[%s334 + $0x10] sm:$0xff] %v5608
        %5651 = vst [vmem:[%s334 + $0x18] sm:$0xff] %v5611
        %5652 = vst [vmem:[%s334 + $0x20] sm:$0xff] %v5614
        %5653 = vst [vmem:[%s334 + $0x28] sm:$0xff] %v5617
        %5654 = vst [vmem:[%s334 + $0x30] sm:$0xff] %v5620
        %5655 = vst [vmem:[%s334 + $0x38] sm:$0xff] %v5623
        %5656 = vst [vmem:[%s334 + $0x40] sm:$0xff] %v5626
        %5657 = vst [vmem:[%s334 + $0x48] sm:$0xff] %v5629
        %5658 = vst [vmem:[%s334 + $0x50] sm:$0xff] %v5632
        %5659 = vst [vmem:[%s334 + $0x58] sm:$0xff] %v5635
        %5660 = vst [vmem:[%s334 + $0x60] sm:$0xff] %v5638
        %5661 = vst [vmem:[%s334 + $0x68] sm:$0xff] %v5641
        %5662 = vst [vmem:[%s334 + $0x70] sm:$0xff] %v5644
        %5663 = vst [vmem:[%s334 + $0x78] sm:$0xff] %v5647
        %s5664 = sand.u32 %s209, 1
        %s5665 = scalar_lea.sflag [#allocation4], %s5664
        %s5666 = sand.u32 %s209, 1
        %s5667 = smul.addr %s5666, 128
        %s5668 = scalar_lea.vmem [#allocation5], %s5667
        // Predicated region
        $region57: #{tpu_custom_call.1} parent=51 // pred_check
          %p5669 = pneg %p219
        $region58: #{tpu_custom_call.1} parent=51 // pred_check_branch
          %5671 = sbr.rel (%p5669) target = $region60
        $region59: #{tpu_custom_call.1} parent=51 // pred_region
          %s5672 = smul.u32 16, %s23
          %5674 = vsyncadd %s5665, 0
          %s5675 = smul.addr %s5672, 8
          %s5676 = scalar_lea.hbm %s8, %s5675
          %s5677 = sshll.u32 %s5668, 4
          %s5678 = int_to_ptr.vmem [resolvable:$true] %s5677
          %s5679 = sshll.u32 %s5676, 4
          %s5680 = int_to_ptr.hbm [resolvable:$true] %s5679
          %5685 = dma.vmem_to_hbm [thread:$0]  %s5678, 2048, %s5680, %s5665, 128, 128, 8
        $region60: #{tpu_custom_call.1} parent=51 // pred_fallthru
          _
      $region52: #{tpu_custom_call.1} parent=5 // pred_fallthru
        _
      %p5686 = scmp.le.s32.totalorder 2, %s18
      // Predicated region
      $region61: #{tpu_custom_call.1} parent=5 // pred_check
        %p5687 = pneg %p5686
      $region62: #{tpu_custom_call.1} parent=5 // pred_check_branch
        %5689 = sbr.rel (%p5687) target = $region64
      $region63: #{tpu_custom_call.1} parent=5 // pred_region
        %s5690 = ssub.s32 %s18, 2
        // Predicated region
        $region65: #{tpu_custom_call.1} parent=63 // pred_check
          %p5691 = pneg %p225
        $region66: #{tpu_custom_call.1} parent=63 // pred_check_branch
          %5693 = sbr.rel (%p5691) target = $region68
        $region67: #{tpu_custom_call.1} parent=63 // pred_region
          %s5694 = sand.u32 %s210, 1
          %s5695 = scalar_lea.sflag [#allocation4], %s5694
          %s5696 = sand.u32 %s210, 1
          %s5697 = smul.addr %s5696, 128
          %s5698 = scalar_lea.vmem [#allocation5], %s5697
          %5700 = dma.done %s5695, 2048
        $region68: #{tpu_custom_call.1} parent=63 // pred_fallthru
          _
      $region64: #{tpu_custom_call.1} parent=5 // pred_fallthru
        _
    $region6: #{tpu_custom_call.1} parent=1 // loop_footer
      %s22 = sadd.s32 1, %s18
    $region7: #{tpu_custom_call.1} parent=1 // loop_footer_branch
      %17 = sbr.rel target = $region3
    $region8: #{tpu_custom_call.1} parent=1 // loop_exit
      _
    %5701 = vsyncpa [#allocation3], 1
    %s5702 = scalar_lea.sflag [#allocation3], 1
    %5703 = vsyncpa %s5702, 1
    %5704 = vsyncpa [#allocation4], 1
    %s5705 = scalar_lea.sflag [#allocation4], 1
    %5706 = vsyncpa %s5705, 1

</llo_original>
